<compile_context>
chip_gen: v7x
topology: tpu7x:2x2x1
jax: 0.10.0
libtpu: 0.0.40
codegen_flags: <defaults>
</compile_context>

<pallas_src>
import functools

import jax
import jax.numpy as jnp
import numpy as np
from jax.experimental import pallas as pl
from jax.experimental.pallas import tpu as pltpu


def _round_up(n, m):
    return ((n + m - 1) // m) * m


# ----------------------------------------------------------------------------
# Shared in-kernel math: one bf16 MXU matmul per row tile.
#   xcat = [x | a_0*x | ... | a_{AD-1}*x | a]     [TB, IN*(AD+1)+AD]  bf16
#   out  = xcat @ Wcat + Abb                      f32 accumulation
# ----------------------------------------------------------------------------
def _adaptive_matmul(x, a, wcat, abb, adapt_dim):
    parts = [x]
    for d in range(adapt_dim):
        parts.append(a[:, d:d + 1] * x)          # lane-dense scaled copy of x (VPU)
    parts.append(a)
    xcat = jnp.concatenate(parts, axis=-1)
    out = jnp.dot(xcat, wcat, preferred_element_type=jnp.float32)
    return out + abb


# ----------------------------------------------------------------------------
# AdaptiveLinear kernel (TokenMixing / ChannelMixing)
# ----------------------------------------------------------------------------
def _adaptive_linear_kernel(x_ref, a_ref, wcat_hbm, abb_ref, o_ref,
                            wcat_vmem, wcat_sem, *, adapt_dim):
    # Wcat is grid-invariant: copy it HBM -> VMEM once (single-buffered), instead
    # of letting the pipeline reserve a double buffer for it.  The grid axis of
    # this kernel is "arbitrary", so program_id(0)==0 is guaranteed to execute
    # on whichever core runs the grid.
    @pl.when(pl.program_id(0) == 0)
    def _():
        cp = pltpu.make_async_copy(wcat_hbm, wcat_vmem, wcat_sem)
        cp.start()
        cp.wait()

    out = _adaptive_matmul(x_ref[...], a_ref[...], wcat_vmem[...], abb_ref[...],
                           adapt_dim)
    o_ref[...] = out.astype(o_ref.dtype)


def adaptive_linear(x, adapt_input, kp, *, tb=128, out_dtype=jnp.float32):
    """Pallas forward of AdaptiveLinear.  x:[B,IN], adapt_input:[B,AD]."""
    B, in_f = x.shape
    ad = adapt_input.shape[1]
    ktot, out_f = kp["w_cat"].shape
    assert ktot == in_f * (ad + 1) + ad

    # Batch tile: 256-512 is good on v5e/v6e (128 MiB VMEM); 64-128 on v7x.
    tb_eff = max(8, min(tb, _round_up(B, 8)))
    Bp = _round_up(B, tb_eff)

    x_in = x.astype(jnp.bfloat16)         # no-op when the caller chains bf16
    a_in = adapt_input.astype(jnp.bfloat16)
    if Bp != B:
        # TODO(synk): mask the ragged last tile in-kernel instead of padding.
        x_in = jnp.pad(x_in, ((0, Bp - B), (0, 0)))
        a_in = jnp.pad(a_in, ((0, Bp - B), (0, 0)))

    osz = jnp.dtype(out_dtype).itemsize
    need = (2 * tb_eff * in_f * 2 + 2 * tb_eff * ad * 2    # x / a tiles (dbl buf)
            + ktot * out_f * 2                             # Wcat (single copy)
            + 2 * out_f * 4 + 2 * tb_eff * out_f * osz     # Abb, out tiles
            + tb_eff * ktot * 2 + tb_eff * out_f * 4)      # xcat, f32 result
    vmem_limit = int(min(64 << 20, max(32 << 20, 2 * need)))

    kernel = functools.partial(_adaptive_linear_kernel, adapt_dim=ad)
    out = pl.pallas_call(
        kernel,
        out_shape=jax.ShapeDtypeStruct((Bp, out_f), out_dtype),
        grid_spec=pltpu.PrefetchScalarGridSpec(
            num_scalar_prefetch=0,
            grid=(Bp // tb_eff,),
            in_specs=[
                pl.BlockSpec((tb_eff, in_f), lambda i: (i, 0)),   # x tile
                pl.BlockSpec((tb_eff, ad), lambda i: (i, 0)),     # adapt tile
                pl.BlockSpec(memory_space=pl.ANY),                # Wcat stays in HBM
                pl.BlockSpec((1, out_f), lambda i: (0, 0)),       # Abb
            ],
            out_specs=pl.BlockSpec((tb_eff, out_f), lambda i: (i, 0)),
            scratch_shapes=[
                pltpu.VMEM((ktot, out_f), jnp.bfloat16),          # single Wcat copy
                pltpu.SemaphoreType.DMA(()),
            ],
        ),
        compiler_params=pltpu.CompilerParams(
            # "arbitrary" (not "parallel"): the copy-once-at-step-0 of the shared
            # Wcat must run on the core that executes the grid.  Multi-TC
            # parallelism is carried by the MoE call below instead.
            dimension_semantics=("arbitrary",),
            vmem_limit_bytes=vmem_limit),
    )(x_in, a_in, kp["w_cat"], kp["ab_b"])
    return out[:B]


# ----------------------------------------------------------------------------
# MixtureOfExperts: all experts in ONE pallas_call, grid = (batch tiles, experts)
# ----------------------------------------------------------------------------
def _moe_adaptive_kernel(gate_ref, x_ref, a_ref, idx_ref, wcat_ref, abb_ref,
                         o_ref, *, adapt_dim):
    e = pl.program_id(1)

    @pl.when(e == 0)
    def _():
        o_ref[...] = jnp.zeros_like(o_ref)

    # Per-row 0/1 selection mask for this expert, rebuilt from the top-k indices
    # (equivalent to the scatter_-built mask: top-k indices are distinct).
    idx = idx_ref[...]                                          # [TB, K] int32
    m = (idx[:, 0:1] == e).astype(jnp.float32)
    for j in range(1, idx.shape[1]):
        m = m + (idx[:, j:j + 1] == e).astype(jnp.float32)

    # Mask only the weight path (x*sel); unselected rows still receive this
    # expert's bias path a@AbW^T + Abb, exactly like the PyTorch loop.
    x = x_ref[...] * m.astype(x_ref.dtype)
    out = _adaptive_matmul(x, a_ref[...], wcat_ref[0], abb_ref[0], adapt_dim)

    # Experts with zero total usage are skipped entirely in the reference.
    g = gate_ref[e].astype(jnp.float32)
    o_ref[...] += g * out


def moe_adaptive_linear(x, adapt_input, top_idx, gate, wcat_e, abb_e, *, tb=128):
    """All MoE experts in one Pallas call.  gate[e] = 1 iff expert e has usage>0."""
    B, in_f = x.shape
    ad = adapt_input.shape[1]
    E, ktot, out_f = wcat_e.shape
    top_k = top_idx.shape[1]
    assert ktot == in_f * (ad + 1) + ad

    tb_eff = max(8, min(tb, _round_up(B, 8)))
    Bp = _round_up(B, tb_eff)

    x_in = x.astype(jnp.bfloat16)
    a_in = adapt_input.astype(jnp.bfloat16)
    idx_in = top_idx.astype(jnp.int32)
    if Bp != B:
        x_in = jnp.pad(x_in, ((0, Bp - B), (0, 0)))
        a_in = jnp.pad(a_in, ((0, Bp - B), (0, 0)))
        idx_in = jnp.pad(idx_in, ((0, Bp - B), (0, 0)))

    need = (2 * tb_eff * in_f * 2 + 2 * tb_eff * ad * 2 + 2 * tb_eff * top_k * 4
            + 2 * ktot * out_f * 2                          # per-expert Wcat (dbl buf)
            + 2 * out_f * 4 + 2 * tb_eff * out_f * 4        # Abb, resident f32 out
            + tb_eff * ktot * 2 + tb_eff * out_f * 4)       # xcat, f32 result
    vmem_limit = int(min(64 << 20, max(32 << 20, 2 * need)))

    kernel = functools.partial(_moe_adaptive_kernel, adapt_dim=ad)
    out = pl.pallas_call(
        kernel,
        out_shape=jax.ShapeDtypeStruct((Bp, out_f), jnp.float32),
        grid_spec=pltpu.PrefetchScalarGridSpec(
            num_scalar_prefetch=1,                          # gate[e] = (usage[e] > 0)
            grid=(Bp // tb_eff, E),
            in_specs=[
                pl.BlockSpec((tb_eff, in_f), lambda i, e, gate: (i, 0)),
                pl.BlockSpec((tb_eff, ad), lambda i, e, gate: (i, 0)),
                pl.BlockSpec((tb_eff, top_k), lambda i, e, gate: (i, 0)),
                pl.BlockSpec((1, ktot, out_f), lambda i, e, gate: (e, 0, 0)),
                pl.BlockSpec((1, 1, out_f), lambda i, e, gate: (e, 0, 0)),
            ],
            out_specs=pl.BlockSpec((tb_eff, out_f), lambda i, e, gate: (i, 0)),
        ),
        compiler_params=pltpu.CompilerParams(
            dimension_semantics=("parallel", "arbitrary"),
            vmem_limit_bytes=vmem_limit),
    )(gate, x_in, a_in, idx_in, wcat_e, abb_e)
    return out[:B]


# ----------------------------------------------------------------------------
# Parameter init (PyTorch layout) and one-time re-layout for the kernels
# ----------------------------------------------------------------------------
def init_adaptive_linear_raw(key, in_f, out_f, adapt_dim):
    k = jax.random.split(key, 6)
    return {
        "weight": (0.8 / np.sqrt(in_f)) * jax.random.normal(k[0], (out_f, in_f), jnp.float32),
        "bias": jax.random.normal(k[1], (out_f,), jnp.float32),  # unused in forward (parity)
        "adapt_weight_w": (0.02 / np.sqrt(adapt_dim)) * jax.random.normal(
            k[2], (out_f * in_f, adapt_dim), jnp.float32),
        "adapt_weight_b": 0.02 * jax.random.normal(k[3], (out_f * in_f,), jnp.float32),
        "adapt_bias_w": (0.1 / np.sqrt(adapt_dim)) * jax.random.normal(
            k[4], (out_f, adapt_dim), jnp.float32),
        "adapt_bias_b": 0.1 * jax.random.normal(k[5], (out_f,), jnp.float32),
    }


def prepare_adaptive_params(raw):
    """One-time fold of PyTorch-style AdaptiveLinear params into a single Wcat."""
    out_f, in_f = raw["weight"].shape
    ad = raw["adapt_weight_w"].shape[1]
    # static weight with the adapt_weight Linear's bias folded in (exact in f32)
    w_eff = (raw["weight"] + raw["adapt_weight_b"].reshape(out_f, in_f)).T        # [IN, OUT]
    # G2[d*IN + i, o] = AwW[o*IN + i, d]
    g2 = jnp.transpose(raw["adapt_weight_w"].reshape(out_f, in_f, ad),
                       (2, 1, 0)).reshape(ad * in_f, out_f)                       # [AD*IN, OUT]
    ab_t = raw["adapt_bias_w"].T                                                   # [AD, OUT]
    w_cat = jnp.concatenate([w_eff, g2, ab_t], axis=0).astype(jnp.bfloat16)        # [K, OUT]
    return {
        "w_cat": w_cat,
        "ab_b": raw["adapt_bias_b"].reshape(1, out_f).astype(jnp.float32),         # [1, OUT]
    }
    # NOTE: raw["bias"] exists in the PyTorch module but is never used in
    # forward(); it is intentionally dropped here (parity, not a bug).


def init_lf_model_raw(key, dim, adapt_dim, num_experts):
    k_feat, k_tok, k_chan, k_gate, k_out, k_exp = jax.random.split(key, 6)
    kf = jax.random.split(k_feat, 2)
    kg = jax.random.split(k_gate, 2)
    ko = jax.random.split(k_out, 2)
    ke = jax.random.split(k_exp, num_experts)
    return {
        "feat_w": 0.5 * jax.random.normal(kf[0], (adapt_dim, dim), jnp.float32),
        "feat_b": 0.5 * jax.random.normal(kf[1], (adapt_dim,), jnp.float32),
        "token_mixer": init_adaptive_linear_raw(k_tok, dim, dim, adapt_dim),
        "channel_mixer": init_adaptive_linear_raw(k_chan, dim, dim, adapt_dim),
        "gate_w": (1.0 / np.sqrt(adapt_dim)) * jax.random.normal(
            kg[0], (num_experts, adapt_dim), jnp.float32),
        "gate_b": 0.1 * jax.random.normal(kg[1], (num_experts,), jnp.float32),
        "experts": [init_adaptive_linear_raw(ke[e], dim, dim, adapt_dim)
                    for e in range(num_experts)],
        "out_w": (1.0 / np.sqrt(dim)) * jax.random.normal(ko[0], (dim, dim), jnp.float32),
        "out_b": 0.1 * jax.random.normal(ko[1], (dim,), jnp.float32),
    }


def prepare_lf_model(raw):
    experts = [prepare_adaptive_params(p) for p in raw["experts"]]
    return {
        "feat_w": raw["feat_w"], "feat_b": raw["feat_b"],
        "token_mixer": prepare_adaptive_params(raw["token_mixer"]),
        "channel_mixer": prepare_adaptive_params(raw["channel_mixer"]),
        "gate_w": raw["gate_w"], "gate_b": raw["gate_b"],
        "experts_wcat": jnp.stack([e["w_cat"] for e in experts], axis=0),   # [E,K,OUT] bf16
        "experts_abb": jnp.stack([e["ab_b"] for e in experts], axis=0),     # [E,1,OUT] f32
        "out_w": raw["out_w"], "out_b": raw["out_b"],
    }


# ----------------------------------------------------------------------------
# LFModel forward (Pallas-backed) and a pure-f32 PyTorch-mirror reference
# ----------------------------------------------------------------------------
def lf_model_forward(params, x, *, top_k, tb=128):
    """Pallas-backed LFModel forward.  x: [batch, seq, dim] f32."""
    B, S, D = x.shape
    ad = params["feat_b"].shape[0]
    num_experts = params["gate_b"].shape[0]

    # featurizer (plain JAX glue)
    adapt_input = x.mean(axis=1) @ params["feat_w"].T + params["feat_b"]       # [B, AD]
    a_flat = jnp.broadcast_to(adapt_input[:, None, :], (B, S, ad)).reshape(B * S, ad)
    a_bf = a_flat.astype(jnp.bfloat16)     # cast once; all kernels consume bf16
    x_flat = x.reshape(B * S, D)

    # token / channel mixing (Pallas); bf16 activations chain kernel -> kernel
    token_mixed = adaptive_linear(x_flat, a_bf, params["token_mixer"],
                                  tb=tb, out_dtype=jnp.bfloat16)
    channel_mixed = adaptive_linear(token_mixed, a_bf, params["channel_mixer"],
                                    tb=tb, out_dtype=jnp.bfloat16)

    # MoE gating (plain JAX glue)
    gate_scores = a_flat @ params["gate_w"].T + params["gate_b"]
    gate_probs = jax.nn.softmax(gate_scores, axis=-1)
    _, top_idx = jax.lax.top_k(gate_probs, top_k)                              # [B*S, K]
    mask = jax.nn.one_hot(top_idx, num_experts, dtype=jnp.float32).sum(axis=1)
    usage = mask.sum(axis=0)
    expected = B * S * top_k / num_experts
    balance_loss = jnp.sum((usage - expected) ** 2)
    gate = (usage > 0).astype(jnp.int32)                                       # [E]

    # all experts in a single Pallas call (grid: batch tiles x experts)
    moe_out = moe_adaptive_linear(channel_mixed, a_bf, top_idx, gate,
                                  params["experts_wcat"], params["experts_abb"],
                                  tb=tb)

    out = moe_out @ params["out_w"].T + params["out_b"]
    return out.reshape(B, S, D), balance_loss


# ---------------- pure-JAX f32 reference, mirroring PyTorch line-by-line -----
def adaptive_linear_ref(x, a, rp):
    bsz = x.shape[0]
    out_f, in_f = rp["weight"].shape
    aw = (a @ rp["adapt_weight_w"].T + rp["adapt_weight_b"]).reshape(bsz, out_f, in_f)
    ab = a @ rp["adapt_bias_w"].T + rp["adapt_bias_b"]
    w = rp["weight"][None, :, :] + aw
    return jnp.einsum("bi,boi->bo", x, w) + ab


def lf_model_ref(raw, x, *, top_k):
    B, S, D = x.shape
    ad = raw["feat_b"].shape[0]
    num_experts = raw["gate_b"].shape[0]
    adapt_input = x.mean(axis=1) @ raw["feat_w"].T + raw["feat_b"]
    a_flat = jnp.broadcast_to(adapt_input[:, None, :], (B, S, ad)).reshape(B * S, ad)
    x_flat = x.reshape(B * S, D)
    token_mixed = adaptive_linear_ref(x_flat, a_flat, raw["token_mixer"])
    channel_mixed = adaptive_linear_ref(token_mixed, a_flat, raw["channel_mixer"])
    gate_scores = a_flat @ raw["gate_w"].T + raw["gate_b"]
    gate_probs = jax.nn.softmax(gate_scores, axis=-1)
    _, top_idx = jax.lax.top_k(gate_probs, top_k)
    mask = jax.nn.one_hot(top_idx, num_experts, dtype=jnp.float32).sum(axis=1)
    usage = mask.sum(axis=0)
    expected = B * S * top_k / num_experts
    balance_loss = jnp.sum((usage - expected) ** 2)
    moe_out = jnp.zeros_like(channel_mixed)
    for e in range(num_experts):
        sel = mask[:, e:e + 1]
        eo = adaptive_linear_ref(channel_mixed * sel, a_flat, raw["experts"][e])
        moe_out = moe_out + jnp.where(usage[e] > 0, 1.0, 0.0) * eo
    out = moe_out @ raw["out_w"].T + raw["out_b"]
    return out.reshape(B, S, D), balance_loss


# ----------------------------------------------------------------------------
if __name__ == "__main__":
    DIM, ADAPT_DIM, NUM_EXPERTS, TOP_K = 128, 32, 4, 2
    BATCH, SEQ = 4, 32                     # B*S = 128 rows; tb=64 -> grid of 2 tiles

    key = jax.random.PRNGKey(0)
    k_param, k_x, k_xs, k_as = jax.random.split(key, 4)

    raw = init_lf_model_raw(k_param, DIM, ADAPT_DIM, NUM_EXPERTS)
    params = prepare_lf_model(raw)

    # --- check 1: AdaptiveLinear kernel alone vs f32 PyTorch-mirror reference
    xs = jax.random.normal(k_xs, (BATCH * SEQ, DIM), jnp.float32)
    a_s = jax.random.normal(k_as, (BATCH * SEQ, ADAPT_DIM), jnp.float32)
    out1 = jax.block_until_ready(adaptive_linear(xs, a_s, params["token_mixer"], tb=64))
    ref1 = adaptive_linear_ref(xs, a_s, raw["token_mixer"])
    np.testing.assert_allclose(np.asarray(out1), np.asarray(ref1),
                               rtol=2e-2, atol=3e-2)   # bf16 operands, f32 accumulation

    # --- check 2: full LFModel forward
    x = jax.random.normal(k_x, (BATCH, SEQ, DIM), jnp.float32)
    fwd = jax.jit(functools.partial(lf_model_forward, top_k=TOP_K, tb=64))
    out, bal = fwd(params, x)
    out, bal = jax.block_until_ready((out, bal))
    ref_out, ref_bal = lf_model_ref(raw, x, top_k=TOP_K)
    np.testing.assert_allclose(np.asarray(out), np.asarray(ref_out),
                               rtol=6e-2, atol=8e-2)   # 3 chained bf16 kernels
    np.testing.assert_allclose(float(bal), float(ref_bal), rtol=1e-6, atol=1e-3)

    print("KERNEL_OK")
</pallas_src>

<mosaic_0001>
module attributes {stable_mosaic.version = 11 : i64} {
  func.func @_adaptive_linear_kernel(%arg0: i32, %arg1: memref<64x128xbf16, #tpu.memory_space<vmem>>, %arg2: memref<64x32xbf16, #tpu.memory_space<vmem>>, %arg3: memref<4256x128xbf16, #tpu.memory_space<any>>, %arg4: memref<1x128xf32, #tpu.memory_space<vmem>>, %arg5: memref<64x128xf32, #tpu.memory_space<vmem>>, %arg6: memref<4256x128xbf16, #tpu.memory_space<vmem>>, %arg7: memref<!tpu.dma_semaphore, #tpu.memory_space<semaphore_mem>>) attributes {dimension_semantics = [#tpu.dimension_semantics<arbitrary>], iteration_bounds = array<i64: 2>, scalar_prefetch = 0 : i64, scratch_operands = 2 : i64, tpu.core_type = #tpu.core_type<tc>, window_params = [{transform_indices = @transform_0, window_bounds = array<i64: 64, 128>}, {transform_indices = @transform_1, window_bounds = array<i64: 64, 32>}, {}, {pipeline_mode = #tpu.pipeline_mode<synchronous>, transform_indices = @transform_3, window_bounds = array<i64: 1, 128>}, {transform_indices = @transform_4, window_bounds = array<i64: 64, 128>}]} {
    %c0_i32 = arith.constant 0 : i32
    %0 = arith.cmpi eq, %arg0, %c0_i32 : i32
    %1 = arith.extui %0 : i1 to i32
    %c0_i32_0 = arith.constant 0 : i32
    %2 = arith.cmpi ne, %1, %c0_i32_0 : i32
    scf.if %2 {
      tpu.enqueue_dma source(%arg3 : memref<4256x128xbf16, #tpu.memory_space<any>>) target(%arg6 : memref<4256x128xbf16, #tpu.memory_space<vmem>>) target_semaphore(%arg7 : memref<!tpu.dma_semaphore, #tpu.memory_space<semaphore_mem>>)
      tpu.wait_dma2 semaphore(%arg7 : memref<!tpu.dma_semaphore, #tpu.memory_space<semaphore_mem>>) src(%arg3 : memref<4256x128xbf16, #tpu.memory_space<any>>) dst(%arg6 : memref<4256x128xbf16, #tpu.memory_space<vmem>>)
    } else {
    }
    %c0 = arith.constant 0 : index
    %c0_1 = arith.constant 0 : index
    %3 = vector.load %arg1[%c0, %c0_1] : memref<64x128xbf16, #tpu.memory_space<vmem>>, vector<64x128xbf16>
    %c0_2 = arith.constant 0 : index
    %c0_3 = arith.constant 0 : index
    %4 = vector.load %arg2[%c0_2, %c0_3] : memref<64x32xbf16, #tpu.memory_space<vmem>>, vector<64x32xbf16>
    %c0_4 = arith.constant 0 : index
    %c0_5 = arith.constant 0 : index
    %5 = vector.load %arg6[%c0_4, %c0_5] : memref<4256x128xbf16, #tpu.memory_space<vmem>>, vector<4256x128xbf16>
    %c0_6 = arith.constant 0 : index
    %c0_7 = arith.constant 0 : index
    %6 = vector.load %arg4[%c0_6, %c0_7] : memref<1x128xf32, #tpu.memory_space<vmem>>, vector<1x128xf32>
    %7 = vector.extract_strided_slice %4 {offsets = [0, 0], sizes = [64, 1], strides = [1, 1]} : vector<64x32xbf16> to vector<64x1xbf16>
    %8 = vector.broadcast %7 : vector<64x1xbf16> to vector<64x128xbf16>
    %9 = arith.mulf %8, %3 : vector<64x128xbf16>
    %10 = vector.extract_strided_slice %4 {offsets = [0, 1], sizes = [64, 1], strides = [1, 1]} : vector<64x32xbf16> to vector<64x1xbf16>
    %11 = vector.broadcast %10 : vector<64x1xbf16> to vector<64x128xbf16>
    %12 = arith.mulf %11, %3 : vector<64x128xbf16>
    %13 = vector.extract_strided_slice %4 {offsets = [0, 2], sizes = [64, 1], strides = [1, 1]} : vector<64x32xbf16> to vector<64x1xbf16>
    %14 = vector.broadcast %13 : vector<64x1xbf16> to vector<64x128xbf16>
    %15 = arith.mulf %14, %3 : vector<64x128xbf16>
    %16 = vector.extract_strided_slice %4 {offsets = [0, 3], sizes = [64, 1], strides = [1, 1]} : vector<64x32xbf16> to vector<64x1xbf16>
    %17 = vector.broadcast %16 : vector<64x1xbf16> to vector<64x128xbf16>
    %18 = arith.mulf %17, %3 : vector<64x128xbf16>
    %19 = vector.extract_strided_slice %4 {offsets = [0, 4], sizes = [64, 1], strides = [1, 1]} : vector<64x32xbf16> to vector<64x1xbf16>
    %20 = vector.broadcast %19 : vector<64x1xbf16> to vector<64x128xbf16>
    %21 = arith.mulf %20, %3 : vector<64x128xbf16>
    %22 = vector.extract_strided_slice %4 {offsets = [0, 5], sizes = [64, 1], strides = [1, 1]} : vector<64x32xbf16> to vector<64x1xbf16>
    %23 = vector.broadcast %22 : vector<64x1xbf16> to vector<64x128xbf16>
    %24 = arith.mulf %23, %3 : vector<64x128xbf16>
    %25 = vector.extract_strided_slice %4 {offsets = [0, 6], sizes = [64, 1], strides = [1, 1]} : vector<64x32xbf16> to vector<64x1xbf16>
    %26 = vector.broadcast %25 : vector<64x1xbf16> to vector<64x128xbf16>
    %27 = arith.mulf %26, %3 : vector<64x128xbf16>
    %28 = vector.extract_strided_slice %4 {offsets = [0, 7], sizes = [64, 1], strides = [1, 1]} : vector<64x32xbf16> to vector<64x1xbf16>
    %29 = vector.broadcast %28 : vector<64x1xbf16> to vector<64x128xbf16>
    %30 = arith.mulf %29, %3 : vector<64x128xbf16>
    %31 = vector.extract_strided_slice %4 {offsets = [0, 8], sizes = [64, 1], strides = [1, 1]} : vector<64x32xbf16> to vector<64x1xbf16>
    %32 = vector.broadcast %31 : vector<64x1xbf16> to vector<64x128xbf16>
    %33 = arith.mulf %32, %3 : vector<64x128xbf16>
    %34 = vector.extract_strided_slice %4 {offsets = [0, 9], sizes = [64, 1], strides = [1, 1]} : vector<64x32xbf16> to vector<64x1xbf16>
    %35 = vector.broadcast %34 : vector<64x1xbf16> to vector<64x128xbf16>
    %36 = arith.mulf %35, %3 : vector<64x128xbf16>
    %37 = vector.extract_strided_slice %4 {offsets = [0, 10], sizes = [64, 1], strides = [1, 1]} : vector<64x32xbf16> to vector<64x1xbf16>
    %38 = vector.broadcast %37 : vector<64x1xbf16> to vector<64x128xbf16>
    %39 = arith.mulf %38, %3 : vector<64x128xbf16>
    %40 = vector.extract_strided_slice %4 {offsets = [0, 11], sizes = [64, 1], strides = [1, 1]} : vector<64x32xbf16> to vector<64x1xbf16>
    %41 = vector.broadcast %40 : vector<64x1xbf16> to vector<64x128xbf16>
    %42 = arith.mulf %41, %3 : vector<64x128xbf16>
    %43 = vector.extract_strided_slice %4 {offsets = [0, 12], sizes = [64, 1], strides = [1, 1]} : vector<64x32xbf16> to vector<64x1xbf16>
    %44 = vector.broadcast %43 : vector<64x1xbf16> to vector<64x128xbf16>
    %45 = arith.mulf %44, %3 : vector<64x128xbf16>
    %46 = vector.extract_strided_slice %4 {offsets = [0, 13], sizes = [64, 1], strides = [1, 1]} : vector<64x32xbf16> to vector<64x1xbf16>
    %47 = vector.broadcast %46 : vector<64x1xbf16> to vector<64x128xbf16>
    %48 = arith.mulf %47, %3 : vector<64x128xbf16>
    %49 = vector.extract_strided_slice %4 {offsets = [0, 14], sizes = [64, 1], strides = [1, 1]} : vector<64x32xbf16> to vector<64x1xbf16>
    %50 = vector.broadcast %49 : vector<64x1xbf16> to vector<64x128xbf16>
    %51 = arith.mulf %50, %3 : vector<64x128xbf16>
    %52 = vector.extract_strided_slice %4 {offsets = [0, 15], sizes = [64, 1], strides = [1, 1]} : vector<64x32xbf16> to vector<64x1xbf16>
    %53 = vector.broadcast %52 : vector<64x1xbf16> to vector<64x128xbf16>
    %54 = arith.mulf %53, %3 : vector<64x128xbf16>
    %55 = vector.extract_strided_slice %4 {offsets = [0, 16], sizes = [64, 1], strides = [1, 1]} : vector<64x32xbf16> to vector<64x1xbf16>
    %56 = vector.broadcast %55 : vector<64x1xbf16> to vector<64x128xbf16>
    %57 = arith.mulf %56, %3 : vector<64x128xbf16>
    %58 = vector.extract_strided_slice %4 {offsets = [0, 17], sizes = [64, 1], strides = [1, 1]} : vector<64x32xbf16> to vector<64x1xbf16>
    %59 = vector.broadcast %58 : vector<64x1xbf16> to vector<64x128xbf16>
    %60 = arith.mulf %59, %3 : vector<64x128xbf16>
    %61 = vector.extract_strided_slice %4 {offsets = [0, 18], sizes = [64, 1], strides = [1, 1]} : vector<64x32xbf16> to vector<64x1xbf16>
    %62 = vector.broadcast %61 : vector<64x1xbf16> to vector<64x128xbf16>
    %63 = arith.mulf %62, %3 : vector<64x128xbf16>
    %64 = vector.extract_strided_slice %4 {offsets = [0, 19], sizes = [64, 1], strides = [1, 1]} : vector<64x32xbf16> to vector<64x1xbf16>
    %65 = vector.broadcast %64 : vector<64x1xbf16> to vector<64x128xbf16>
    %66 = arith.mulf %65, %3 : vector<64x128xbf16>
    %67 = vector.extract_strided_slice %4 {offsets = [0, 20], sizes = [64, 1], strides = [1, 1]} : vector<64x32xbf16> to vector<64x1xbf16>
    %68 = vector.broadcast %67 : vector<64x1xbf16> to vector<64x128xbf16>
    %69 = arith.mulf %68, %3 : vector<64x128xbf16>
    %70 = vector.extract_strided_slice %4 {offsets = [0, 21], sizes = [64, 1], strides = [1, 1]} : vector<64x32xbf16> to vector<64x1xbf16>
    %71 = vector.broadcast %70 : vector<64x1xbf16> to vector<64x128xbf16>
    %72 = arith.mulf %71, %3 : vector<64x128xbf16>
    %73 = vector.extract_strided_slice %4 {offsets = [0, 22], sizes = [64, 1], strides = [1, 1]} : vector<64x32xbf16> to vector<64x1xbf16>
    %74 = vector.broadcast %73 : vector<64x1xbf16> to vector<64x128xbf16>
    %75 = arith.mulf %74, %3 : vector<64x128xbf16>
    %76 = vector.extract_strided_slice %4 {offsets = [0, 23], sizes = [64, 1], strides = [1, 1]} : vector<64x32xbf16> to vector<64x1xbf16>
    %77 = vector.broadcast %76 : vector<64x1xbf16> to vector<64x128xbf16>
    %78 = arith.mulf %77, %3 : vector<64x128xbf16>
    %79 = vector.extract_strided_slice %4 {offsets = [0, 24], sizes = [64, 1], strides = [1, 1]} : vector<64x32xbf16> to vector<64x1xbf16>
    %80 = vector.broadcast %79 : vector<64x1xbf16> to vector<64x128xbf16>
    %81 = arith.mulf %80, %3 : vector<64x128xbf16>
    %82 = vector.extract_strided_slice %4 {offsets = [0, 25], sizes = [64, 1], strides = [1, 1]} : vector<64x32xbf16> to vector<64x1xbf16>
    %83 = vector.broadcast %82 : vector<64x1xbf16> to vector<64x128xbf16>
    %84 = arith.mulf %83, %3 : vector<64x128xbf16>
    %85 = vector.extract_strided_slice %4 {offsets = [0, 26], sizes = [64, 1], strides = [1, 1]} : vector<64x32xbf16> to vector<64x1xbf16>
    %86 = vector.broadcast %85 : vector<64x1xbf16> to vector<64x128xbf16>
    %87 = arith.mulf %86, %3 : vector<64x128xbf16>
    %88 = vector.extract_strided_slice %4 {offsets = [0, 27], sizes = [64, 1], strides = [1, 1]} : vector<64x32xbf16> to vector<64x1xbf16>
    %89 = vector.broadcast %88 : vector<64x1xbf16> to vector<64x128xbf16>
    %90 = arith.mulf %89, %3 : vector<64x128xbf16>
    %91 = vector.extract_strided_slice %4 {offsets = [0, 28], sizes = [64, 1], strides = [1, 1]} : vector<64x32xbf16> to vector<64x1xbf16>
    %92 = vector.broadcast %91 : vector<64x1xbf16> to vector<64x128xbf16>
    %93 = arith.mulf %92, %3 : vector<64x128xbf16>
    %94 = vector.extract_strided_slice %4 {offsets = [0, 29], sizes = [64, 1], strides = [1, 1]} : vector<64x32xbf16> to vector<64x1xbf16>
    %95 = vector.broadcast %94 : vector<64x1xbf16> to vector<64x128xbf16>
    %96 = arith.mulf %95, %3 : vector<64x128xbf16>
    %97 = vector.extract_strided_slice %4 {offsets = [0, 30], sizes = [64, 1], strides = [1, 1]} : vector<64x32xbf16> to vector<64x1xbf16>
    %98 = vector.broadcast %97 : vector<64x1xbf16> to vector<64x128xbf16>
    %99 = arith.mulf %98, %3 : vector<64x128xbf16>
    %100 = vector.extract_strided_slice %4 {offsets = [0, 31], sizes = [64, 1], strides = [1, 1]} : vector<64x32xbf16> to vector<64x1xbf16>
    %101 = vector.broadcast %100 : vector<64x1xbf16> to vector<64x128xbf16>
    %102 = arith.mulf %101, %3 : vector<64x128xbf16>
    %103 = tpu.concatenate %3, %9, %12, %15, %18, %21, %24, %27, %30, %33, %36, %39, %42, %45, %48, %51 in 1 : vector<64x128xbf16>, vector<64x128xbf16>, vector<64x128xbf16>, vector<64x128xbf16>, vector<64x128xbf16>, vector<64x128xbf16>, vector<64x128xbf16>, vector<64x128xbf16>, vector<64x128xbf16>, vector<64x128xbf16>, vector<64x128xbf16>, vector<64x128xbf16>, vector<64x128xbf16>, vector<64x128xbf16>, vector<64x128xbf16>, vector<64x128xbf16> -> vector<64x2048xbf16>
    %104 = tpu.concatenate %54, %57, %60, %63, %66, %69, %72, %75, %78, %81, %84, %87, %90, %93, %96, %99 in 1 : vector<64x128xbf16>, vector<64x128xbf16>, vector<64x128xbf16>, vector<64x128xbf16>, vector<64x128xbf16>, vector<64x128xbf16>, vector<64x128xbf16>, vector<64x128xbf16>, vector<64x128xbf16>, vector<64x128xbf16>, vector<64x128xbf16>, vector<64x128xbf16>, vector<64x128xbf16>, vector<64x128xbf16>, vector<64x128xbf16>, vector<64x128xbf16> -> vector<64x2048xbf16>
    %105 = tpu.concatenate %102, %4 in 1 : vector<64x128xbf16>, vector<64x32xbf16> -> vector<64x160xbf16>
    %106 = tpu.concatenate %103, %104, %105 in 1 : vector<64x2048xbf16>, vector<64x2048xbf16>, vector<64x160xbf16> -> vector<64x4256xbf16>
    %cst = arith.constant dense<0.000000e+00> : vector<64x128xf32>
    %107 = tpu.matmul %106, %5, %cst {dimension_numbers = #tpu.dot_dimension_numbers<[1], [0], [0], [1], [0, 0, 1, 1], [], []>} : vector<64x4256xbf16>, vector<4256x128xbf16>, vector<64x128xf32> -> vector<64x128xf32>
    %108 = vector.broadcast %6 : vector<1x128xf32> to vector<64x128xf32>
    %109 = arith.addf %107, %108 : vector<64x128xf32>
    %c0_8 = arith.constant 0 : index
    %c0_9 = arith.constant 0 : index
    %110 = vector.load %arg5[%c0_8, %c0_9] : memref<64x128xf32, #tpu.memory_space<vmem>>, vector<64x128xf32>
    tpu.vector_store %arg5[%c0_8, %c0_9], %109 {strides = array<i32>} : memref<64x128xf32, #tpu.memory_space<vmem>>, vector<64x128xf32>,
    return
  }
  func.func @transform_0(%arg0: i32) -> (i32, i32) {
    %c0_i32 = arith.constant 0 : i32
    %c0_i32_0 = arith.constant 0 : i32
    return %arg0, %c0_i32 : i32, i32
  }
  func.func @transform_1(%arg0: i32) -> (i32, i32) {
    %c0_i32 = arith.constant 0 : i32
    %c0_i32_0 = arith.constant 0 : i32
    return %arg0, %c0_i32 : i32, i32
  }
  func.func @transform_3(%arg0: i32) -> (i32, i32) {
    %c0_i32 = arith.constant 0 : i32
    %c0_i32_0 = arith.constant 0 : i32
    %c0_i32_1 = arith.constant 0 : i32
    return %c0_i32, %c0_i32_0 : i32, i32
  }
  func.func @transform_4(%arg0: i32) -> (i32, i32) {
    %c0_i32 = arith.constant 0 : i32
    %c0_i32_0 = arith.constant 0 : i32
    return %arg0, %c0_i32 : i32, i32
  }
}

</mosaic_0001>

<llo_original>
// kernel: tpu_custom_call.1
$region0: #{tpu_custom_call.1}
  #allocation0 [shape = 'u32[]', space=smem, size = 0x4, offset = 0x4, fixed_abs, tag = 'smem constant byte address 0x4 - core index']
  #allocation1 [shape = 'u32[144,128]{1,0:T(1,128)}', space=vmem, size = 0x12000, scoped, tag = 'internal scratch']
  #allocation2 [shape = 'bf16[4256,128]{1,0:T(16,128)(2,1)}', space=vmem, size = 0x10a000, scoped, tag = 'scratch operand']
  #allocation3 [shape = 's32[1]{0}', space=sflag, size = 0x4, scoped, tag = 'scratch operand']
  #allocation10 [shape = 's32[]', space=sflag, size = 0x4, offset = 0, fixed_abs, tag = 'sflag constant byte address 0x0 - dummy sync flag']
  #allocation11 [shape = 's32[]', space=sflag, size = 0x4, offset = 0, fixed_abs, tag = 'sflag constant byte address 0x0 - dummy sync flag']
  #allocation12 [shape = 'u32[]', space=smem, size = 0x4, offset = 0x44, fixed_abs, tag = 'smem constant byte address 0x44 - assertion arg 0']
  #allocation13 [shape = 'u32[]', space=smem, size = 0x4, offset = 0x48, fixed_abs, tag = 'smem constant byte address 0x48 - assertion arg 1']
  %s0 = inlined_call_operand.hbm [shape: bf16[128,128], index: 0, kind: input, shape index: {}]
  %s1 = inlined_call_operand.vmem [shape: bf16[128,32], index: 1, kind: input, shape index: {}]
  %s2 = inlined_call_operand.hbm [shape: bf16[4256,128], index: 2, kind: input, shape index: {}]
  %s3 = inlined_call_operand.hbm [shape: f32[1,128], index: 3, kind: input, shape index: {}]
  %s4 = inlined_call_operand.hbm [shape: f32[128,128], index: 4, kind: output, shape index: {}]
  %s5 = sld [smem:[#allocation0]]
  $region61: #{tpu_custom_call.1} parent=0
    _
  %s7 = ssub.s32 1, %s5
  %s8 = scalar_select 0, %s7, %s5
  $region1: #{tpu_custom_call.1} parent=0
    #allocation4 [shape = 'u8[32768]{0}', space=vmem, size = 0x8000, scoped, tag = 'input window, operand 0']
    #allocation5 [shape = 's32[2]{0}', space=sflag, size = 0x8, scoped, tag = 'scoped memory for tpu_custom_call.1']
    #allocation6 [shape = 's32[2]{0}', space=sflag, size = 0x8, scoped, tag = 'scoped memory for tpu_custom_call.1']
    #allocation7 [shape = 'u8[512]{0}', space=vmem, size = 0x400, scoped, tag = 'input window, operand 3, single buffered']
    #allocation8 [shape = 's32[1]{0}', space=sflag, size = 0x4, scoped, tag = 'scoped memory for tpu_custom_call.1']
    #allocation9 [shape = 'u8[65536]{0}', space=vmem, size = 0x10000, scoped, tag = 'output window, operand 0']
    %9 = vsyncpa [#allocation5], 0
    %s10 = scalar_lea.sflag [#allocation5], 1
    %11 = vsyncpa %s10, 0
    %12 = vsyncpa [#allocation8], 0
    %13 = vsyncpa [#allocation6], 0
    %s14 = scalar_lea.sflag [#allocation6], 1
    %15 = vsyncpa %s14, 0
    loop: start=0, step=1, limit=4
    $region2: #{tpu_custom_call.1} parent=1 // loop_pre_header
      _
    $region3: #{tpu_custom_call.1} parent=1 // loop_header
      %s17 = sphi 0, %s21
      %p18 = scmp.ge.s32.totalorder %s17, 4
      %s27 = sphi 0, %s29
      %s30 = sphi 0, %s27
      %s31 = sphi 0, %s30
      %s47 = sphi 0, %s31
      %s53 = sphi 0, %s55
      %s56 = sphi 0, %s53
      %s57 = sphi 0, %s56
      %s73 = sphi 0, %s57
      %s77 = sphi 0, %s77
      %s79 = sphi 0, %s77
      %s80 = sphi 0, %s79
      %s94 = sphi 0, %s80
      %s100 = sphi 0, %s102
      %s103 = sphi 0, %s100
      %s104 = sphi 0, %s103
      %s120 = sphi 0, %s104
    $region4: #{tpu_custom_call.1} parent=1 // loop_header_branch
      %20 = sbr.rel (%p18) target = $region8
    $region5: #{tpu_custom_call.1} parent=1 // loop_body
      %s22 = ssub.s32 %s17, 1
      %s23 = ssub.s32 %s17, 2
      %s24 = sadd.s32 %s17, 1
      %s25 = ssub.s32 %s17, %s24
      %p26 = scmp.eq.s32.totalorder %s25, 0
      %s28 = sadd.s32 %s27, 1
      %s29 = scalar_select %p26, %s27, %s28
      %p32 = pneg %p26
      %p33 = scmp.eq.s32.totalorder %s17, 1
      %p34 = por %p32, %p33
      %p35 = scmp.ne.s32.totalorder %s27, %s30
      %p36 = scmp.eq.s32.totalorder %s17, 0
      %p37 = por %p35, %p36
      %p38 = scmp.ne.s32.totalorder %s27, %s30
      %p39 = scmp.eq.s32.totalorder %s22, 1
      %p40 = por %p38, %p39
      %p41 = scmp.ne.s32.totalorder %s30, %s31
      %p42 = scmp.eq.s32.totalorder %s22, 0
      %p43 = por %p41, %p42
      %p44 = scmp.ne.s32.totalorder %s30, %s31
      %p45 = scmp.eq.s32.totalorder %s23, 1
      %p46 = por %p44, %p45
      %p48 = scmp.ne.s32.totalorder %s31, %s47
      %p49 = scmp.eq.s32.totalorder %s23, 0
      %p50 = por %p48, %p49
      %s51 = ssub.s32 %s17, %s24
      %p52 = scmp.eq.s32.totalorder %s51, 0
      %s54 = sadd.s32 %s53, 1
      %s55 = scalar_select %p52, %s53, %s54
      %p58 = pneg %p52
      %p59 = scmp.eq.s32.totalorder %s17, 1
      %p60 = por %p58, %p59
      %p61 = scmp.ne.s32.totalorder %s53, %s56
      %p62 = scmp.eq.s32.totalorder %s17, 0
      %p63 = por %p61, %p62
      %p64 = scmp.ne.s32.totalorder %s53, %s56
      %p65 = scmp.eq.s32.totalorder %s22, 1
      %p66 = por %p64, %p65
      %p67 = scmp.ne.s32.totalorder %s56, %s57
      %p68 = scmp.eq.s32.totalorder %s22, 0
      %p69 = por %p67, %p68
      %p70 = scmp.ne.s32.totalorder %s56, %s57
      %p71 = scmp.eq.s32.totalorder %s23, 1
      %p72 = por %p70, %p71
      %p74 = scmp.ne.s32.totalorder %s57, %s73
      %p75 = scmp.eq.s32.totalorder %s23, 0
      %p76 = por %p74, %p75
      %s78 = sadd.s32 %s77, 1
      %p81 = scmp.eq.s32.totalorder %s17, 1
      %p82 = scmp.ne.s32.totalorder %s77, %s79
      %p83 = scmp.eq.s32.totalorder %s17, 0
      %p84 = por %p82, %p83
      %p85 = scmp.ne.s32.totalorder %s77, %s79
      %p86 = scmp.eq.s32.totalorder %s22, 1
      %p87 = por %p85, %p86
      %p88 = scmp.ne.s32.totalorder %s79, %s80
      %p89 = scmp.eq.s32.totalorder %s22, 0
      %p90 = por %p88, %p89
      %p91 = scmp.ne.s32.totalorder %s79, %s80
      %p92 = scmp.eq.s32.totalorder %s23, 1
      %p93 = por %p91, %p92
      %p95 = scmp.ne.s32.totalorder %s80, %s94
      %p96 = scmp.eq.s32.totalorder %s23, 0
      %p97 = por %p95, %p96
      %s98 = ssub.s32 %s17, %s24
      %p99 = scmp.eq.s32.totalorder %s98, 0
      %s101 = sadd.s32 %s100, 1
      %s102 = scalar_select %p99, %s100, %s101
      %p105 = pneg %p99
      %p106 = scmp.eq.s32.totalorder %s17, 1
      %p107 = por %p105, %p106
      %p108 = scmp.ne.s32.totalorder %s100, %s103
      %p109 = scmp.eq.s32.totalorder %s17, 0
      %p110 = por %p108, %p109
      %p111 = scmp.ne.s32.totalorder %s100, %s103
      %p112 = scmp.eq.s32.totalorder %s22, 1
      %p113 = por %p111, %p112
      %p114 = scmp.ne.s32.totalorder %s103, %s104
      %p115 = scmp.eq.s32.totalorder %s22, 0
      %p116 = por %p114, %p115
      %p117 = scmp.ne.s32.totalorder %s103, %s104
      %p118 = scmp.eq.s32.totalorder %s23, 1
      %p119 = por %p117, %p118
      %p121 = scmp.ne.s32.totalorder %s104, %s120
      %p122 = scmp.eq.s32.totalorder %s23, 0
      %p123 = por %p121, %p122
      %p124 = scmp.le.s32.totalorder 1, %s17
      %p125 = scmp.lt.s32.totalorder %s17, 3
      %p126 = pnand %p124, %p125
      %p127 = pneg %p126
      // Predicated region
      $region9: #{tpu_custom_call.1} parent=5 // pred_check
        _
      $region10: #{tpu_custom_call.1} parent=5 // pred_check_branch
        %129 = sbr.rel (%p126) target = $region12
      $region11: #{tpu_custom_call.1} parent=5 // pred_region
        %s130 = ssub.s32 %s17, 1
        // Predicated region
        $region13: #{tpu_custom_call.1} parent=11 // pred_check
          %p131 = pneg %p90
        $region14: #{tpu_custom_call.1} parent=11 // pred_check_branch
          %133 = sbr.rel (%p131) target = $region16
        $region15: #{tpu_custom_call.1} parent=11 // pred_region
          %s135 = ssub.s32 16, 16
          %136 = vsyncadd [#allocation8], %s135
          %s138 = sshll.u32 [#allocation7], 4
          %s139 = int_to_ptr.vmem [resolvable:$true] %s138
          %141 = dma.hbm_to_vmem [thread:$0]  %s3, 16, %s139, [#allocation8]
        $region16: #{tpu_custom_call.1} parent=11 // pred_fallthru
          _
      $region12: #{tpu_custom_call.1} parent=5 // pred_fallthru
        _
      %p142 = scmp.lt.s32.totalorder %s17, 2
      // Predicated region
      $region17: #{tpu_custom_call.1} parent=5 // pred_check
        %p143 = pneg %p142
      $region18: #{tpu_custom_call.1} parent=5 // pred_check_branch
        %145 = sbr.rel (%p143) target = $region20
      $region19: #{tpu_custom_call.1} parent=5 // pred_region
        // Predicated region
        $region21: #{tpu_custom_call.1} parent=19 // pred_check
          %p146 = pneg %p37
        $region22: #{tpu_custom_call.1} parent=19 // pred_check_branch
          %148 = sbr.rel (%p146) target = $region24
        $region23: #{tpu_custom_call.1} parent=19 // pred_region
          %s149 = sand.u32 %s27, 1
          %s150 = scalar_lea.sflag [#allocation5], %s149
          %s151 = sand.u32 %s27, 1
          %s152 = smul.addr %s151, 32
          %s153 = scalar_lea.vmem [#allocation4], %s152
          %s154 = smul.u32 8, %s17
          %s156 = ssub.s32 512, 512
          %157 = vsyncadd %s150, %s156
          %s158 = smul.addr %s154, 64
          %s159 = scalar_lea.hbm %s0, %s158
          %s160 = sshll.u32 %s153, 4
          %s161 = int_to_ptr.vmem [resolvable:$true] %s160
          %166 = dma.hbm_to_vmem [thread:$0]  %s159, 512, %s161, %s150, 64, 64, 4
        $region24: #{tpu_custom_call.1} parent=19 // pred_fallthru
          _
        // Predicated region
        $region25: #{tpu_custom_call.1} parent=19 // pred_check
          %p167 = pneg %p63
        $region26: #{tpu_custom_call.1} parent=19 // pred_check_branch
          %169 = sbr.rel (%p167) target = $region28
        $region27: #{tpu_custom_call.1} parent=19 // pred_region
          %s170 = smul.u32 8, %s17
          %p171 = scmp.lt.s32.totalorder %s170, 15
          %s172 = scalar_select %p171, %s170, 15
          %s173 = smul.addr %s172, 4
          %s174 = scalar_lea.vmem %s1, %s173
          %s175 = smul.u32 8, %s17
        $region28: #{tpu_custom_call.1} parent=19 // pred_fallthru
          _
      $region20: #{tpu_custom_call.1} parent=5 // pred_fallthru
        _
      %p176 = scmp.le.s32.totalorder 1, %s17
      %p177 = scmp.lt.s32.totalorder %s17, 3
      %p178 = pnand %p176, %p177
      %p179 = pneg %p178
      // Predicated region
      $region29: #{tpu_custom_call.1} parent=5 // pred_check
        _
      $region30: #{tpu_custom_call.1} parent=5 // pred_check_branch
        %181 = sbr.rel (%p178) target = $region32
      $region31: #{tpu_custom_call.1} parent=5 // pred_region
        %s182 = ssub.s32 %s17, 1
        %s183 = sand.u32 %s30, 1
        %s184 = scalar_lea.sflag [#allocation5], %s183
        %s185 = sand.u32 %s30, 1
        %s186 = smul.addr %s185, 32
        %s187 = scalar_lea.vmem [#allocation4], %s186
        // Predicated region
        $region33: #{tpu_custom_call.1} parent=31 // pred_check
          %p188 = pneg %p43
        $region34: #{tpu_custom_call.1} parent=31 // pred_check_branch
          %190 = sbr.rel (%p188) target = $region36
        $region35: #{tpu_custom_call.1} parent=31 // pred_region
          %191 = dma.done %s184, 512
        $region36: #{tpu_custom_call.1} parent=31 // pred_fallthru
          _
        // Predicated region
        $region37: #{tpu_custom_call.1} parent=31 // pred_check
          %p192 = pneg %p90
        $region38: #{tpu_custom_call.1} parent=31 // pred_check_branch
          %194 = sbr.rel (%p192) target = $region40
        $region39: #{tpu_custom_call.1} parent=31 // pred_region
          %195 = dma.done [#allocation8], 16
        $region40: #{tpu_custom_call.1} parent=31 // pred_fallthru
          _
        %s196 = sand.u32 %s30, 1
        %s197 = scalar_lea.sflag [#allocation5], %s196
        %s198 = sand.u32 %s30, 1
        %s199 = smul.addr %s198, 32
        %s200 = scalar_lea.vmem [#allocation4], %s199
        %p201 = pneg %p43
        %p202 = pneg %p40
        %s203 = smul.u32 8, %s22
        %p204 = scmp.lt.s32.totalorder %s203, 15
        %s205 = scalar_select %p204, %s203, 15
        %s206 = smul.addr %s205, 4
        %s207 = scalar_lea.vmem %s1, %s206
        %p208 = pneg %p69
        %p209 = pneg %p66
        %p210 = pneg %p90
        %p211 = pneg %p87
        %p212 = pneg %p116
        %p213 = pneg %p113
        %s214 = sand.u32 %s103, 1
        %s215 = scalar_lea.sflag [#allocation6], %s214
        %s216 = sand.u32 %s103, 1
        %s217 = smul.addr %s216, 64
        %s218 = scalar_lea.vmem [#allocation9], %s217
        %s219 = smul.u32 8, %s22
        %s220 = smul.u32 8, %s22
        %p221 = scmp.lt.s32.totalorder %s220, 15
        %s222 = scalar_select %p221, %s220, 15
        %s223 = smul.addr %s222, 4
        %s224 = scalar_lea.vmem %s1, %s223
        %s225 = smul.u32 8, %s22
        %s226 = smul.u32 8, %s22
        %p228 = scmp.eq.s32.totalorder %s22, 0
        // Predicated region
        $region41: #{tpu_custom_call.1} parent=31 // pred_check
          %p229 = pneg %p228
        $region42: #{tpu_custom_call.1} parent=31 // pred_check_branch
          %231 = sbr.rel (%p229) target = $region44
        $region43: #{tpu_custom_call.1} parent=31 // pred_region
          // Predicated region
          $region45: #{tpu_custom_call.1} parent=43 // pred_check
            _
          $region46: #{tpu_custom_call.1} parent=43 // pred_check_branch
            %233 = sbr.rel target = $region48
          $region47: #{tpu_custom_call.1} parent=43 // pred_region
            %234 = sst [smem:[#allocation12]] [#allocation11]
            %235 = sst [smem:[#allocation13]] [#allocation10]
          $region48: #{tpu_custom_call.1} parent=43 // pred_fallthru
            _
          %237 = shalt.err (0)
          %s239 = sshll.u32 [#allocation2], 4
          %s240 = int_to_ptr.vmem [resolvable:$true] %s239
          %242 = dma.hbm_to_vmem [thread:$0]  %s2, 34048, %s240, [#allocation3]
          %s243 = smul.u32 4, 532
          %s244 = smul.u32 %s243, 1
          %s245 = sshll.u32 %s244, 4
          %246 = dma.done [#allocation3], %s245
        $region44: #{tpu_custom_call.1} parent=31 // pred_fallthru
          _
        %v247 = vld [vmem:[%s187] sm:$0xf]
        %v248 = vld [vmem:[%s187 + $0x4] sm:$0xf]
        %v249 = vld [vmem:[%s187 + $0x8] sm:$0xf]
        %v250 = vld [vmem:[%s187 + $0xc] sm:$0xf]
        %v251 = vld [vmem:[%s187 + $0x10] sm:$0xf]
        %v252 = vld [vmem:[%s187 + $0x14] sm:$0xf]
        %v253 = vld [vmem:[%s187 + $0x18] sm:$0xf]
        %v254 = vld [vmem:[%s187 + $0x1c] sm:$0xf]
        %v255 = vld [vmem:[%s224] sm:$0xf]
        %v256 = vld [vmem:[%s224 + $0x4] sm:$0xf]
        %v257 = vld [vmem:[%s224 + $0x8] sm:$0xf]
        %v258 = vld [vmem:[%s224 + $0xc] sm:$0xf]
        %v259 = vld [vmem:[%s224 + $0x10] sm:$0xf]
        %v260 = vld [vmem:[%s224 + $0x14] sm:$0xf]
        %v261 = vld [vmem:[%s224 + $0x18] sm:$0xf]
        %v262 = vld [vmem:[%s224 + $0x1c] sm:$0xf]
        %v263 = vld [vmem:[#allocation2] sm:$0xff]
        %v264 = vld [vmem:[#allocation2 + $0x8] sm:$0xff]
        %v265 = vld [vmem:[#allocation2 + $0x10] sm:$0xff]
        %v266 = vld [vmem:[#allocation2 + $0x18] sm:$0xff]
        %v267 = vld [vmem:[#allocation2 + $0x20] sm:$0xff]
        %v268 = vld [vmem:[#allocation2 + $0x28] sm:$0xff]
        %v269 = vld [vmem:[#allocation2 + $0x30] sm:$0xff]
        %v270 = vld [vmem:[#allocation2 + $0x38] sm:$0xff]
        %v271 = vld [vmem:[#allocation2 + $0x40] sm:$0xff]
        %v272 = vld [vmem:[#allocation2 + $0x48] sm:$0xff]
        %v273 = vld [vmem:[#allocation2 + $0x50] sm:$0xff]
        %v274 = vld [vmem:[#allocation2 + $0x58] sm:$0xff]
        %v275 = vld [vmem:[#allocation2 + $0x60] sm:$0xff]
        %v276 = vld [vmem:[#allocation2 + $0x68] sm:$0xff]
        %v277 = vld [vmem:[#allocation2 + $0x70] sm:$0xff]
        %v278 = vld [vmem:[#allocation2 + $0x78] sm:$0xff]
        %v279 = vld [vmem:[#allocation2 + $0x80] sm:$0xff]
        %v280 = vld [vmem:[#allocation2 + $0x88] sm:$0xff]
        %v281 = vld [vmem:[#allocation2 + $0x90] sm:$0xff]
        %v282 = vld [vmem:[#allocation2 + $0x98] sm:$0xff]
        %v283 = vld [vmem:[#allocation2 + $0xa0] sm:$0xff]
        %v284 = vld [vmem:[#allocation2 + $0xa8] sm:$0xff]
        %v285 = vld [vmem:[#allocation2 + $0xb0] sm:$0xff]
        %v286 = vld [vmem:[#allocation2 + $0xb8] sm:$0xff]
        %v287 = vld [vmem:[#allocation2 + $0xc0] sm:$0xff]
        %v288 = vld [vmem:[#allocation2 + $0xc8] sm:$0xff]
        %v289 = vld [vmem:[#allocation2 + $0xd0] sm:$0xff]
        %v290 = vld [vmem:[#allocation2 + $0xd8] sm:$0xff]
        %v291 = vld [vmem:[#allocation2 + $0xe0] sm:$0xff]
        %v292 = vld [vmem:[#allocation2 + $0xe8] sm:$0xff]
        %v293 = vld [vmem:[#allocation2 + $0xf0] sm:$0xff]
        %v294 = vld [vmem:[#allocation2 + $0xf8] sm:$0xff]
        %v295 = vld [vmem:[#allocation2 + $0x100] sm:$0xff]
        %v296 = vld [vmem:[#allocation2 + $0x108] sm:$0xff]
        %v297 = vld [vmem:[#allocation2 + $0x110] sm:$0xff]
        %v298 = vld [vmem:[#allocation2 + $0x118] sm:$0xff]
        %v299 = vld [vmem:[#allocation2 + $0x120] sm:$0xff]
        %v300 = vld [vmem:[#allocation2 + $0x128] sm:$0xff]
        %v301 = vld [vmem:[#allocation2 + $0x130] sm:$0xff]
        %v302 = vld [vmem:[#allocation2 + $0x138] sm:$0xff]
        %v303 = vld [vmem:[#allocation2 + $0x140] sm:$0xff]
        %v304 = vld [vmem:[#allocation2 + $0x148] sm:$0xff]
        %v305 = vld [vmem:[#allocation2 + $0x150] sm:$0xff]
        %v306 = vld [vmem:[#allocation2 + $0x158] sm:$0xff]
        %v307 = vld [vmem:[#allocation2 + $0x160] sm:$0xff]
        %v308 = vld [vmem:[#allocation2 + $0x168] sm:$0xff]
        %v309 = vld [vmem:[#allocation2 + $0x170] sm:$0xff]
        %v310 = vld [vmem:[#allocation2 + $0x178] sm:$0xff]
        %v311 = vld [vmem:[#allocation2 + $0x180] sm:$0xff]
        %v312 = vld [vmem:[#allocation2 + $0x188] sm:$0xff]
        %v313 = vld [vmem:[#allocation2 + $0x190] sm:$0xff]
        %v314 = vld [vmem:[#allocation2 + $0x198] sm:$0xff]
        %v315 = vld [vmem:[#allocation2 + $0x1a0] sm:$0xff]
        %v316 = vld [vmem:[#allocation2 + $0x1a8] sm:$0xff]
        %v317 = vld [vmem:[#allocation2 + $0x1b0] sm:$0xff]
        %v318 = vld [vmem:[#allocation2 + $0x1b8] sm:$0xff]
        %v319 = vld [vmem:[#allocation2 + $0x1c0] sm:$0xff]
        %v320 = vld [vmem:[#allocation2 + $0x1c8] sm:$0xff]
        %v321 = vld [vmem:[#allocation2 + $0x1d0] sm:$0xff]
        %v322 = vld [vmem:[#allocation2 + $0x1d8] sm:$0xff]
        %v323 = vld [vmem:[#allocation2 + $0x1e0] sm:$0xff]
        %v324 = vld [vmem:[#allocation2 + $0x1e8] sm:$0xff]
        %v325 = vld [vmem:[#allocation2 + $0x1f0] sm:$0xff]
        %v326 = vld [vmem:[#allocation2 + $0x1f8] sm:$0xff]
        %v327 = vld [vmem:[#allocation2 + $0x200] sm:$0xff]
        %v328 = vld [vmem:[#allocation2 + $0x208] sm:$0xff]
        %v329 = vld [vmem:[#allocation2 + $0x210] sm:$0xff]
        %v330 = vld [vmem:[#allocation2 + $0x218] sm:$0xff]
        %v331 = vld [vmem:[#allocation2 + $0x220] sm:$0xff]
        %v332 = vld [vmem:[#allocation2 + $0x228] sm:$0xff]
        %v333 = vld [vmem:[#allocation2 + $0x230] sm:$0xff]
        %v334 = vld [vmem:[#allocation2 + $0x238] sm:$0xff]
        %v335 = vld [vmem:[#allocation2 + $0x240] sm:$0xff]
        %v336 = vld [vmem:[#allocation2 + $0x248] sm:$0xff]
        %v337 = vld [vmem:[#allocation2 + $0x250] sm:$0xff]
        %v338 = vld [vmem:[#allocation2 + $0x258] sm:$0xff]
        %v339 = vld [vmem:[#allocation2 + $0x260] sm:$0xff]
        %v340 = vld [vmem:[#allocation2 + $0x268] sm:$0xff]
        %v341 = vld [vmem:[#allocation2 + $0x270] sm:$0xff]
        %v342 = vld [vmem:[#allocation2 + $0x278] sm:$0xff]
        %v343 = vld [vmem:[#allocation2 + $0x280] sm:$0xff]
        %v344 = vld [vmem:[#allocation2 + $0x288] sm:$0xff]
        %v345 = vld [vmem:[#allocation2 + $0x290] sm:$0xff]
        %v346 = vld [vmem:[#allocation2 + $0x298] sm:$0xff]
        %v347 = vld [vmem:[#allocation2 + $0x2a0] sm:$0xff]
        %v348 = vld [vmem:[#allocation2 + $0x2a8] sm:$0xff]
        %v349 = vld [vmem:[#allocation2 + $0x2b0] sm:$0xff]
        %v350 = vld [vmem:[#allocation2 + $0x2b8] sm:$0xff]
        %v351 = vld [vmem:[#allocation2 + $0x2c0] sm:$0xff]
        %v352 = vld [vmem:[#allocation2 + $0x2c8] sm:$0xff]
        %v353 = vld [vmem:[#allocation2 + $0x2d0] sm:$0xff]
        %v354 = vld [vmem:[#allocation2 + $0x2d8] sm:$0xff]
        %v355 = vld [vmem:[#allocation2 + $0x2e0] sm:$0xff]
        %v356 = vld [vmem:[#allocation2 + $0x2e8] sm:$0xff]
        %v357 = vld [vmem:[#allocation2 + $0x2f0] sm:$0xff]
        %v358 = vld [vmem:[#allocation2 + $0x2f8] sm:$0xff]
        %v359 = vld [vmem:[#allocation2 + $0x300] sm:$0xff]
        %v360 = vld [vmem:[#allocation2 + $0x308] sm:$0xff]
        %v361 = vld [vmem:[#allocation2 + $0x310] sm:$0xff]
        %v362 = vld [vmem:[#allocation2 + $0x318] sm:$0xff]
        %v363 = vld [vmem:[#allocation2 + $0x320] sm:$0xff]
        %v364 = vld [vmem:[#allocation2 + $0x328] sm:$0xff]
        %v365 = vld [vmem:[#allocation2 + $0x330] sm:$0xff]
        %v366 = vld [vmem:[#allocation2 + $0x338] sm:$0xff]
        %v367 = vld [vmem:[#allocation2 + $0x340] sm:$0xff]
        %v368 = vld [vmem:[#allocation2 + $0x348] sm:$0xff]
        %v369 = vld [vmem:[#allocation2 + $0x350] sm:$0xff]
        %v370 = vld [vmem:[#allocation2 + $0x358] sm:$0xff]
        %v371 = vld [vmem:[#allocation2 + $0x360] sm:$0xff]
        %v372 = vld [vmem:[#allocation2 + $0x368] sm:$0xff]
        %v373 = vld [vmem:[#allocation2 + $0x370] sm:$0xff]
        %v374 = vld [vmem:[#allocation2 + $0x378] sm:$0xff]
        %v375 = vld [vmem:[#allocation2 + $0x380] sm:$0xff]
        %v376 = vld [vmem:[#allocation2 + $0x388] sm:$0xff]
        %v377 = vld [vmem:[#allocation2 + $0x390] sm:$0xff]
        %v378 = vld [vmem:[#allocation2 + $0x398] sm:$0xff]
        %v379 = vld [vmem:[#allocation2 + $0x3a0] sm:$0xff]
        %v380 = vld [vmem:[#allocation2 + $0x3a8] sm:$0xff]
        %v381 = vld [vmem:[#allocation2 + $0x3b0] sm:$0xff]
        %v382 = vld [vmem:[#allocation2 + $0x3b8] sm:$0xff]
        %v383 = vld [vmem:[#allocation2 + $0x3c0] sm:$0xff]
        %v384 = vld [vmem:[#allocation2 + $0x3c8] sm:$0xff]
        %v385 = vld [vmem:[#allocation2 + $0x3d0] sm:$0xff]
        %v386 = vld [vmem:[#allocation2 + $0x3d8] sm:$0xff]
        %v387 = vld [vmem:[#allocation2 + $0x3e0] sm:$0xff]
        %v388 = vld [vmem:[#allocation2 + $0x3e8] sm:$0xff]
        %v389 = vld [vmem:[#allocation2 + $0x3f0] sm:$0xff]
        %v390 = vld [vmem:[#allocation2 + $0x3f8] sm:$0xff]
        %v391 = vld [vmem:[#allocation2 + $0x400] sm:$0xff]
        %v392 = vld [vmem:[#allocation2 + $0x408] sm:$0xff]
        %v393 = vld [vmem:[#allocation2 + $0x410] sm:$0xff]
        %v394 = vld [vmem:[#allocation2 + $0x418] sm:$0xff]
        %v395 = vld [vmem:[#allocation2 + $0x420] sm:$0xff]
        %v396 = vld [vmem:[#allocation2 + $0x428] sm:$0xff]
        %v397 = vld [vmem:[#allocation2 + $0x430] sm:$0xff]
        %v398 = vld [vmem:[#allocation2 + $0x438] sm:$0xff]
        %v399 = vld [vmem:[#allocation2 + $0x440] sm:$0xff]
        %v400 = vld [vmem:[#allocation2 + $0x448] sm:$0xff]
        %v401 = vld [vmem:[#allocation2 + $0x450] sm:$0xff]
        %v402 = vld [vmem:[#allocation2 + $0x458] sm:$0xff]
        %v403 = vld [vmem:[#allocation2 + $0x460] sm:$0xff]
        %v404 = vld [vmem:[#allocation2 + $0x468] sm:$0xff]
        %v405 = vld [vmem:[#allocation2 + $0x470] sm:$0xff]
        %v406 = vld [vmem:[#allocation2 + $0x478] sm:$0xff]
        %v407 = vld [vmem:[#allocation2 + $0x480] sm:$0xff]
        %v408 = vld [vmem:[#allocation2 + $0x488] sm:$0xff]
        %v409 = vld [vmem:[#allocation2 + $0x490] sm:$0xff]
        %v410 = vld [vmem:[#allocation2 + $0x498] sm:$0xff]
        %v411 = vld [vmem:[#allocation2 + $0x4a0] sm:$0xff]
        %v412 = vld [vmem:[#allocation2 + $0x4a8] sm:$0xff]
        %v413 = vld [vmem:[#allocation2 + $0x4b0] sm:$0xff]
        %v414 = vld [vmem:[#allocation2 + $0x4b8] sm:$0xff]
        %v415 = vld [vmem:[#allocation2 + $0x4c0] sm:$0xff]
        %v416 = vld [vmem:[#allocation2 + $0x4c8] sm:$0xff]
        %v417 = vld [vmem:[#allocation2 + $0x4d0] sm:$0xff]
        %v418 = vld [vmem:[#allocation2 + $0x4d8] sm:$0xff]
        %v419 = vld [vmem:[#allocation2 + $0x4e0] sm:$0xff]
        %v420 = vld [vmem:[#allocation2 + $0x4e8] sm:$0xff]
        %v421 = vld [vmem:[#allocation2 + $0x4f0] sm:$0xff]
        %v422 = vld [vmem:[#allocation2 + $0x4f8] sm:$0xff]
        %v423 = vld [vmem:[#allocation2 + $0x500] sm:$0xff]
        %v424 = vld [vmem:[#allocation2 + $0x508] sm:$0xff]
        %v425 = vld [vmem:[#allocation2 + $0x510] sm:$0xff]
        %v426 = vld [vmem:[#allocation2 + $0x518] sm:$0xff]
        %v427 = vld [vmem:[#allocation2 + $0x520] sm:$0xff]
        %v428 = vld [vmem:[#allocation2 + $0x528] sm:$0xff]
        %v429 = vld [vmem:[#allocation2 + $0x530] sm:$0xff]
        %v430 = vld [vmem:[#allocation2 + $0x538] sm:$0xff]
        %v431 = vld [vmem:[#allocation2 + $0x540] sm:$0xff]
        %v432 = vld [vmem:[#allocation2 + $0x548] sm:$0xff]
        %v433 = vld [vmem:[#allocation2 + $0x550] sm:$0xff]
        %v434 = vld [vmem:[#allocation2 + $0x558] sm:$0xff]
        %v435 = vld [vmem:[#allocation2 + $0x560] sm:$0xff]
        %v436 = vld [vmem:[#allocation2 + $0x568] sm:$0xff]
        %v437 = vld [vmem:[#allocation2 + $0x570] sm:$0xff]
        %v438 = vld [vmem:[#allocation2 + $0x578] sm:$0xff]
        %v439 = vld [vmem:[#allocation2 + $0x580] sm:$0xff]
        %v440 = vld [vmem:[#allocation2 + $0x588] sm:$0xff]
        %v441 = vld [vmem:[#allocation2 + $0x590] sm:$0xff]
        %v442 = vld [vmem:[#allocation2 + $0x598] sm:$0xff]
        %v443 = vld [vmem:[#allocation2 + $0x5a0] sm:$0xff]
        %v444 = vld [vmem:[#allocation2 + $0x5a8] sm:$0xff]
        %v445 = vld [vmem:[#allocation2 + $0x5b0] sm:$0xff]
        %v446 = vld [vmem:[#allocation2 + $0x5b8] sm:$0xff]
        %v447 = vld [vmem:[#allocation2 + $0x5c0] sm:$0xff]
        %v448 = vld [vmem:[#allocation2 + $0x5c8] sm:$0xff]
        %v449 = vld [vmem:[#allocation2 + $0x5d0] sm:$0xff]
        %v450 = vld [vmem:[#allocation2 + $0x5d8] sm:$0xff]
        %v451 = vld [vmem:[#allocation2 + $0x5e0] sm:$0xff]
        %v452 = vld [vmem:[#allocation2 + $0x5e8] sm:$0xff]
        %v453 = vld [vmem:[#allocation2 + $0x5f0] sm:$0xff]
        %v454 = vld [vmem:[#allocation2 + $0x5f8] sm:$0xff]
        %v455 = vld [vmem:[#allocation2 + $0x600] sm:$0xff]
        %v456 = vld [vmem:[#allocation2 + $0x608] sm:$0xff]
        %v457 = vld [vmem:[#allocation2 + $0x610] sm:$0xff]
        %v458 = vld [vmem:[#allocation2 + $0x618] sm:$0xff]
        %v459 = vld [vmem:[#allocation2 + $0x620] sm:$0xff]
        %v460 = vld [vmem:[#allocation2 + $0x628] sm:$0xff]
        %v461 = vld [vmem:[#allocation2 + $0x630] sm:$0xff]
        %v462 = vld [vmem:[#allocation2 + $0x638] sm:$0xff]
        %v463 = vld [vmem:[#allocation2 + $0x640] sm:$0xff]
        %v464 = vld [vmem:[#allocation2 + $0x648] sm:$0xff]
        %v465 = vld [vmem:[#allocation2 + $0x650] sm:$0xff]
        %v466 = vld [vmem:[#allocation2 + $0x658] sm:$0xff]
        %v467 = vld [vmem:[#allocation2 + $0x660] sm:$0xff]
        %v468 = vld [vmem:[#allocation2 + $0x668] sm:$0xff]
        %v469 = vld [vmem:[#allocation2 + $0x670] sm:$0xff]
        %v470 = vld [vmem:[#allocation2 + $0x678] sm:$0xff]
        %v471 = vld [vmem:[#allocation2 + $0x680] sm:$0xff]
        %v472 = vld [vmem:[#allocation2 + $0x688] sm:$0xff]
        %v473 = vld [vmem:[#allocation2 + $0x690] sm:$0xff]
        %v474 = vld [vmem:[#allocation2 + $0x698] sm:$0xff]
        %v475 = vld [vmem:[#allocation2 + $0x6a0] sm:$0xff]
        %v476 = vld [vmem:[#allocation2 + $0x6a8] sm:$0xff]
        %v477 = vld [vmem:[#allocation2 + $0x6b0] sm:$0xff]
        %v478 = vld [vmem:[#allocation2 + $0x6b8] sm:$0xff]
        %v479 = vld [vmem:[#allocation2 + $0x6c0] sm:$0xff]
        %v480 = vld [vmem:[#allocation2 + $0x6c8] sm:$0xff]
        %v481 = vld [vmem:[#allocation2 + $0x6d0] sm:$0xff]
        %v482 = vld [vmem:[#allocation2 + $0x6d8] sm:$0xff]
        %v483 = vld [vmem:[#allocation2 + $0x6e0] sm:$0xff]
        %v484 = vld [vmem:[#allocation2 + $0x6e8] sm:$0xff]
        %v485 = vld [vmem:[#allocation2 + $0x6f0] sm:$0xff]
        %v486 = vld [vmem:[#allocation2 + $0x6f8] sm:$0xff]
        %v487 = vld [vmem:[#allocation2 + $0x700] sm:$0xff]
        %v488 = vld [vmem:[#allocation2 + $0x708] sm:$0xff]
        %v489 = vld [vmem:[#allocation2 + $0x710] sm:$0xff]
        %v490 = vld [vmem:[#allocation2 + $0x718] sm:$0xff]
        %v491 = vld [vmem:[#allocation2 + $0x720] sm:$0xff]
        %v492 = vld [vmem:[#allocation2 + $0x728] sm:$0xff]
        %v493 = vld [vmem:[#allocation2 + $0x730] sm:$0xff]
        %v494 = vld [vmem:[#allocation2 + $0x738] sm:$0xff]
        %v495 = vld [vmem:[#allocation2 + $0x740] sm:$0xff]
        %v496 = vld [vmem:[#allocation2 + $0x748] sm:$0xff]
        %v497 = vld [vmem:[#allocation2 + $0x750] sm:$0xff]
        %v498 = vld [vmem:[#allocation2 + $0x758] sm:$0xff]
        %v499 = vld [vmem:[#allocation2 + $0x760] sm:$0xff]
        %v500 = vld [vmem:[#allocation2 + $0x768] sm:$0xff]
        %v501 = vld [vmem:[#allocation2 + $0x770] sm:$0xff]
        %v502 = vld [vmem:[#allocation2 + $0x778] sm:$0xff]
        %v503 = vld [vmem:[#allocation2 + $0x780] sm:$0xff]
        %v504 = vld [vmem:[#allocation2 + $0x788] sm:$0xff]
        %v505 = vld [vmem:[#allocation2 + $0x790] sm:$0xff]
        %v506 = vld [vmem:[#allocation2 + $0x798] sm:$0xff]
        %v507 = vld [vmem:[#allocation2 + $0x7a0] sm:$0xff]
        %v508 = vld [vmem:[#allocation2 + $0x7a8] sm:$0xff]
        %v509 = vld [vmem:[#allocation2 + $0x7b0] sm:$0xff]
        %v510 = vld [vmem:[#allocation2 + $0x7b8] sm:$0xff]
        %v511 = vld [vmem:[#allocation2 + $0x7c0] sm:$0xff]
        %v512 = vld [vmem:[#allocation2 + $0x7c8] sm:$0xff]
        %v513 = vld [vmem:[#allocation2 + $0x7d0] sm:$0xff]
        %v514 = vld [vmem:[#allocation2 + $0x7d8] sm:$0xff]
        %v515 = vld [vmem:[#allocation2 + $0x7e0] sm:$0xff]
        %v516 = vld [vmem:[#allocation2 + $0x7e8] sm:$0xff]
        %v517 = vld [vmem:[#allocation2 + $0x7f0] sm:$0xff]
        %v518 = vld [vmem:[#allocation2 + $0x7f8] sm:$0xff]
        %v519 = vld [vmem:[#allocation2 + $0x800] sm:$0xff]
        %v520 = vld [vmem:[#allocation2 + $0x808] sm:$0xff]
        %v521 = vld [vmem:[#allocation2 + $0x810] sm:$0xff]
        %v522 = vld [vmem:[#allocation2 + $0x818] sm:$0xff]
        %v523 = vld [vmem:[#allocation2 + $0x820] sm:$0xff]
        %v524 = vld [vmem:[#allocation2 + $0x828] sm:$0xff]
        %v525 = vld [vmem:[#allocation2 + $0x830] sm:$0xff]
        %v526 = vld [vmem:[#allocation2 + $0x838] sm:$0xff]
        %v527 = vld [vmem:[#allocation2 + $0x840] sm:$0xff]
        %v528 = vld [vmem:[#allocation2 + $0x848] sm:$0xff]
        %v529 = vld [vmem:[#allocation7] sm:$0x1]
        %531 = vset.pattern.permute.xlu0 0
        %532 = vperm.xlu0 %531, %v255
        %v533 = vpop.permute.xlu0 %532
        %v536 = vunpack.c.l.s4 839922192
        %v537 = vunpack.c.0.s8 %v536
        %v538 = vlaneseq
        %v539 = vshrl.u32 %v538, 7
        %v540 = vsub.s32 %v537, %v539
        %v541 = vrot.slane %v533, %v540
        %543 = vset.pattern.permute.xlu0 0
        %544 = vperm.xlu0 %543, %v256
        %v545 = vpop.permute.xlu0 %544
        %v548 = vunpack.c.l.s4 839922192
        %v549 = vunpack.c.0.s8 %v548
        %v550 = vlaneseq
        %v551 = vshrl.u32 %v550, 7
        %v552 = vsub.s32 %v549, %v551
        %v553 = vrot.slane %v545, %v552
        %555 = vset.pattern.permute.xlu0 0
        %556 = vperm.xlu0 %555, %v257
        %v557 = vpop.permute.xlu0 %556
        %v560 = vunpack.c.l.s4 839922192
        %v561 = vunpack.c.0.s8 %v560
        %v562 = vlaneseq
        %v563 = vshrl.u32 %v562, 7
        %v564 = vsub.s32 %v561, %v563
        %v565 = vrot.slane %v557, %v564
        %567 = vset.pattern.permute.xlu0 0
        %568 = vperm.xlu0 %567, %v258
        %v569 = vpop.permute.xlu0 %568
        %v572 = vunpack.c.l.s4 839922192
        %v573 = vunpack.c.0.s8 %v572
        %v574 = vlaneseq
        %v575 = vshrl.u32 %v574, 7
        %v576 = vsub.s32 %v573, %v575
        %v577 = vrot.slane %v569, %v576
        %579 = vset.pattern.permute.xlu0 0
        %580 = vperm.xlu0 %579, %v259
        %v581 = vpop.permute.xlu0 %580
        %v584 = vunpack.c.l.s4 839922192
        %v585 = vunpack.c.0.s8 %v584
        %v586 = vlaneseq
        %v587 = vshrl.u32 %v586, 7
        %v588 = vsub.s32 %v585, %v587
        %v589 = vrot.slane %v581, %v588
        %591 = vset.pattern.permute.xlu0 0
        %592 = vperm.xlu0 %591, %v260
        %v593 = vpop.permute.xlu0 %592
        %v596 = vunpack.c.l.s4 839922192
        %v597 = vunpack.c.0.s8 %v596
        %v598 = vlaneseq
        %v599 = vshrl.u32 %v598, 7
        %v600 = vsub.s32 %v597, %v599
        %v601 = vrot.slane %v593, %v600
        %603 = vset.pattern.permute.xlu0 0
        %604 = vperm.xlu0 %603, %v261
        %v605 = vpop.permute.xlu0 %604
        %v608 = vunpack.c.l.s4 839922192
        %v609 = vunpack.c.0.s8 %v608
        %v610 = vlaneseq
        %v611 = vshrl.u32 %v610, 7
        %v612 = vsub.s32 %v609, %v611
        %v613 = vrot.slane %v605, %v612
        %615 = vset.pattern.permute.xlu0 0
        %616 = vperm.xlu0 %615, %v262
        %v617 = vpop.permute.xlu0 %616
        %v620 = vunpack.c.l.s4 839922192
        %v621 = vunpack.c.0.s8 %v620
        %v622 = vlaneseq
        %v623 = vshrl.u32 %v622, 7
        %v624 = vsub.s32 %v621, %v623
        %v625 = vrot.slane %v617, %v624
        %v626 = vmul.bf16 %v541, %v247
        %v627 = vmul.bf16 %v553, %v248
        %v628 = vmul.bf16 %v565, %v249
        %v629 = vmul.bf16 %v577, %v250
        %v630 = vmul.bf16 %v589, %v251
        %v631 = vmul.bf16 %v601, %v252
        %v632 = vmul.bf16 %v613, %v253
        %v633 = vmul.bf16 %v625, %v254
        %634 = vset.pattern.permute.xlu0 1
        %635 = vperm.xlu0 %634, %v255
        %v636 = vpop.permute.xlu0 %635
        %v639 = vunpack.c.l.s4 839922192
        %v640 = vunpack.c.0.s8 %v639
        %v641 = vlaneseq
        %v642 = vshrl.u32 %v641, 7
        %v643 = vsub.s32 %v640, %v642
        %v644 = vrot.slane %v636, %v643
        %645 = vset.pattern.permute.xlu0 1
        %646 = vperm.xlu0 %645, %v256
        %v647 = vpop.permute.xlu0 %646
        %v650 = vunpack.c.l.s4 839922192
        %v651 = vunpack.c.0.s8 %v650
        %v652 = vlaneseq
        %v653 = vshrl.u32 %v652, 7
        %v654 = vsub.s32 %v651, %v653
        %v655 = vrot.slane %v647, %v654
        %656 = vset.pattern.permute.xlu0 1
        %657 = vperm.xlu0 %656, %v257
        %v658 = vpop.permute.xlu0 %657
        %v661 = vunpack.c.l.s4 839922192
        %v662 = vunpack.c.0.s8 %v661
        %v663 = vlaneseq
        %v664 = vshrl.u32 %v663, 7
        %v665 = vsub.s32 %v662, %v664
        %v666 = vrot.slane %v658, %v665
        %667 = vset.pattern.permute.xlu0 1
        %668 = vperm.xlu0 %667, %v258
        %v669 = vpop.permute.xlu0 %668
        %v672 = vunpack.c.l.s4 839922192
        %v673 = vunpack.c.0.s8 %v672
        %v674 = vlaneseq
        %v675 = vshrl.u32 %v674, 7
        %v676 = vsub.s32 %v673, %v675
        %v677 = vrot.slane %v669, %v676
        %678 = vset.pattern.permute.xlu0 1
        %679 = vperm.xlu0 %678, %v259
        %v680 = vpop.permute.xlu0 %679
        %v683 = vunpack.c.l.s4 839922192
        %v684 = vunpack.c.0.s8 %v683
        %v685 = vlaneseq
        %v686 = vshrl.u32 %v685, 7
        %v687 = vsub.s32 %v684, %v686
        %v688 = vrot.slane %v680, %v687
        %689 = vset.pattern.permute.xlu0 1
        %690 = vperm.xlu0 %689, %v260
        %v691 = vpop.permute.xlu0 %690
        %v694 = vunpack.c.l.s4 839922192
        %v695 = vunpack.c.0.s8 %v694
        %v696 = vlaneseq
        %v697 = vshrl.u32 %v696, 7
        %v698 = vsub.s32 %v695, %v697
        %v699 = vrot.slane %v691, %v698
        %700 = vset.pattern.permute.xlu0 1
        %701 = vperm.xlu0 %700, %v261
        %v702 = vpop.permute.xlu0 %701
        %v705 = vunpack.c.l.s4 839922192
        %v706 = vunpack.c.0.s8 %v705
        %v707 = vlaneseq
        %v708 = vshrl.u32 %v707, 7
        %v709 = vsub.s32 %v706, %v708
        %v710 = vrot.slane %v702, %v709
        %711 = vset.pattern.permute.xlu0 1
        %712 = vperm.xlu0 %711, %v262
        %v713 = vpop.permute.xlu0 %712
        %v716 = vunpack.c.l.s4 839922192
        %v717 = vunpack.c.0.s8 %v716
        %v718 = vlaneseq
        %v719 = vshrl.u32 %v718, 7
        %v720 = vsub.s32 %v717, %v719
        %v721 = vrot.slane %v713, %v720
        %v722 = vmul.bf16 %v644, %v247
        %v723 = vmul.bf16 %v655, %v248
        %v724 = vmul.bf16 %v666, %v249
        %v725 = vmul.bf16 %v677, %v250
        %v726 = vmul.bf16 %v688, %v251
        %v727 = vmul.bf16 %v699, %v252
        %v728 = vmul.bf16 %v710, %v253
        %v729 = vmul.bf16 %v721, %v254
        %730 = vset.pattern.permute.xlu0 2
        %731 = vperm.xlu0 %730, %v255
        %v732 = vpop.permute.xlu0 %731
        %v735 = vunpack.c.l.s4 839922192
        %v736 = vunpack.c.0.s8 %v735
        %v737 = vlaneseq
        %v738 = vshrl.u32 %v737, 7
        %v739 = vsub.s32 %v736, %v738
        %v740 = vrot.slane %v732, %v739
        %741 = vset.pattern.permute.xlu0 2
        %742 = vperm.xlu0 %741, %v256
        %v743 = vpop.permute.xlu0 %742
        %v746 = vunpack.c.l.s4 839922192
        %v747 = vunpack.c.0.s8 %v746
        %v748 = vlaneseq
        %v749 = vshrl.u32 %v748, 7
        %v750 = vsub.s32 %v747, %v749
        %v751 = vrot.slane %v743, %v750
        %752 = vset.pattern.permute.xlu0 2
        %753 = vperm.xlu0 %752, %v257
        %v754 = vpop.permute.xlu0 %753
        %v757 = vunpack.c.l.s4 839922192
        %v758 = vunpack.c.0.s8 %v757
        %v759 = vlaneseq
        %v760 = vshrl.u32 %v759, 7
        %v761 = vsub.s32 %v758, %v760
        %v762 = vrot.slane %v754, %v761
        %763 = vset.pattern.permute.xlu0 2
        %764 = vperm.xlu0 %763, %v258
        %v765 = vpop.permute.xlu0 %764
        %v768 = vunpack.c.l.s4 839922192
        %v769 = vunpack.c.0.s8 %v768
        %v770 = vlaneseq
        %v771 = vshrl.u32 %v770, 7
        %v772 = vsub.s32 %v769, %v771
        %v773 = vrot.slane %v765, %v772
        %774 = vset.pattern.permute.xlu0 2
        %775 = vperm.xlu0 %774, %v259
        %v776 = vpop.permute.xlu0 %775
        %v779 = vunpack.c.l.s4 839922192
        %v780 = vunpack.c.0.s8 %v779
        %v781 = vlaneseq
        %v782 = vshrl.u32 %v781, 7
        %v783 = vsub.s32 %v780, %v782
        %v784 = vrot.slane %v776, %v783
        %785 = vset.pattern.permute.xlu0 2
        %786 = vperm.xlu0 %785, %v260
        %v787 = vpop.permute.xlu0 %786
        %v790 = vunpack.c.l.s4 839922192
        %v791 = vunpack.c.0.s8 %v790
        %v792 = vlaneseq
        %v793 = vshrl.u32 %v792, 7
        %v794 = vsub.s32 %v791, %v793
        %v795 = vrot.slane %v787, %v794
        %796 = vset.pattern.permute.xlu0 2
        %797 = vperm.xlu0 %796, %v261
        %v798 = vpop.permute.xlu0 %797
        %v801 = vunpack.c.l.s4 839922192
        %v802 = vunpack.c.0.s8 %v801
        %v803 = vlaneseq
        %v804 = vshrl.u32 %v803, 7
        %v805 = vsub.s32 %v802, %v804
        %v806 = vrot.slane %v798, %v805
        %807 = vset.pattern.permute.xlu0 2
        %808 = vperm.xlu0 %807, %v262
        %v809 = vpop.permute.xlu0 %808
        %v812 = vunpack.c.l.s4 839922192
        %v813 = vunpack.c.0.s8 %v812
        %v814 = vlaneseq
        %v815 = vshrl.u32 %v814, 7
        %v816 = vsub.s32 %v813, %v815
        %v817 = vrot.slane %v809, %v816
        %v818 = vmul.bf16 %v740, %v247
        %v819 = vmul.bf16 %v751, %v248
        %v820 = vmul.bf16 %v762, %v249
        %v821 = vmul.bf16 %v773, %v250
        %v822 = vmul.bf16 %v784, %v251
        %v823 = vmul.bf16 %v795, %v252
        %v824 = vmul.bf16 %v806, %v253
        %v825 = vmul.bf16 %v817, %v254
        %826 = vset.pattern.permute.xlu0 3
        %827 = vperm.xlu0 %826, %v255
        %v828 = vpop.permute.xlu0 %827
        %v831 = vunpack.c.l.s4 839922192
        %v832 = vunpack.c.0.s8 %v831
        %v833 = vlaneseq
        %v834 = vshrl.u32 %v833, 7
        %v835 = vsub.s32 %v832, %v834
        %v836 = vrot.slane %v828, %v835
        %837 = vset.pattern.permute.xlu0 3
        %838 = vperm.xlu0 %837, %v256
        %v839 = vpop.permute.xlu0 %838
        %v842 = vunpack.c.l.s4 839922192
        %v843 = vunpack.c.0.s8 %v842
        %v844 = vlaneseq
        %v845 = vshrl.u32 %v844, 7
        %v846 = vsub.s32 %v843, %v845
        %v847 = vrot.slane %v839, %v846
        %848 = vset.pattern.permute.xlu0 3
        %849 = vperm.xlu0 %848, %v257
        %v850 = vpop.permute.xlu0 %849
        %v853 = vunpack.c.l.s4 839922192
        %v854 = vunpack.c.0.s8 %v853
        %v855 = vlaneseq
        %v856 = vshrl.u32 %v855, 7
        %v857 = vsub.s32 %v854, %v856
        %v858 = vrot.slane %v850, %v857
        %859 = vset.pattern.permute.xlu0 3
        %860 = vperm.xlu0 %859, %v258
        %v861 = vpop.permute.xlu0 %860
        %v864 = vunpack.c.l.s4 839922192
        %v865 = vunpack.c.0.s8 %v864
        %v866 = vlaneseq
        %v867 = vshrl.u32 %v866, 7
        %v868 = vsub.s32 %v865, %v867
        %v869 = vrot.slane %v861, %v868
        %870 = vset.pattern.permute.xlu0 3
        %871 = vperm.xlu0 %870, %v259
        %v872 = vpop.permute.xlu0 %871
        %v875 = vunpack.c.l.s4 839922192
        %v876 = vunpack.c.0.s8 %v875
        %v877 = vlaneseq
        %v878 = vshrl.u32 %v877, 7
        %v879 = vsub.s32 %v876, %v878
        %v880 = vrot.slane %v872, %v879
        %881 = vset.pattern.permute.xlu0 3
        %882 = vperm.xlu0 %881, %v260
        %v883 = vpop.permute.xlu0 %882
        %v886 = vunpack.c.l.s4 839922192
        %v887 = vunpack.c.0.s8 %v886
        %v888 = vlaneseq
        %v889 = vshrl.u32 %v888, 7
        %v890 = vsub.s32 %v887, %v889
        %v891 = vrot.slane %v883, %v890
        %892 = vset.pattern.permute.xlu0 3
        %893 = vperm.xlu0 %892, %v261
        %v894 = vpop.permute.xlu0 %893
        %v897 = vunpack.c.l.s4 839922192
        %v898 = vunpack.c.0.s8 %v897
        %v899 = vlaneseq
        %v900 = vshrl.u32 %v899, 7
        %v901 = vsub.s32 %v898, %v900
        %v902 = vrot.slane %v894, %v901
        %903 = vset.pattern.permute.xlu0 3
        %904 = vperm.xlu0 %903, %v262
        %v905 = vpop.permute.xlu0 %904
        %v908 = vunpack.c.l.s4 839922192
        %v909 = vunpack.c.0.s8 %v908
        %v910 = vlaneseq
        %v911 = vshrl.u32 %v910, 7
        %v912 = vsub.s32 %v909, %v911
        %v913 = vrot.slane %v905, %v912
        %v914 = vmul.bf16 %v836, %v247
        %v915 = vmul.bf16 %v847, %v248
        %v916 = vmul.bf16 %v858, %v249
        %v917 = vmul.bf16 %v869, %v250
        %v918 = vmul.bf16 %v880, %v251
        %v919 = vmul.bf16 %v891, %v252
        %v920 = vmul.bf16 %v902, %v253
        %v921 = vmul.bf16 %v913, %v254
        %922 = vset.pattern.permute.xlu0 4
        %923 = vperm.xlu0 %922, %v255
        %v924 = vpop.permute.xlu0 %923
        %v927 = vunpack.c.l.s4 839922192
        %v928 = vunpack.c.0.s8 %v927
        %v929 = vlaneseq
        %v930 = vshrl.u32 %v929, 7
        %v931 = vsub.s32 %v928, %v930
        %v932 = vrot.slane %v924, %v931
        %933 = vset.pattern.permute.xlu0 4
        %934 = vperm.xlu0 %933, %v256
        %v935 = vpop.permute.xlu0 %934
        %v938 = vunpack.c.l.s4 839922192
        %v939 = vunpack.c.0.s8 %v938
        %v940 = vlaneseq
        %v941 = vshrl.u32 %v940, 7
        %v942 = vsub.s32 %v939, %v941
        %v943 = vrot.slane %v935, %v942
        %944 = vset.pattern.permute.xlu0 4
        %945 = vperm.xlu0 %944, %v257
        %v946 = vpop.permute.xlu0 %945
        %v949 = vunpack.c.l.s4 839922192
        %v950 = vunpack.c.0.s8 %v949
        %v951 = vlaneseq
        %v952 = vshrl.u32 %v951, 7
        %v953 = vsub.s32 %v950, %v952
        %v954 = vrot.slane %v946, %v953
        %955 = vset.pattern.permute.xlu0 4
        %956 = vperm.xlu0 %955, %v258
        %v957 = vpop.permute.xlu0 %956
        %v960 = vunpack.c.l.s4 839922192
        %v961 = vunpack.c.0.s8 %v960
        %v962 = vlaneseq
        %v963 = vshrl.u32 %v962, 7
        %v964 = vsub.s32 %v961, %v963
        %v965 = vrot.slane %v957, %v964
        %966 = vset.pattern.permute.xlu0 4
        %967 = vperm.xlu0 %966, %v259
        %v968 = vpop.permute.xlu0 %967
        %v971 = vunpack.c.l.s4 839922192
        %v972 = vunpack.c.0.s8 %v971
        %v973 = vlaneseq
        %v974 = vshrl.u32 %v973, 7
        %v975 = vsub.s32 %v972, %v974
        %v976 = vrot.slane %v968, %v975
        %977 = vset.pattern.permute.xlu0 4
        %978 = vperm.xlu0 %977, %v260
        %v979 = vpop.permute.xlu0 %978
        %v982 = vunpack.c.l.s4 839922192
        %v983 = vunpack.c.0.s8 %v982
        %v984 = vlaneseq
        %v985 = vshrl.u32 %v984, 7
        %v986 = vsub.s32 %v983, %v985
        %v987 = vrot.slane %v979, %v986
        %988 = vset.pattern.permute.xlu0 4
        %989 = vperm.xlu0 %988, %v261
        %v990 = vpop.permute.xlu0 %989
        %v993 = vunpack.c.l.s4 839922192
        %v994 = vunpack.c.0.s8 %v993
        %v995 = vlaneseq
        %v996 = vshrl.u32 %v995, 7
        %v997 = vsub.s32 %v994, %v996
        %v998 = vrot.slane %v990, %v997
        %999 = vset.pattern.permute.xlu0 4
        %1000 = vperm.xlu0 %999, %v262
        %v1001 = vpop.permute.xlu0 %1000
        %v1004 = vunpack.c.l.s4 839922192
        %v1005 = vunpack.c.0.s8 %v1004
        %v1006 = vlaneseq
        %v1007 = vshrl.u32 %v1006, 7
        %v1008 = vsub.s32 %v1005, %v1007
        %v1009 = vrot.slane %v1001, %v1008
        %v1010 = vmul.bf16 %v932, %v247
        %v1011 = vmul.bf16 %v943, %v248
        %v1012 = vmul.bf16 %v954, %v249
        %v1013 = vmul.bf16 %v965, %v250
        %v1014 = vmul.bf16 %v976, %v251
        %v1015 = vmul.bf16 %v987, %v252
        %v1016 = vmul.bf16 %v998, %v253
        %v1017 = vmul.bf16 %v1009, %v254
        %1018 = vset.pattern.permute.xlu0 5
        %1019 = vperm.xlu0 %1018, %v255
        %v1020 = vpop.permute.xlu0 %1019
        %v1023 = vunpack.c.l.s4 839922192
        %v1024 = vunpack.c.0.s8 %v1023
        %v1025 = vlaneseq
        %v1026 = vshrl.u32 %v1025, 7
        %v1027 = vsub.s32 %v1024, %v1026
        %v1028 = vrot.slane %v1020, %v1027
        %1029 = vset.pattern.permute.xlu0 5
        %1030 = vperm.xlu0 %1029, %v256
        %v1031 = vpop.permute.xlu0 %1030
        %v1034 = vunpack.c.l.s4 839922192
        %v1035 = vunpack.c.0.s8 %v1034
        %v1036 = vlaneseq
        %v1037 = vshrl.u32 %v1036, 7
        %v1038 = vsub.s32 %v1035, %v1037
        %v1039 = vrot.slane %v1031, %v1038
        %1040 = vset.pattern.permute.xlu0 5
        %1041 = vperm.xlu0 %1040, %v257
        %v1042 = vpop.permute.xlu0 %1041
        %v1045 = vunpack.c.l.s4 839922192
        %v1046 = vunpack.c.0.s8 %v1045
        %v1047 = vlaneseq
        %v1048 = vshrl.u32 %v1047, 7
        %v1049 = vsub.s32 %v1046, %v1048
        %v1050 = vrot.slane %v1042, %v1049
        %1051 = vset.pattern.permute.xlu0 5
        %1052 = vperm.xlu0 %1051, %v258
        %v1053 = vpop.permute.xlu0 %1052
        %v1056 = vunpack.c.l.s4 839922192
        %v1057 = vunpack.c.0.s8 %v1056
        %v1058 = vlaneseq
        %v1059 = vshrl.u32 %v1058, 7
        %v1060 = vsub.s32 %v1057, %v1059
        %v1061 = vrot.slane %v1053, %v1060
        %1062 = vset.pattern.permute.xlu0 5
        %1063 = vperm.xlu0 %1062, %v259
        %v1064 = vpop.permute.xlu0 %1063
        %v1067 = vunpack.c.l.s4 839922192
        %v1068 = vunpack.c.0.s8 %v1067
        %v1069 = vlaneseq
        %v1070 = vshrl.u32 %v1069, 7
        %v1071 = vsub.s32 %v1068, %v1070
        %v1072 = vrot.slane %v1064, %v1071
        %1073 = vset.pattern.permute.xlu0 5
        %1074 = vperm.xlu0 %1073, %v260
        %v1075 = vpop.permute.xlu0 %1074
        %v1078 = vunpack.c.l.s4 839922192
        %v1079 = vunpack.c.0.s8 %v1078
        %v1080 = vlaneseq
        %v1081 = vshrl.u32 %v1080, 7
        %v1082 = vsub.s32 %v1079, %v1081
        %v1083 = vrot.slane %v1075, %v1082
        %1084 = vset.pattern.permute.xlu0 5
        %1085 = vperm.xlu0 %1084, %v261
        %v1086 = vpop.permute.xlu0 %1085
        %v1089 = vunpack.c.l.s4 839922192
        %v1090 = vunpack.c.0.s8 %v1089
        %v1091 = vlaneseq
        %v1092 = vshrl.u32 %v1091, 7
        %v1093 = vsub.s32 %v1090, %v1092
        %v1094 = vrot.slane %v1086, %v1093
        %1095 = vset.pattern.permute.xlu0 5
        %1096 = vperm.xlu0 %1095, %v262
        %v1097 = vpop.permute.xlu0 %1096
        %v1100 = vunpack.c.l.s4 839922192
        %v1101 = vunpack.c.0.s8 %v1100
        %v1102 = vlaneseq
        %v1103 = vshrl.u32 %v1102, 7
        %v1104 = vsub.s32 %v1101, %v1103
        %v1105 = vrot.slane %v1097, %v1104
        %v1106 = vmul.bf16 %v1028, %v247
        %v1107 = vmul.bf16 %v1039, %v248
        %v1108 = vmul.bf16 %v1050, %v249
        %v1109 = vmul.bf16 %v1061, %v250
        %v1110 = vmul.bf16 %v1072, %v251
        %v1111 = vmul.bf16 %v1083, %v252
        %v1112 = vmul.bf16 %v1094, %v253
        %v1113 = vmul.bf16 %v1105, %v254
        %1114 = vset.pattern.permute.xlu0 6
        %1115 = vperm.xlu0 %1114, %v255
        %v1116 = vpop.permute.xlu0 %1115
        %v1119 = vunpack.c.l.s4 839922192
        %v1120 = vunpack.c.0.s8 %v1119
        %v1121 = vlaneseq
        %v1122 = vshrl.u32 %v1121, 7
        %v1123 = vsub.s32 %v1120, %v1122
        %v1124 = vrot.slane %v1116, %v1123
        %1125 = vset.pattern.permute.xlu0 6
        %1126 = vperm.xlu0 %1125, %v256
        %v1127 = vpop.permute.xlu0 %1126
        %v1130 = vunpack.c.l.s4 839922192
        %v1131 = vunpack.c.0.s8 %v1130
        %v1132 = vlaneseq
        %v1133 = vshrl.u32 %v1132, 7
        %v1134 = vsub.s32 %v1131, %v1133
        %v1135 = vrot.slane %v1127, %v1134
        %1136 = vset.pattern.permute.xlu0 6
        %1137 = vperm.xlu0 %1136, %v257
        %v1138 = vpop.permute.xlu0 %1137
        %v1141 = vunpack.c.l.s4 839922192
        %v1142 = vunpack.c.0.s8 %v1141
        %v1143 = vlaneseq
        %v1144 = vshrl.u32 %v1143, 7
        %v1145 = vsub.s32 %v1142, %v1144
        %v1146 = vrot.slane %v1138, %v1145
        %1147 = vset.pattern.permute.xlu0 6
        %1148 = vperm.xlu0 %1147, %v258
        %v1149 = vpop.permute.xlu0 %1148
        %v1152 = vunpack.c.l.s4 839922192
        %v1153 = vunpack.c.0.s8 %v1152
        %v1154 = vlaneseq
        %v1155 = vshrl.u32 %v1154, 7
        %v1156 = vsub.s32 %v1153, %v1155
        %v1157 = vrot.slane %v1149, %v1156
        %1158 = vset.pattern.permute.xlu0 6
        %1159 = vperm.xlu0 %1158, %v259
        %v1160 = vpop.permute.xlu0 %1159
        %v1163 = vunpack.c.l.s4 839922192
        %v1164 = vunpack.c.0.s8 %v1163
        %v1165 = vlaneseq
        %v1166 = vshrl.u32 %v1165, 7
        %v1167 = vsub.s32 %v1164, %v1166
        %v1168 = vrot.slane %v1160, %v1167
        %1169 = vset.pattern.permute.xlu0 6
        %1170 = vperm.xlu0 %1169, %v260
        %v1171 = vpop.permute.xlu0 %1170
        %v1174 = vunpack.c.l.s4 839922192
        %v1175 = vunpack.c.0.s8 %v1174
        %v1176 = vlaneseq
        %v1177 = vshrl.u32 %v1176, 7
        %v1178 = vsub.s32 %v1175, %v1177
        %v1179 = vrot.slane %v1171, %v1178
        %1180 = vset.pattern.permute.xlu0 6
        %1181 = vperm.xlu0 %1180, %v261
        %v1182 = vpop.permute.xlu0 %1181
        %v1185 = vunpack.c.l.s4 839922192
        %v1186 = vunpack.c.0.s8 %v1185
        %v1187 = vlaneseq
        %v1188 = vshrl.u32 %v1187, 7
        %v1189 = vsub.s32 %v1186, %v1188
        %v1190 = vrot.slane %v1182, %v1189
        %1191 = vset.pattern.permute.xlu0 6
        %1192 = vperm.xlu0 %1191, %v262
        %v1193 = vpop.permute.xlu0 %1192
        %v1196 = vunpack.c.l.s4 839922192
        %v1197 = vunpack.c.0.s8 %v1196
        %v1198 = vlaneseq
        %v1199 = vshrl.u32 %v1198, 7
        %v1200 = vsub.s32 %v1197, %v1199
        %v1201 = vrot.slane %v1193, %v1200
        %v1202 = vmul.bf16 %v1124, %v247
        %v1203 = vmul.bf16 %v1135, %v248
        %v1204 = vmul.bf16 %v1146, %v249
        %v1205 = vmul.bf16 %v1157, %v250
        %v1206 = vmul.bf16 %v1168, %v251
        %v1207 = vmul.bf16 %v1179, %v252
        %v1208 = vmul.bf16 %v1190, %v253
        %v1209 = vmul.bf16 %v1201, %v254
        %1210 = vset.pattern.permute.xlu0 7
        %1211 = vperm.xlu0 %1210, %v255
        %v1212 = vpop.permute.xlu0 %1211
        %v1215 = vunpack.c.l.s4 839922192
        %v1216 = vunpack.c.0.s8 %v1215
        %v1217 = vlaneseq
        %v1218 = vshrl.u32 %v1217, 7
        %v1219 = vsub.s32 %v1216, %v1218
        %v1220 = vrot.slane %v1212, %v1219
        %1221 = vset.pattern.permute.xlu0 7
        %1222 = vperm.xlu0 %1221, %v256
        %v1223 = vpop.permute.xlu0 %1222
        %v1226 = vunpack.c.l.s4 839922192
        %v1227 = vunpack.c.0.s8 %v1226
        %v1228 = vlaneseq
        %v1229 = vshrl.u32 %v1228, 7
        %v1230 = vsub.s32 %v1227, %v1229
        %v1231 = vrot.slane %v1223, %v1230
        %1232 = vset.pattern.permute.xlu0 7
        %1233 = vperm.xlu0 %1232, %v257
        %v1234 = vpop.permute.xlu0 %1233
        %v1237 = vunpack.c.l.s4 839922192
        %v1238 = vunpack.c.0.s8 %v1237
        %v1239 = vlaneseq
        %v1240 = vshrl.u32 %v1239, 7
        %v1241 = vsub.s32 %v1238, %v1240
        %v1242 = vrot.slane %v1234, %v1241
        %1243 = vset.pattern.permute.xlu0 7
        %1244 = vperm.xlu0 %1243, %v258
        %v1245 = vpop.permute.xlu0 %1244
        %v1248 = vunpack.c.l.s4 839922192
        %v1249 = vunpack.c.0.s8 %v1248
        %v1250 = vlaneseq
        %v1251 = vshrl.u32 %v1250, 7
        %v1252 = vsub.s32 %v1249, %v1251
        %v1253 = vrot.slane %v1245, %v1252
        %1254 = vset.pattern.permute.xlu0 7
        %1255 = vperm.xlu0 %1254, %v259
        %v1256 = vpop.permute.xlu0 %1255
        %v1259 = vunpack.c.l.s4 839922192
        %v1260 = vunpack.c.0.s8 %v1259
        %v1261 = vlaneseq
        %v1262 = vshrl.u32 %v1261, 7
        %v1263 = vsub.s32 %v1260, %v1262
        %v1264 = vrot.slane %v1256, %v1263
        %1265 = vset.pattern.permute.xlu0 7
        %1266 = vperm.xlu0 %1265, %v260
        %v1267 = vpop.permute.xlu0 %1266
        %v1270 = vunpack.c.l.s4 839922192
        %v1271 = vunpack.c.0.s8 %v1270
        %v1272 = vlaneseq
        %v1273 = vshrl.u32 %v1272, 7
        %v1274 = vsub.s32 %v1271, %v1273
        %v1275 = vrot.slane %v1267, %v1274
        %1276 = vset.pattern.permute.xlu0 7
        %1277 = vperm.xlu0 %1276, %v261
        %v1278 = vpop.permute.xlu0 %1277
        %v1281 = vunpack.c.l.s4 839922192
        %v1282 = vunpack.c.0.s8 %v1281
        %v1283 = vlaneseq
        %v1284 = vshrl.u32 %v1283, 7
        %v1285 = vsub.s32 %v1282, %v1284
        %v1286 = vrot.slane %v1278, %v1285
        %1287 = vset.pattern.permute.xlu0 7
        %1288 = vperm.xlu0 %1287, %v262
        %v1289 = vpop.permute.xlu0 %1288
        %v1292 = vunpack.c.l.s4 839922192
        %v1293 = vunpack.c.0.s8 %v1292
        %v1294 = vlaneseq
        %v1295 = vshrl.u32 %v1294, 7
        %v1296 = vsub.s32 %v1293, %v1295
        %v1297 = vrot.slane %v1289, %v1296
        %v1298 = vmul.bf16 %v1220, %v247
        %v1299 = vmul.bf16 %v1231, %v248
        %v1300 = vmul.bf16 %v1242, %v249
        %v1301 = vmul.bf16 %v1253, %v250
        %v1302 = vmul.bf16 %v1264, %v251
        %v1303 = vmul.bf16 %v1275, %v252
        %v1304 = vmul.bf16 %v1286, %v253
        %v1305 = vmul.bf16 %v1297, %v254
        %1306 = vset.pattern.permute.xlu0 8
        %1307 = vperm.xlu0 %1306, %v255
        %v1308 = vpop.permute.xlu0 %1307
        %v1311 = vunpack.c.l.s4 839922192
        %v1312 = vunpack.c.0.s8 %v1311
        %v1313 = vlaneseq
        %v1314 = vshrl.u32 %v1313, 7
        %v1315 = vsub.s32 %v1312, %v1314
        %v1316 = vrot.slane %v1308, %v1315
        %1317 = vset.pattern.permute.xlu0 8
        %1318 = vperm.xlu0 %1317, %v256
        %v1319 = vpop.permute.xlu0 %1318
        %v1322 = vunpack.c.l.s4 839922192
        %v1323 = vunpack.c.0.s8 %v1322
        %v1324 = vlaneseq
        %v1325 = vshrl.u32 %v1324, 7
        %v1326 = vsub.s32 %v1323, %v1325
        %v1327 = vrot.slane %v1319, %v1326
        %1328 = vset.pattern.permute.xlu0 8
        %1329 = vperm.xlu0 %1328, %v257
        %v1330 = vpop.permute.xlu0 %1329
        %v1333 = vunpack.c.l.s4 839922192
        %v1334 = vunpack.c.0.s8 %v1333
        %v1335 = vlaneseq
        %v1336 = vshrl.u32 %v1335, 7
        %v1337 = vsub.s32 %v1334, %v1336
        %v1338 = vrot.slane %v1330, %v1337
        %1339 = vset.pattern.permute.xlu0 8
        %1340 = vperm.xlu0 %1339, %v258
        %v1341 = vpop.permute.xlu0 %1340
        %v1344 = vunpack.c.l.s4 839922192
        %v1345 = vunpack.c.0.s8 %v1344
        %v1346 = vlaneseq
        %v1347 = vshrl.u32 %v1346, 7
        %v1348 = vsub.s32 %v1345, %v1347
        %v1349 = vrot.slane %v1341, %v1348
        %1350 = vset.pattern.permute.xlu0 8
        %1351 = vperm.xlu0 %1350, %v259
        %v1352 = vpop.permute.xlu0 %1351
        %v1355 = vunpack.c.l.s4 839922192
        %v1356 = vunpack.c.0.s8 %v1355
        %v1357 = vlaneseq
        %v1358 = vshrl.u32 %v1357, 7
        %v1359 = vsub.s32 %v1356, %v1358
        %v1360 = vrot.slane %v1352, %v1359
        %1361 = vset.pattern.permute.xlu0 8
        %1362 = vperm.xlu0 %1361, %v260
        %v1363 = vpop.permute.xlu0 %1362
        %v1366 = vunpack.c.l.s4 839922192
        %v1367 = vunpack.c.0.s8 %v1366
        %v1368 = vlaneseq
        %v1369 = vshrl.u32 %v1368, 7
        %v1370 = vsub.s32 %v1367, %v1369
        %v1371 = vrot.slane %v1363, %v1370
        %1372 = vset.pattern.permute.xlu0 8
        %1373 = vperm.xlu0 %1372, %v261
        %v1374 = vpop.permute.xlu0 %1373
        %v1377 = vunpack.c.l.s4 839922192
        %v1378 = vunpack.c.0.s8 %v1377
        %v1379 = vlaneseq
        %v1380 = vshrl.u32 %v1379, 7
        %v1381 = vsub.s32 %v1378, %v1380
        %v1382 = vrot.slane %v1374, %v1381
        %1383 = vset.pattern.permute.xlu0 8
        %1384 = vperm.xlu0 %1383, %v262
        %v1385 = vpop.permute.xlu0 %1384
        %v1388 = vunpack.c.l.s4 839922192
        %v1389 = vunpack.c.0.s8 %v1388
        %v1390 = vlaneseq
        %v1391 = vshrl.u32 %v1390, 7
        %v1392 = vsub.s32 %v1389, %v1391
        %v1393 = vrot.slane %v1385, %v1392
        %v1394 = vmul.bf16 %v1316, %v247
        %v1395 = vmul.bf16 %v1327, %v248
        %v1396 = vmul.bf16 %v1338, %v249
        %v1397 = vmul.bf16 %v1349, %v250
        %v1398 = vmul.bf16 %v1360, %v251
        %v1399 = vmul.bf16 %v1371, %v252
        %v1400 = vmul.bf16 %v1382, %v253
        %v1401 = vmul.bf16 %v1393, %v254
        %1402 = vset.pattern.permute.xlu0 9
        %1403 = vperm.xlu0 %1402, %v255
        %v1404 = vpop.permute.xlu0 %1403
        %v1407 = vunpack.c.l.s4 839922192
        %v1408 = vunpack.c.0.s8 %v1407
        %v1409 = vlaneseq
        %v1410 = vshrl.u32 %v1409, 7
        %v1411 = vsub.s32 %v1408, %v1410
        %v1412 = vrot.slane %v1404, %v1411
        %1413 = vset.pattern.permute.xlu0 9
        %1414 = vperm.xlu0 %1413, %v256
        %v1415 = vpop.permute.xlu0 %1414
        %v1418 = vunpack.c.l.s4 839922192
        %v1419 = vunpack.c.0.s8 %v1418
        %v1420 = vlaneseq
        %v1421 = vshrl.u32 %v1420, 7
        %v1422 = vsub.s32 %v1419, %v1421
        %v1423 = vrot.slane %v1415, %v1422
        %1424 = vset.pattern.permute.xlu0 9
        %1425 = vperm.xlu0 %1424, %v257
        %v1426 = vpop.permute.xlu0 %1425
        %v1429 = vunpack.c.l.s4 839922192
        %v1430 = vunpack.c.0.s8 %v1429
        %v1431 = vlaneseq
        %v1432 = vshrl.u32 %v1431, 7
        %v1433 = vsub.s32 %v1430, %v1432
        %v1434 = vrot.slane %v1426, %v1433
        %1435 = vset.pattern.permute.xlu0 9
        %1436 = vperm.xlu0 %1435, %v258
        %v1437 = vpop.permute.xlu0 %1436
        %v1440 = vunpack.c.l.s4 839922192
        %v1441 = vunpack.c.0.s8 %v1440
        %v1442 = vlaneseq
        %v1443 = vshrl.u32 %v1442, 7
        %v1444 = vsub.s32 %v1441, %v1443
        %v1445 = vrot.slane %v1437, %v1444
        %1446 = vset.pattern.permute.xlu0 9
        %1447 = vperm.xlu0 %1446, %v259
        %v1448 = vpop.permute.xlu0 %1447
        %v1451 = vunpack.c.l.s4 839922192
        %v1452 = vunpack.c.0.s8 %v1451
        %v1453 = vlaneseq
        %v1454 = vshrl.u32 %v1453, 7
        %v1455 = vsub.s32 %v1452, %v1454
        %v1456 = vrot.slane %v1448, %v1455
        %1457 = vset.pattern.permute.xlu0 9
        %1458 = vperm.xlu0 %1457, %v260
        %v1459 = vpop.permute.xlu0 %1458
        %v1462 = vunpack.c.l.s4 839922192
        %v1463 = vunpack.c.0.s8 %v1462
        %v1464 = vlaneseq
        %v1465 = vshrl.u32 %v1464, 7
        %v1466 = vsub.s32 %v1463, %v1465
        %v1467 = vrot.slane %v1459, %v1466
        %1468 = vset.pattern.permute.xlu0 9
        %1469 = vperm.xlu0 %1468, %v261
        %v1470 = vpop.permute.xlu0 %1469
        %v1473 = vunpack.c.l.s4 839922192
        %v1474 = vunpack.c.0.s8 %v1473
        %v1475 = vlaneseq
        %v1476 = vshrl.u32 %v1475, 7
        %v1477 = vsub.s32 %v1474, %v1476
        %v1478 = vrot.slane %v1470, %v1477
        %1479 = vset.pattern.permute.xlu0 9
        %1480 = vperm.xlu0 %1479, %v262
        %v1481 = vpop.permute.xlu0 %1480
        %v1484 = vunpack.c.l.s4 839922192
        %v1485 = vunpack.c.0.s8 %v1484
        %v1486 = vlaneseq
        %v1487 = vshrl.u32 %v1486, 7
        %v1488 = vsub.s32 %v1485, %v1487
        %v1489 = vrot.slane %v1481, %v1488
        %v1490 = vmul.bf16 %v1412, %v247
        %v1491 = vmul.bf16 %v1423, %v248
        %v1492 = vmul.bf16 %v1434, %v249
        %v1493 = vmul.bf16 %v1445, %v250
        %v1494 = vmul.bf16 %v1456, %v251
        %v1495 = vmul.bf16 %v1467, %v252
        %v1496 = vmul.bf16 %v1478, %v253
        %v1497 = vmul.bf16 %v1489, %v254
        %1498 = vset.pattern.permute.xlu0 10
        %1499 = vperm.xlu0 %1498, %v255
        %v1500 = vpop.permute.xlu0 %1499
        %v1503 = vunpack.c.l.s4 839922192
        %v1504 = vunpack.c.0.s8 %v1503
        %v1505 = vlaneseq
        %v1506 = vshrl.u32 %v1505, 7
        %v1507 = vsub.s32 %v1504, %v1506
        %v1508 = vrot.slane %v1500, %v1507
        %1509 = vset.pattern.permute.xlu0 10
        %1510 = vperm.xlu0 %1509, %v256
        %v1511 = vpop.permute.xlu0 %1510
        %v1514 = vunpack.c.l.s4 839922192
        %v1515 = vunpack.c.0.s8 %v1514
        %v1516 = vlaneseq
        %v1517 = vshrl.u32 %v1516, 7
        %v1518 = vsub.s32 %v1515, %v1517
        %v1519 = vrot.slane %v1511, %v1518
        %1520 = vset.pattern.permute.xlu0 10
        %1521 = vperm.xlu0 %1520, %v257
        %v1522 = vpop.permute.xlu0 %1521
        %v1525 = vunpack.c.l.s4 839922192
        %v1526 = vunpack.c.0.s8 %v1525
        %v1527 = vlaneseq
        %v1528 = vshrl.u32 %v1527, 7
        %v1529 = vsub.s32 %v1526, %v1528
        %v1530 = vrot.slane %v1522, %v1529
        %1531 = vset.pattern.permute.xlu0 10
        %1532 = vperm.xlu0 %1531, %v258
        %v1533 = vpop.permute.xlu0 %1532
        %v1536 = vunpack.c.l.s4 839922192
        %v1537 = vunpack.c.0.s8 %v1536
        %v1538 = vlaneseq
        %v1539 = vshrl.u32 %v1538, 7
        %v1540 = vsub.s32 %v1537, %v1539
        %v1541 = vrot.slane %v1533, %v1540
        %1542 = vset.pattern.permute.xlu0 10
        %1543 = vperm.xlu0 %1542, %v259
        %v1544 = vpop.permute.xlu0 %1543
        %v1547 = vunpack.c.l.s4 839922192
        %v1548 = vunpack.c.0.s8 %v1547
        %v1549 = vlaneseq
        %v1550 = vshrl.u32 %v1549, 7
        %v1551 = vsub.s32 %v1548, %v1550
        %v1552 = vrot.slane %v1544, %v1551
        %1553 = vset.pattern.permute.xlu0 10
        %1554 = vperm.xlu0 %1553, %v260
        %v1555 = vpop.permute.xlu0 %1554
        %v1558 = vunpack.c.l.s4 839922192
        %v1559 = vunpack.c.0.s8 %v1558
        %v1560 = vlaneseq
        %v1561 = vshrl.u32 %v1560, 7
        %v1562 = vsub.s32 %v1559, %v1561
        %v1563 = vrot.slane %v1555, %v1562
        %1564 = vset.pattern.permute.xlu0 10
        %1565 = vperm.xlu0 %1564, %v261
        %v1566 = vpop.permute.xlu0 %1565
        %v1569 = vunpack.c.l.s4 839922192
        %v1570 = vunpack.c.0.s8 %v1569
        %v1571 = vlaneseq
        %v1572 = vshrl.u32 %v1571, 7
        %v1573 = vsub.s32 %v1570, %v1572
        %v1574 = vrot.slane %v1566, %v1573
        %1575 = vset.pattern.permute.xlu0 10
        %1576 = vperm.xlu0 %1575, %v262
        %v1577 = vpop.permute.xlu0 %1576
        %v1580 = vunpack.c.l.s4 839922192
        %v1581 = vunpack.c.0.s8 %v1580
        %v1582 = vlaneseq
        %v1583 = vshrl.u32 %v1582, 7
        %v1584 = vsub.s32 %v1581, %v1583
        %v1585 = vrot.slane %v1577, %v1584
        %v1586 = vmul.bf16 %v1508, %v247
        %v1587 = vmul.bf16 %v1519, %v248
        %v1588 = vmul.bf16 %v1530, %v249
        %v1589 = vmul.bf16 %v1541, %v250
        %v1590 = vmul.bf16 %v1552, %v251
        %v1591 = vmul.bf16 %v1563, %v252
        %v1592 = vmul.bf16 %v1574, %v253
        %v1593 = vmul.bf16 %v1585, %v254
        %1594 = vset.pattern.permute.xlu0 11
        %1595 = vperm.xlu0 %1594, %v255
        %v1596 = vpop.permute.xlu0 %1595
        %v1599 = vunpack.c.l.s4 839922192
        %v1600 = vunpack.c.0.s8 %v1599
        %v1601 = vlaneseq
        %v1602 = vshrl.u32 %v1601, 7
        %v1603 = vsub.s32 %v1600, %v1602
        %v1604 = vrot.slane %v1596, %v1603
        %1605 = vset.pattern.permute.xlu0 11
        %1606 = vperm.xlu0 %1605, %v256
        %v1607 = vpop.permute.xlu0 %1606
        %v1610 = vunpack.c.l.s4 839922192
        %v1611 = vunpack.c.0.s8 %v1610
        %v1612 = vlaneseq
        %v1613 = vshrl.u32 %v1612, 7
        %v1614 = vsub.s32 %v1611, %v1613
        %v1615 = vrot.slane %v1607, %v1614
        %1616 = vset.pattern.permute.xlu0 11
        %1617 = vperm.xlu0 %1616, %v257
        %v1618 = vpop.permute.xlu0 %1617
        %v1621 = vunpack.c.l.s4 839922192
        %v1622 = vunpack.c.0.s8 %v1621
        %v1623 = vlaneseq
        %v1624 = vshrl.u32 %v1623, 7
        %v1625 = vsub.s32 %v1622, %v1624
        %v1626 = vrot.slane %v1618, %v1625
        %1627 = vset.pattern.permute.xlu0 11
        %1628 = vperm.xlu0 %1627, %v258
        %v1629 = vpop.permute.xlu0 %1628
        %v1632 = vunpack.c.l.s4 839922192
        %v1633 = vunpack.c.0.s8 %v1632
        %v1634 = vlaneseq
        %v1635 = vshrl.u32 %v1634, 7
        %v1636 = vsub.s32 %v1633, %v1635
        %v1637 = vrot.slane %v1629, %v1636
        %1638 = vset.pattern.permute.xlu0 11
        %1639 = vperm.xlu0 %1638, %v259
        %v1640 = vpop.permute.xlu0 %1639
        %v1643 = vunpack.c.l.s4 839922192
        %v1644 = vunpack.c.0.s8 %v1643
        %v1645 = vlaneseq
        %v1646 = vshrl.u32 %v1645, 7
        %v1647 = vsub.s32 %v1644, %v1646
        %v1648 = vrot.slane %v1640, %v1647
        %1649 = vset.pattern.permute.xlu0 11
        %1650 = vperm.xlu0 %1649, %v260
        %v1651 = vpop.permute.xlu0 %1650
        %v1654 = vunpack.c.l.s4 839922192
        %v1655 = vunpack.c.0.s8 %v1654
        %v1656 = vlaneseq
        %v1657 = vshrl.u32 %v1656, 7
        %v1658 = vsub.s32 %v1655, %v1657
        %v1659 = vrot.slane %v1651, %v1658
        %1660 = vset.pattern.permute.xlu0 11
        %1661 = vperm.xlu0 %1660, %v261
        %v1662 = vpop.permute.xlu0 %1661
        %v1665 = vunpack.c.l.s4 839922192
        %v1666 = vunpack.c.0.s8 %v1665
        %v1667 = vlaneseq
        %v1668 = vshrl.u32 %v1667, 7
        %v1669 = vsub.s32 %v1666, %v1668
        %v1670 = vrot.slane %v1662, %v1669
        %1671 = vset.pattern.permute.xlu0 11
        %1672 = vperm.xlu0 %1671, %v262
        %v1673 = vpop.permute.xlu0 %1672
        %v1676 = vunpack.c.l.s4 839922192
        %v1677 = vunpack.c.0.s8 %v1676
        %v1678 = vlaneseq
        %v1679 = vshrl.u32 %v1678, 7
        %v1680 = vsub.s32 %v1677, %v1679
        %v1681 = vrot.slane %v1673, %v1680
        %v1682 = vmul.bf16 %v1604, %v247
        %v1683 = vmul.bf16 %v1615, %v248
        %v1684 = vmul.bf16 %v1626, %v249
        %v1685 = vmul.bf16 %v1637, %v250
        %v1686 = vmul.bf16 %v1648, %v251
        %v1687 = vmul.bf16 %v1659, %v252
        %v1688 = vmul.bf16 %v1670, %v253
        %v1689 = vmul.bf16 %v1681, %v254
        %1690 = vset.pattern.permute.xlu0 12
        %1691 = vperm.xlu0 %1690, %v255
        %v1692 = vpop.permute.xlu0 %1691
        %v1695 = vunpack.c.l.s4 839922192
        %v1696 = vunpack.c.0.s8 %v1695
        %v1697 = vlaneseq
        %v1698 = vshrl.u32 %v1697, 7
        %v1699 = vsub.s32 %v1696, %v1698
        %v1700 = vrot.slane %v1692, %v1699
        %1701 = vset.pattern.permute.xlu0 12
        %1702 = vperm.xlu0 %1701, %v256
        %v1703 = vpop.permute.xlu0 %1702
        %v1706 = vunpack.c.l.s4 839922192
        %v1707 = vunpack.c.0.s8 %v1706
        %v1708 = vlaneseq
        %v1709 = vshrl.u32 %v1708, 7
        %v1710 = vsub.s32 %v1707, %v1709
        %v1711 = vrot.slane %v1703, %v1710
        %1712 = vset.pattern.permute.xlu0 12
        %1713 = vperm.xlu0 %1712, %v257
        %v1714 = vpop.permute.xlu0 %1713
        %v1717 = vunpack.c.l.s4 839922192
        %v1718 = vunpack.c.0.s8 %v1717
        %v1719 = vlaneseq
        %v1720 = vshrl.u32 %v1719, 7
        %v1721 = vsub.s32 %v1718, %v1720
        %v1722 = vrot.slane %v1714, %v1721
        %1723 = vset.pattern.permute.xlu0 12
        %1724 = vperm.xlu0 %1723, %v258
        %v1725 = vpop.permute.xlu0 %1724
        %v1728 = vunpack.c.l.s4 839922192
        %v1729 = vunpack.c.0.s8 %v1728
        %v1730 = vlaneseq
        %v1731 = vshrl.u32 %v1730, 7
        %v1732 = vsub.s32 %v1729, %v1731
        %v1733 = vrot.slane %v1725, %v1732
        %1734 = vset.pattern.permute.xlu0 12
        %1735 = vperm.xlu0 %1734, %v259
        %v1736 = vpop.permute.xlu0 %1735
        %v1739 = vunpack.c.l.s4 839922192
        %v1740 = vunpack.c.0.s8 %v1739
        %v1741 = vlaneseq
        %v1742 = vshrl.u32 %v1741, 7
        %v1743 = vsub.s32 %v1740, %v1742
        %v1744 = vrot.slane %v1736, %v1743
        %1745 = vset.pattern.permute.xlu0 12
        %1746 = vperm.xlu0 %1745, %v260
        %v1747 = vpop.permute.xlu0 %1746
        %v1750 = vunpack.c.l.s4 839922192
        %v1751 = vunpack.c.0.s8 %v1750
        %v1752 = vlaneseq
        %v1753 = vshrl.u32 %v1752, 7
        %v1754 = vsub.s32 %v1751, %v1753
        %v1755 = vrot.slane %v1747, %v1754
        %1756 = vset.pattern.permute.xlu0 12
        %1757 = vperm.xlu0 %1756, %v261
        %v1758 = vpop.permute.xlu0 %1757
        %v1761 = vunpack.c.l.s4 839922192
        %v1762 = vunpack.c.0.s8 %v1761
        %v1763 = vlaneseq
        %v1764 = vshrl.u32 %v1763, 7
        %v1765 = vsub.s32 %v1762, %v1764
        %v1766 = vrot.slane %v1758, %v1765
        %1767 = vset.pattern.permute.xlu0 12
        %1768 = vperm.xlu0 %1767, %v262
        %v1769 = vpop.permute.xlu0 %1768
        %v1772 = vunpack.c.l.s4 839922192
        %v1773 = vunpack.c.0.s8 %v1772
        %v1774 = vlaneseq
        %v1775 = vshrl.u32 %v1774, 7
        %v1776 = vsub.s32 %v1773, %v1775
        %v1777 = vrot.slane %v1769, %v1776
        %v1778 = vmul.bf16 %v1700, %v247
        %v1779 = vmul.bf16 %v1711, %v248
        %v1780 = vmul.bf16 %v1722, %v249
        %v1781 = vmul.bf16 %v1733, %v250
        %v1782 = vmul.bf16 %v1744, %v251
        %v1783 = vmul.bf16 %v1755, %v252
        %v1784 = vmul.bf16 %v1766, %v253
        %v1785 = vmul.bf16 %v1777, %v254
        %1786 = vset.pattern.permute.xlu0 13
        %1787 = vperm.xlu0 %1786, %v255
        %v1788 = vpop.permute.xlu0 %1787
        %v1791 = vunpack.c.l.s4 839922192
        %v1792 = vunpack.c.0.s8 %v1791
        %v1793 = vlaneseq
        %v1794 = vshrl.u32 %v1793, 7
        %v1795 = vsub.s32 %v1792, %v1794
        %v1796 = vrot.slane %v1788, %v1795
        %1797 = vset.pattern.permute.xlu0 13
        %1798 = vperm.xlu0 %1797, %v256
        %v1799 = vpop.permute.xlu0 %1798
        %v1802 = vunpack.c.l.s4 839922192
        %v1803 = vunpack.c.0.s8 %v1802
        %v1804 = vlaneseq
        %v1805 = vshrl.u32 %v1804, 7
        %v1806 = vsub.s32 %v1803, %v1805
        %v1807 = vrot.slane %v1799, %v1806
        %1808 = vset.pattern.permute.xlu0 13
        %1809 = vperm.xlu0 %1808, %v257
        %v1810 = vpop.permute.xlu0 %1809
        %v1813 = vunpack.c.l.s4 839922192
        %v1814 = vunpack.c.0.s8 %v1813
        %v1815 = vlaneseq
        %v1816 = vshrl.u32 %v1815, 7
        %v1817 = vsub.s32 %v1814, %v1816
        %v1818 = vrot.slane %v1810, %v1817
        %1819 = vset.pattern.permute.xlu0 13
        %1820 = vperm.xlu0 %1819, %v258
        %v1821 = vpop.permute.xlu0 %1820
        %v1824 = vunpack.c.l.s4 839922192
        %v1825 = vunpack.c.0.s8 %v1824
        %v1826 = vlaneseq
        %v1827 = vshrl.u32 %v1826, 7
        %v1828 = vsub.s32 %v1825, %v1827
        %v1829 = vrot.slane %v1821, %v1828
        %1830 = vset.pattern.permute.xlu0 13
        %1831 = vperm.xlu0 %1830, %v259
        %v1832 = vpop.permute.xlu0 %1831
        %v1835 = vunpack.c.l.s4 839922192
        %v1836 = vunpack.c.0.s8 %v1835
        %v1837 = vlaneseq
        %v1838 = vshrl.u32 %v1837, 7
        %v1839 = vsub.s32 %v1836, %v1838
        %v1840 = vrot.slane %v1832, %v1839
        %1841 = vset.pattern.permute.xlu0 13
        %1842 = vperm.xlu0 %1841, %v260
        %v1843 = vpop.permute.xlu0 %1842
        %v1846 = vunpack.c.l.s4 839922192
        %v1847 = vunpack.c.0.s8 %v1846
        %v1848 = vlaneseq
        %v1849 = vshrl.u32 %v1848, 7
        %v1850 = vsub.s32 %v1847, %v1849
        %v1851 = vrot.slane %v1843, %v1850
        %1852 = vset.pattern.permute.xlu0 13
        %1853 = vperm.xlu0 %1852, %v261
        %v1854 = vpop.permute.xlu0 %1853
        %v1857 = vunpack.c.l.s4 839922192
        %v1858 = vunpack.c.0.s8 %v1857
        %v1859 = vlaneseq
        %v1860 = vshrl.u32 %v1859, 7
        %v1861 = vsub.s32 %v1858, %v1860
        %v1862 = vrot.slane %v1854, %v1861
        %1863 = vset.pattern.permute.xlu0 13
        %1864 = vperm.xlu0 %1863, %v262
        %v1865 = vpop.permute.xlu0 %1864
        %v1868 = vunpack.c.l.s4 839922192
        %v1869 = vunpack.c.0.s8 %v1868
        %v1870 = vlaneseq
        %v1871 = vshrl.u32 %v1870, 7
        %v1872 = vsub.s32 %v1869, %v1871
        %v1873 = vrot.slane %v1865, %v1872
        %v1874 = vmul.bf16 %v1796, %v247
        %v1875 = vmul.bf16 %v1807, %v248
        %v1876 = vmul.bf16 %v1818, %v249
        %v1877 = vmul.bf16 %v1829, %v250
        %v1878 = vmul.bf16 %v1840, %v251
        %v1879 = vmul.bf16 %v1851, %v252
        %v1880 = vmul.bf16 %v1862, %v253
        %v1881 = vmul.bf16 %v1873, %v254
        %1882 = vset.pattern.permute.xlu0 14
        %1883 = vperm.xlu0 %1882, %v255
        %v1884 = vpop.permute.xlu0 %1883
        %v1887 = vunpack.c.l.s4 839922192
        %v1888 = vunpack.c.0.s8 %v1887
        %v1889 = vlaneseq
        %v1890 = vshrl.u32 %v1889, 7
        %v1891 = vsub.s32 %v1888, %v1890
        %v1892 = vrot.slane %v1884, %v1891
        %1893 = vset.pattern.permute.xlu0 14
        %1894 = vperm.xlu0 %1893, %v256
        %v1895 = vpop.permute.xlu0 %1894
        %v1898 = vunpack.c.l.s4 839922192
        %v1899 = vunpack.c.0.s8 %v1898
        %v1900 = vlaneseq
        %v1901 = vshrl.u32 %v1900, 7
        %v1902 = vsub.s32 %v1899, %v1901
        %v1903 = vrot.slane %v1895, %v1902
        %1904 = vset.pattern.permute.xlu0 14
        %1905 = vperm.xlu0 %1904, %v257
        %v1906 = vpop.permute.xlu0 %1905
        %v1909 = vunpack.c.l.s4 839922192
        %v1910 = vunpack.c.0.s8 %v1909
        %v1911 = vlaneseq
        %v1912 = vshrl.u32 %v1911, 7
        %v1913 = vsub.s32 %v1910, %v1912
        %v1914 = vrot.slane %v1906, %v1913
        %1915 = vset.pattern.permute.xlu0 14
        %1916 = vperm.xlu0 %1915, %v258
        %v1917 = vpop.permute.xlu0 %1916
        %v1920 = vunpack.c.l.s4 839922192
        %v1921 = vunpack.c.0.s8 %v1920
        %v1922 = vlaneseq
        %v1923 = vshrl.u32 %v1922, 7
        %v1924 = vsub.s32 %v1921, %v1923
        %v1925 = vrot.slane %v1917, %v1924
        %1926 = vset.pattern.permute.xlu0 14
        %1927 = vperm.xlu0 %1926, %v259
        %v1928 = vpop.permute.xlu0 %1927
        %v1931 = vunpack.c.l.s4 839922192
        %v1932 = vunpack.c.0.s8 %v1931
        %v1933 = vlaneseq
        %v1934 = vshrl.u32 %v1933, 7
        %v1935 = vsub.s32 %v1932, %v1934
        %v1936 = vrot.slane %v1928, %v1935
        %1937 = vset.pattern.permute.xlu0 14
        %1938 = vperm.xlu0 %1937, %v260
        %v1939 = vpop.permute.xlu0 %1938
        %v1942 = vunpack.c.l.s4 839922192
        %v1943 = vunpack.c.0.s8 %v1942
        %v1944 = vlaneseq
        %v1945 = vshrl.u32 %v1944, 7
        %v1946 = vsub.s32 %v1943, %v1945
        %v1947 = vrot.slane %v1939, %v1946
        %1948 = vset.pattern.permute.xlu0 14
        %1949 = vperm.xlu0 %1948, %v261
        %v1950 = vpop.permute.xlu0 %1949
        %v1953 = vunpack.c.l.s4 839922192
        %v1954 = vunpack.c.0.s8 %v1953
        %v1955 = vlaneseq
        %v1956 = vshrl.u32 %v1955, 7
        %v1957 = vsub.s32 %v1954, %v1956
        %v1958 = vrot.slane %v1950, %v1957
        %1959 = vset.pattern.permute.xlu0 14
        %1960 = vperm.xlu0 %1959, %v262
        %v1961 = vpop.permute.xlu0 %1960
        %v1964 = vunpack.c.l.s4 839922192
        %v1965 = vunpack.c.0.s8 %v1964
        %v1966 = vlaneseq
        %v1967 = vshrl.u32 %v1966, 7
        %v1968 = vsub.s32 %v1965, %v1967
        %v1969 = vrot.slane %v1961, %v1968
        %v1970 = vmul.bf16 %v1892, %v247
        %v1971 = vmul.bf16 %v1903, %v248
        %v1972 = vmul.bf16 %v1914, %v249
        %v1973 = vmul.bf16 %v1925, %v250
        %v1974 = vmul.bf16 %v1936, %v251
        %v1975 = vmul.bf16 %v1947, %v252
        %v1976 = vmul.bf16 %v1958, %v253
        %v1977 = vmul.bf16 %v1969, %v254
        %1978 = vset.pattern.permute.xlu0 15
        %1979 = vperm.xlu0 %1978, %v255
        %v1980 = vpop.permute.xlu0 %1979
        %v1983 = vunpack.c.l.s4 839922192
        %v1984 = vunpack.c.0.s8 %v1983
        %v1985 = vlaneseq
        %v1986 = vshrl.u32 %v1985, 7
        %v1987 = vsub.s32 %v1984, %v1986
        %v1988 = vrot.slane %v1980, %v1987
        %1989 = vset.pattern.permute.xlu0 15
        %1990 = vperm.xlu0 %1989, %v256
        %v1991 = vpop.permute.xlu0 %1990
        %v1994 = vunpack.c.l.s4 839922192
        %v1995 = vunpack.c.0.s8 %v1994
        %v1996 = vlaneseq
        %v1997 = vshrl.u32 %v1996, 7
        %v1998 = vsub.s32 %v1995, %v1997
        %v1999 = vrot.slane %v1991, %v1998
        %2000 = vset.pattern.permute.xlu0 15
        %2001 = vperm.xlu0 %2000, %v257
        %v2002 = vpop.permute.xlu0 %2001
        %v2005 = vunpack.c.l.s4 839922192
        %v2006 = vunpack.c.0.s8 %v2005
        %v2007 = vlaneseq
        %v2008 = vshrl.u32 %v2007, 7
        %v2009 = vsub.s32 %v2006, %v2008
        %v2010 = vrot.slane %v2002, %v2009
        %2011 = vset.pattern.permute.xlu0 15
        %2012 = vperm.xlu0 %2011, %v258
        %v2013 = vpop.permute.xlu0 %2012
        %v2016 = vunpack.c.l.s4 839922192
        %v2017 = vunpack.c.0.s8 %v2016
        %v2018 = vlaneseq
        %v2019 = vshrl.u32 %v2018, 7
        %v2020 = vsub.s32 %v2017, %v2019
        %v2021 = vrot.slane %v2013, %v2020
        %2022 = vset.pattern.permute.xlu0 15
        %2023 = vperm.xlu0 %2022, %v259
        %v2024 = vpop.permute.xlu0 %2023
        %v2027 = vunpack.c.l.s4 839922192
        %v2028 = vunpack.c.0.s8 %v2027
        %v2029 = vlaneseq
        %v2030 = vshrl.u32 %v2029, 7
        %v2031 = vsub.s32 %v2028, %v2030
        %v2032 = vrot.slane %v2024, %v2031
        %2033 = vset.pattern.permute.xlu0 15
        %2034 = vperm.xlu0 %2033, %v260
        %v2035 = vpop.permute.xlu0 %2034
        %v2038 = vunpack.c.l.s4 839922192
        %v2039 = vunpack.c.0.s8 %v2038
        %v2040 = vlaneseq
        %v2041 = vshrl.u32 %v2040, 7
        %v2042 = vsub.s32 %v2039, %v2041
        %v2043 = vrot.slane %v2035, %v2042
        %2044 = vset.pattern.permute.xlu0 15
        %2045 = vperm.xlu0 %2044, %v261
        %v2046 = vpop.permute.xlu0 %2045
        %v2049 = vunpack.c.l.s4 839922192
        %v2050 = vunpack.c.0.s8 %v2049
        %v2051 = vlaneseq
        %v2052 = vshrl.u32 %v2051, 7
        %v2053 = vsub.s32 %v2050, %v2052
        %v2054 = vrot.slane %v2046, %v2053
        %2055 = vset.pattern.permute.xlu0 15
        %2056 = vperm.xlu0 %2055, %v262
        %v2057 = vpop.permute.xlu0 %2056
        %v2060 = vunpack.c.l.s4 839922192
        %v2061 = vunpack.c.0.s8 %v2060
        %v2062 = vlaneseq
        %v2063 = vshrl.u32 %v2062, 7
        %v2064 = vsub.s32 %v2061, %v2063
        %v2065 = vrot.slane %v2057, %v2064
        %v2066 = vmul.bf16 %v1988, %v247
        %v2067 = vmul.bf16 %v1999, %v248
        %v2068 = vmul.bf16 %v2010, %v249
        %v2069 = vmul.bf16 %v2021, %v250
        %v2070 = vmul.bf16 %v2032, %v251
        %v2071 = vmul.bf16 %v2043, %v252
        %v2072 = vmul.bf16 %v2054, %v253
        %v2073 = vmul.bf16 %v2065, %v254
        %2074 = vset.pattern.permute.xlu0 16
        %2075 = vperm.xlu0 %2074, %v255
        %v2076 = vpop.permute.xlu0 %2075
        %v2079 = vunpack.c.l.s4 839922192
        %v2080 = vunpack.c.0.s8 %v2079
        %v2081 = vlaneseq
        %v2082 = vshrl.u32 %v2081, 7
        %v2083 = vsub.s32 %v2080, %v2082
        %v2084 = vrot.slane %v2076, %v2083
        %2085 = vset.pattern.permute.xlu0 16
        %2086 = vperm.xlu0 %2085, %v256
        %v2087 = vpop.permute.xlu0 %2086
        %v2090 = vunpack.c.l.s4 839922192
        %v2091 = vunpack.c.0.s8 %v2090
        %v2092 = vlaneseq
        %v2093 = vshrl.u32 %v2092, 7
        %v2094 = vsub.s32 %v2091, %v2093
        %v2095 = vrot.slane %v2087, %v2094
        %2096 = vset.pattern.permute.xlu0 16
        %2097 = vperm.xlu0 %2096, %v257
        %v2098 = vpop.permute.xlu0 %2097
        %v2101 = vunpack.c.l.s4 839922192
        %v2102 = vunpack.c.0.s8 %v2101
        %v2103 = vlaneseq
        %v2104 = vshrl.u32 %v2103, 7
        %v2105 = vsub.s32 %v2102, %v2104
        %v2106 = vrot.slane %v2098, %v2105
        %2107 = vset.pattern.permute.xlu0 16
        %2108 = vperm.xlu0 %2107, %v258
        %v2109 = vpop.permute.xlu0 %2108
        %v2112 = vunpack.c.l.s4 839922192
        %v2113 = vunpack.c.0.s8 %v2112
        %v2114 = vlaneseq
        %v2115 = vshrl.u32 %v2114, 7
        %v2116 = vsub.s32 %v2113, %v2115
        %v2117 = vrot.slane %v2109, %v2116
        %2118 = vset.pattern.permute.xlu0 16
        %2119 = vperm.xlu0 %2118, %v259
        %v2120 = vpop.permute.xlu0 %2119
        %v2123 = vunpack.c.l.s4 839922192
        %v2124 = vunpack.c.0.s8 %v2123
        %v2125 = vlaneseq
        %v2126 = vshrl.u32 %v2125, 7
        %v2127 = vsub.s32 %v2124, %v2126
        %v2128 = vrot.slane %v2120, %v2127
        %2129 = vset.pattern.permute.xlu0 16
        %2130 = vperm.xlu0 %2129, %v260
        %v2131 = vpop.permute.xlu0 %2130
        %v2134 = vunpack.c.l.s4 839922192
        %v2135 = vunpack.c.0.s8 %v2134
        %v2136 = vlaneseq
        %v2137 = vshrl.u32 %v2136, 7
        %v2138 = vsub.s32 %v2135, %v2137
        %v2139 = vrot.slane %v2131, %v2138
        %2140 = vset.pattern.permute.xlu0 16
        %2141 = vperm.xlu0 %2140, %v261
        %v2142 = vpop.permute.xlu0 %2141
        %v2145 = vunpack.c.l.s4 839922192
        %v2146 = vunpack.c.0.s8 %v2145
        %v2147 = vlaneseq
        %v2148 = vshrl.u32 %v2147, 7
        %v2149 = vsub.s32 %v2146, %v2148
        %v2150 = vrot.slane %v2142, %v2149
        %2151 = vset.pattern.permute.xlu0 16
        %2152 = vperm.xlu0 %2151, %v262
        %v2153 = vpop.permute.xlu0 %2152
        %v2156 = vunpack.c.l.s4 839922192
        %v2157 = vunpack.c.0.s8 %v2156
        %v2158 = vlaneseq
        %v2159 = vshrl.u32 %v2158, 7
        %v2160 = vsub.s32 %v2157, %v2159
        %v2161 = vrot.slane %v2153, %v2160
        %v2162 = vmul.bf16 %v2084, %v247
        %v2163 = vmul.bf16 %v2095, %v248
        %v2164 = vmul.bf16 %v2106, %v249
        %v2165 = vmul.bf16 %v2117, %v250
        %v2166 = vmul.bf16 %v2128, %v251
        %v2167 = vmul.bf16 %v2139, %v252
        %v2168 = vmul.bf16 %v2150, %v253
        %v2169 = vmul.bf16 %v2161, %v254
        %2170 = vset.pattern.permute.xlu0 17
        %2171 = vperm.xlu0 %2170, %v255
        %v2172 = vpop.permute.xlu0 %2171
        %v2175 = vunpack.c.l.s4 839922192
        %v2176 = vunpack.c.0.s8 %v2175
        %v2177 = vlaneseq
        %v2178 = vshrl.u32 %v2177, 7
        %v2179 = vsub.s32 %v2176, %v2178
        %v2180 = vrot.slane %v2172, %v2179
        %2181 = vset.pattern.permute.xlu0 17
        %2182 = vperm.xlu0 %2181, %v256
        %v2183 = vpop.permute.xlu0 %2182
        %v2186 = vunpack.c.l.s4 839922192
        %v2187 = vunpack.c.0.s8 %v2186
        %v2188 = vlaneseq
        %v2189 = vshrl.u32 %v2188, 7
        %v2190 = vsub.s32 %v2187, %v2189
        %v2191 = vrot.slane %v2183, %v2190
        %2192 = vset.pattern.permute.xlu0 17
        %2193 = vperm.xlu0 %2192, %v257
        %v2194 = vpop.permute.xlu0 %2193
        %v2197 = vunpack.c.l.s4 839922192
        %v2198 = vunpack.c.0.s8 %v2197
        %v2199 = vlaneseq
        %v2200 = vshrl.u32 %v2199, 7
        %v2201 = vsub.s32 %v2198, %v2200
        %v2202 = vrot.slane %v2194, %v2201
        %2203 = vset.pattern.permute.xlu0 17
        %2204 = vperm.xlu0 %2203, %v258
        %v2205 = vpop.permute.xlu0 %2204
        %v2208 = vunpack.c.l.s4 839922192
        %v2209 = vunpack.c.0.s8 %v2208
        %v2210 = vlaneseq
        %v2211 = vshrl.u32 %v2210, 7
        %v2212 = vsub.s32 %v2209, %v2211
        %v2213 = vrot.slane %v2205, %v2212
        %2214 = vset.pattern.permute.xlu0 17
        %2215 = vperm.xlu0 %2214, %v259
        %v2216 = vpop.permute.xlu0 %2215
        %v2219 = vunpack.c.l.s4 839922192
        %v2220 = vunpack.c.0.s8 %v2219
        %v2221 = vlaneseq
        %v2222 = vshrl.u32 %v2221, 7
        %v2223 = vsub.s32 %v2220, %v2222
        %v2224 = vrot.slane %v2216, %v2223
        %2225 = vset.pattern.permute.xlu0 17
        %2226 = vperm.xlu0 %2225, %v260
        %v2227 = vpop.permute.xlu0 %2226
        %v2230 = vunpack.c.l.s4 839922192
        %v2231 = vunpack.c.0.s8 %v2230
        %v2232 = vlaneseq
        %v2233 = vshrl.u32 %v2232, 7
        %v2234 = vsub.s32 %v2231, %v2233
        %v2235 = vrot.slane %v2227, %v2234
        %2236 = vset.pattern.permute.xlu0 17
        %2237 = vperm.xlu0 %2236, %v261
        %v2238 = vpop.permute.xlu0 %2237
        %v2241 = vunpack.c.l.s4 839922192
        %v2242 = vunpack.c.0.s8 %v2241
        %v2243 = vlaneseq
        %v2244 = vshrl.u32 %v2243, 7
        %v2245 = vsub.s32 %v2242, %v2244
        %v2246 = vrot.slane %v2238, %v2245
        %2247 = vset.pattern.permute.xlu0 17
        %2248 = vperm.xlu0 %2247, %v262
        %v2249 = vpop.permute.xlu0 %2248
        %v2252 = vunpack.c.l.s4 839922192
        %v2253 = vunpack.c.0.s8 %v2252
        %v2254 = vlaneseq
        %v2255 = vshrl.u32 %v2254, 7
        %v2256 = vsub.s32 %v2253, %v2255
        %v2257 = vrot.slane %v2249, %v2256
        %v2258 = vmul.bf16 %v2180, %v247
        %v2259 = vmul.bf16 %v2191, %v248
        %v2260 = vmul.bf16 %v2202, %v249
        %v2261 = vmul.bf16 %v2213, %v250
        %v2262 = vmul.bf16 %v2224, %v251
        %v2263 = vmul.bf16 %v2235, %v252
        %v2264 = vmul.bf16 %v2246, %v253
        %v2265 = vmul.bf16 %v2257, %v254
        %2266 = vset.pattern.permute.xlu0 18
        %2267 = vperm.xlu0 %2266, %v255
        %v2268 = vpop.permute.xlu0 %2267
        %v2271 = vunpack.c.l.s4 839922192
        %v2272 = vunpack.c.0.s8 %v2271
        %v2273 = vlaneseq
        %v2274 = vshrl.u32 %v2273, 7
        %v2275 = vsub.s32 %v2272, %v2274
        %v2276 = vrot.slane %v2268, %v2275
        %2277 = vset.pattern.permute.xlu0 18
        %2278 = vperm.xlu0 %2277, %v256
        %v2279 = vpop.permute.xlu0 %2278
        %v2282 = vunpack.c.l.s4 839922192
        %v2283 = vunpack.c.0.s8 %v2282
        %v2284 = vlaneseq
        %v2285 = vshrl.u32 %v2284, 7
        %v2286 = vsub.s32 %v2283, %v2285
        %v2287 = vrot.slane %v2279, %v2286
        %2288 = vset.pattern.permute.xlu0 18
        %2289 = vperm.xlu0 %2288, %v257
        %v2290 = vpop.permute.xlu0 %2289
        %v2293 = vunpack.c.l.s4 839922192
        %v2294 = vunpack.c.0.s8 %v2293
        %v2295 = vlaneseq
        %v2296 = vshrl.u32 %v2295, 7
        %v2297 = vsub.s32 %v2294, %v2296
        %v2298 = vrot.slane %v2290, %v2297
        %2299 = vset.pattern.permute.xlu0 18
        %2300 = vperm.xlu0 %2299, %v258
        %v2301 = vpop.permute.xlu0 %2300
        %v2304 = vunpack.c.l.s4 839922192
        %v2305 = vunpack.c.0.s8 %v2304
        %v2306 = vlaneseq
        %v2307 = vshrl.u32 %v2306, 7
        %v2308 = vsub.s32 %v2305, %v2307
        %v2309 = vrot.slane %v2301, %v2308
        %2310 = vset.pattern.permute.xlu0 18
        %2311 = vperm.xlu0 %2310, %v259
        %v2312 = vpop.permute.xlu0 %2311
        %v2315 = vunpack.c.l.s4 839922192
        %v2316 = vunpack.c.0.s8 %v2315
        %v2317 = vlaneseq
        %v2318 = vshrl.u32 %v2317, 7
        %v2319 = vsub.s32 %v2316, %v2318
        %v2320 = vrot.slane %v2312, %v2319
        %2321 = vset.pattern.permute.xlu0 18
        %2322 = vperm.xlu0 %2321, %v260
        %v2323 = vpop.permute.xlu0 %2322
        %v2326 = vunpack.c.l.s4 839922192
        %v2327 = vunpack.c.0.s8 %v2326
        %v2328 = vlaneseq
        %v2329 = vshrl.u32 %v2328, 7
        %v2330 = vsub.s32 %v2327, %v2329
        %v2331 = vrot.slane %v2323, %v2330
        %2332 = vset.pattern.permute.xlu0 18
        %2333 = vperm.xlu0 %2332, %v261
        %v2334 = vpop.permute.xlu0 %2333
        %v2337 = vunpack.c.l.s4 839922192
        %v2338 = vunpack.c.0.s8 %v2337
        %v2339 = vlaneseq
        %v2340 = vshrl.u32 %v2339, 7
        %v2341 = vsub.s32 %v2338, %v2340
        %v2342 = vrot.slane %v2334, %v2341
        %2343 = vset.pattern.permute.xlu0 18
        %2344 = vperm.xlu0 %2343, %v262
        %v2345 = vpop.permute.xlu0 %2344
        %v2348 = vunpack.c.l.s4 839922192
        %v2349 = vunpack.c.0.s8 %v2348
        %v2350 = vlaneseq
        %v2351 = vshrl.u32 %v2350, 7
        %v2352 = vsub.s32 %v2349, %v2351
        %v2353 = vrot.slane %v2345, %v2352
        %v2354 = vmul.bf16 %v2276, %v247
        %v2355 = vmul.bf16 %v2287, %v248
        %v2356 = vmul.bf16 %v2298, %v249
        %v2357 = vmul.bf16 %v2309, %v250
        %v2358 = vmul.bf16 %v2320, %v251
        %v2359 = vmul.bf16 %v2331, %v252
        %v2360 = vmul.bf16 %v2342, %v253
        %v2361 = vmul.bf16 %v2353, %v254
        %2362 = vset.pattern.permute.xlu0 19
        %2363 = vperm.xlu0 %2362, %v255
        %v2364 = vpop.permute.xlu0 %2363
        %v2367 = vunpack.c.l.s4 839922192
        %v2368 = vunpack.c.0.s8 %v2367
        %v2369 = vlaneseq
        %v2370 = vshrl.u32 %v2369, 7
        %v2371 = vsub.s32 %v2368, %v2370
        %v2372 = vrot.slane %v2364, %v2371
        %2373 = vset.pattern.permute.xlu0 19
        %2374 = vperm.xlu0 %2373, %v256
        %v2375 = vpop.permute.xlu0 %2374
        %v2378 = vunpack.c.l.s4 839922192
        %v2379 = vunpack.c.0.s8 %v2378
        %v2380 = vlaneseq
        %v2381 = vshrl.u32 %v2380, 7
        %v2382 = vsub.s32 %v2379, %v2381
        %v2383 = vrot.slane %v2375, %v2382
        %2384 = vset.pattern.permute.xlu0 19
        %2385 = vperm.xlu0 %2384, %v257
        %v2386 = vpop.permute.xlu0 %2385
        %v2389 = vunpack.c.l.s4 839922192
        %v2390 = vunpack.c.0.s8 %v2389
        %v2391 = vlaneseq
        %v2392 = vshrl.u32 %v2391, 7
        %v2393 = vsub.s32 %v2390, %v2392
        %v2394 = vrot.slane %v2386, %v2393
        %2395 = vset.pattern.permute.xlu0 19
        %2396 = vperm.xlu0 %2395, %v258
        %v2397 = vpop.permute.xlu0 %2396
        %v2400 = vunpack.c.l.s4 839922192
        %v2401 = vunpack.c.0.s8 %v2400
        %v2402 = vlaneseq
        %v2403 = vshrl.u32 %v2402, 7
        %v2404 = vsub.s32 %v2401, %v2403
        %v2405 = vrot.slane %v2397, %v2404
        %2406 = vset.pattern.permute.xlu0 19
        %2407 = vperm.xlu0 %2406, %v259
        %v2408 = vpop.permute.xlu0 %2407
        %v2411 = vunpack.c.l.s4 839922192
        %v2412 = vunpack.c.0.s8 %v2411
        %v2413 = vlaneseq
        %v2414 = vshrl.u32 %v2413, 7
        %v2415 = vsub.s32 %v2412, %v2414
        %v2416 = vrot.slane %v2408, %v2415
        %2417 = vset.pattern.permute.xlu0 19
        %2418 = vperm.xlu0 %2417, %v260
        %v2419 = vpop.permute.xlu0 %2418
        %v2422 = vunpack.c.l.s4 839922192
        %v2423 = vunpack.c.0.s8 %v2422
        %v2424 = vlaneseq
        %v2425 = vshrl.u32 %v2424, 7
        %v2426 = vsub.s32 %v2423, %v2425
        %v2427 = vrot.slane %v2419, %v2426
        %2428 = vset.pattern.permute.xlu0 19
        %2429 = vperm.xlu0 %2428, %v261
        %v2430 = vpop.permute.xlu0 %2429
        %v2433 = vunpack.c.l.s4 839922192
        %v2434 = vunpack.c.0.s8 %v2433
        %v2435 = vlaneseq
        %v2436 = vshrl.u32 %v2435, 7
        %v2437 = vsub.s32 %v2434, %v2436
        %v2438 = vrot.slane %v2430, %v2437
        %2439 = vset.pattern.permute.xlu0 19
        %2440 = vperm.xlu0 %2439, %v262
        %v2441 = vpop.permute.xlu0 %2440
        %v2444 = vunpack.c.l.s4 839922192
        %v2445 = vunpack.c.0.s8 %v2444
        %v2446 = vlaneseq
        %v2447 = vshrl.u32 %v2446, 7
        %v2448 = vsub.s32 %v2445, %v2447
        %v2449 = vrot.slane %v2441, %v2448
        %v2450 = vmul.bf16 %v2372, %v247
        %v2451 = vmul.bf16 %v2383, %v248
        %v2452 = vmul.bf16 %v2394, %v249
        %v2453 = vmul.bf16 %v2405, %v250
        %v2454 = vmul.bf16 %v2416, %v251
        %v2455 = vmul.bf16 %v2427, %v252
        %v2456 = vmul.bf16 %v2438, %v253
        %v2457 = vmul.bf16 %v2449, %v254
        %2458 = vset.pattern.permute.xlu0 20
        %2459 = vperm.xlu0 %2458, %v255
        %v2460 = vpop.permute.xlu0 %2459
        %v2463 = vunpack.c.l.s4 839922192
        %v2464 = vunpack.c.0.s8 %v2463
        %v2465 = vlaneseq
        %v2466 = vshrl.u32 %v2465, 7
        %v2467 = vsub.s32 %v2464, %v2466
        %v2468 = vrot.slane %v2460, %v2467
        %2469 = vset.pattern.permute.xlu0 20
        %2470 = vperm.xlu0 %2469, %v256
        %v2471 = vpop.permute.xlu0 %2470
        %v2474 = vunpack.c.l.s4 839922192
        %v2475 = vunpack.c.0.s8 %v2474
        %v2476 = vlaneseq
        %v2477 = vshrl.u32 %v2476, 7
        %v2478 = vsub.s32 %v2475, %v2477
        %v2479 = vrot.slane %v2471, %v2478
        %2480 = vset.pattern.permute.xlu0 20
        %2481 = vperm.xlu0 %2480, %v257
        %v2482 = vpop.permute.xlu0 %2481
        %v2485 = vunpack.c.l.s4 839922192
        %v2486 = vunpack.c.0.s8 %v2485
        %v2487 = vlaneseq
        %v2488 = vshrl.u32 %v2487, 7
        %v2489 = vsub.s32 %v2486, %v2488
        %v2490 = vrot.slane %v2482, %v2489
        %2491 = vset.pattern.permute.xlu0 20
        %2492 = vperm.xlu0 %2491, %v258
        %v2493 = vpop.permute.xlu0 %2492
        %v2496 = vunpack.c.l.s4 839922192
        %v2497 = vunpack.c.0.s8 %v2496
        %v2498 = vlaneseq
        %v2499 = vshrl.u32 %v2498, 7
        %v2500 = vsub.s32 %v2497, %v2499
        %v2501 = vrot.slane %v2493, %v2500
        %2502 = vset.pattern.permute.xlu0 20
        %2503 = vperm.xlu0 %2502, %v259
        %v2504 = vpop.permute.xlu0 %2503
        %v2507 = vunpack.c.l.s4 839922192
        %v2508 = vunpack.c.0.s8 %v2507
        %v2509 = vlaneseq
        %v2510 = vshrl.u32 %v2509, 7
        %v2511 = vsub.s32 %v2508, %v2510
        %v2512 = vrot.slane %v2504, %v2511
        %2513 = vset.pattern.permute.xlu0 20
        %2514 = vperm.xlu0 %2513, %v260
        %v2515 = vpop.permute.xlu0 %2514
        %v2518 = vunpack.c.l.s4 839922192
        %v2519 = vunpack.c.0.s8 %v2518
        %v2520 = vlaneseq
        %v2521 = vshrl.u32 %v2520, 7
        %v2522 = vsub.s32 %v2519, %v2521
        %v2523 = vrot.slane %v2515, %v2522
        %2524 = vset.pattern.permute.xlu0 20
        %2525 = vperm.xlu0 %2524, %v261
        %v2526 = vpop.permute.xlu0 %2525
        %v2529 = vunpack.c.l.s4 839922192
        %v2530 = vunpack.c.0.s8 %v2529
        %v2531 = vlaneseq
        %v2532 = vshrl.u32 %v2531, 7
        %v2533 = vsub.s32 %v2530, %v2532
        %v2534 = vrot.slane %v2526, %v2533
        %2535 = vset.pattern.permute.xlu0 20
        %2536 = vperm.xlu0 %2535, %v262
        %v2537 = vpop.permute.xlu0 %2536
        %v2540 = vunpack.c.l.s4 839922192
        %v2541 = vunpack.c.0.s8 %v2540
        %v2542 = vlaneseq
        %v2543 = vshrl.u32 %v2542, 7
        %v2544 = vsub.s32 %v2541, %v2543
        %v2545 = vrot.slane %v2537, %v2544
        %v2546 = vmul.bf16 %v2468, %v247
        %v2547 = vmul.bf16 %v2479, %v248
        %v2548 = vmul.bf16 %v2490, %v249
        %v2549 = vmul.bf16 %v2501, %v250
        %v2550 = vmul.bf16 %v2512, %v251
        %v2551 = vmul.bf16 %v2523, %v252
        %v2552 = vmul.bf16 %v2534, %v253
        %v2553 = vmul.bf16 %v2545, %v254
        %2554 = vset.pattern.permute.xlu0 21
        %2555 = vperm.xlu0 %2554, %v255
        %v2556 = vpop.permute.xlu0 %2555
        %v2559 = vunpack.c.l.s4 839922192
        %v2560 = vunpack.c.0.s8 %v2559
        %v2561 = vlaneseq
        %v2562 = vshrl.u32 %v2561, 7
        %v2563 = vsub.s32 %v2560, %v2562
        %v2564 = vrot.slane %v2556, %v2563
        %2565 = vset.pattern.permute.xlu0 21
        %2566 = vperm.xlu0 %2565, %v256
        %v2567 = vpop.permute.xlu0 %2566
        %v2570 = vunpack.c.l.s4 839922192
        %v2571 = vunpack.c.0.s8 %v2570
        %v2572 = vlaneseq
        %v2573 = vshrl.u32 %v2572, 7
        %v2574 = vsub.s32 %v2571, %v2573
        %v2575 = vrot.slane %v2567, %v2574
        %2576 = vset.pattern.permute.xlu0 21
        %2577 = vperm.xlu0 %2576, %v257
        %v2578 = vpop.permute.xlu0 %2577
        %v2581 = vunpack.c.l.s4 839922192
        %v2582 = vunpack.c.0.s8 %v2581
        %v2583 = vlaneseq
        %v2584 = vshrl.u32 %v2583, 7
        %v2585 = vsub.s32 %v2582, %v2584
        %v2586 = vrot.slane %v2578, %v2585
        %2587 = vset.pattern.permute.xlu0 21
        %2588 = vperm.xlu0 %2587, %v258
        %v2589 = vpop.permute.xlu0 %2588
        %v2592 = vunpack.c.l.s4 839922192
        %v2593 = vunpack.c.0.s8 %v2592
        %v2594 = vlaneseq
        %v2595 = vshrl.u32 %v2594, 7
        %v2596 = vsub.s32 %v2593, %v2595
        %v2597 = vrot.slane %v2589, %v2596
        %2598 = vset.pattern.permute.xlu0 21
        %2599 = vperm.xlu0 %2598, %v259
        %v2600 = vpop.permute.xlu0 %2599
        %v2603 = vunpack.c.l.s4 839922192
        %v2604 = vunpack.c.0.s8 %v2603
        %v2605 = vlaneseq
        %v2606 = vshrl.u32 %v2605, 7
        %v2607 = vsub.s32 %v2604, %v2606
        %v2608 = vrot.slane %v2600, %v2607
        %2609 = vset.pattern.permute.xlu0 21
        %2610 = vperm.xlu0 %2609, %v260
        %v2611 = vpop.permute.xlu0 %2610
        %v2614 = vunpack.c.l.s4 839922192
        %v2615 = vunpack.c.0.s8 %v2614
        %v2616 = vlaneseq
        %v2617 = vshrl.u32 %v2616, 7
        %v2618 = vsub.s32 %v2615, %v2617
        %v2619 = vrot.slane %v2611, %v2618
        %2620 = vset.pattern.permute.xlu0 21
        %2621 = vperm.xlu0 %2620, %v261
        %v2622 = vpop.permute.xlu0 %2621
        %v2625 = vunpack.c.l.s4 839922192
        %v2626 = vunpack.c.0.s8 %v2625
        %v2627 = vlaneseq
        %v2628 = vshrl.u32 %v2627, 7
        %v2629 = vsub.s32 %v2626, %v2628
        %v2630 = vrot.slane %v2622, %v2629
        %2631 = vset.pattern.permute.xlu0 21
        %2632 = vperm.xlu0 %2631, %v262
        %v2633 = vpop.permute.xlu0 %2632
        %v2636 = vunpack.c.l.s4 839922192
        %v2637 = vunpack.c.0.s8 %v2636
        %v2638 = vlaneseq
        %v2639 = vshrl.u32 %v2638, 7
        %v2640 = vsub.s32 %v2637, %v2639
        %v2641 = vrot.slane %v2633, %v2640
        %v2642 = vmul.bf16 %v2564, %v247
        %v2643 = vmul.bf16 %v2575, %v248
        %v2644 = vmul.bf16 %v2586, %v249
        %v2645 = vmul.bf16 %v2597, %v250
        %v2646 = vmul.bf16 %v2608, %v251
        %v2647 = vmul.bf16 %v2619, %v252
        %v2648 = vmul.bf16 %v2630, %v253
        %v2649 = vmul.bf16 %v2641, %v254
        %2650 = vset.pattern.permute.xlu0 22
        %2651 = vperm.xlu0 %2650, %v255
        %v2652 = vpop.permute.xlu0 %2651
        %v2655 = vunpack.c.l.s4 839922192
        %v2656 = vunpack.c.0.s8 %v2655
        %v2657 = vlaneseq
        %v2658 = vshrl.u32 %v2657, 7
        %v2659 = vsub.s32 %v2656, %v2658
        %v2660 = vrot.slane %v2652, %v2659
        %2661 = vset.pattern.permute.xlu0 22
        %2662 = vperm.xlu0 %2661, %v256
        %v2663 = vpop.permute.xlu0 %2662
        %v2666 = vunpack.c.l.s4 839922192
        %v2667 = vunpack.c.0.s8 %v2666
        %v2668 = vlaneseq
        %v2669 = vshrl.u32 %v2668, 7
        %v2670 = vsub.s32 %v2667, %v2669
        %v2671 = vrot.slane %v2663, %v2670
        %2672 = vset.pattern.permute.xlu0 22
        %2673 = vperm.xlu0 %2672, %v257
        %v2674 = vpop.permute.xlu0 %2673
        %v2677 = vunpack.c.l.s4 839922192
        %v2678 = vunpack.c.0.s8 %v2677
        %v2679 = vlaneseq
        %v2680 = vshrl.u32 %v2679, 7
        %v2681 = vsub.s32 %v2678, %v2680
        %v2682 = vrot.slane %v2674, %v2681
        %2683 = vset.pattern.permute.xlu0 22
        %2684 = vperm.xlu0 %2683, %v258
        %v2685 = vpop.permute.xlu0 %2684
        %v2688 = vunpack.c.l.s4 839922192
        %v2689 = vunpack.c.0.s8 %v2688
        %v2690 = vlaneseq
        %v2691 = vshrl.u32 %v2690, 7
        %v2692 = vsub.s32 %v2689, %v2691
        %v2693 = vrot.slane %v2685, %v2692
        %2694 = vset.pattern.permute.xlu0 22
        %2695 = vperm.xlu0 %2694, %v259
        %v2696 = vpop.permute.xlu0 %2695
        %v2699 = vunpack.c.l.s4 839922192
        %v2700 = vunpack.c.0.s8 %v2699
        %v2701 = vlaneseq
        %v2702 = vshrl.u32 %v2701, 7
        %v2703 = vsub.s32 %v2700, %v2702
        %v2704 = vrot.slane %v2696, %v2703
        %2705 = vset.pattern.permute.xlu0 22
        %2706 = vperm.xlu0 %2705, %v260
        %v2707 = vpop.permute.xlu0 %2706
        %v2710 = vunpack.c.l.s4 839922192
        %v2711 = vunpack.c.0.s8 %v2710
        %v2712 = vlaneseq
        %v2713 = vshrl.u32 %v2712, 7
        %v2714 = vsub.s32 %v2711, %v2713
        %v2715 = vrot.slane %v2707, %v2714
        %2716 = vset.pattern.permute.xlu0 22
        %2717 = vperm.xlu0 %2716, %v261
        %v2718 = vpop.permute.xlu0 %2717
        %v2721 = vunpack.c.l.s4 839922192
        %v2722 = vunpack.c.0.s8 %v2721
        %v2723 = vlaneseq
        %v2724 = vshrl.u32 %v2723, 7
        %v2725 = vsub.s32 %v2722, %v2724
        %v2726 = vrot.slane %v2718, %v2725
        %2727 = vset.pattern.permute.xlu0 22
        %2728 = vperm.xlu0 %2727, %v262
        %v2729 = vpop.permute.xlu0 %2728
        %v2732 = vunpack.c.l.s4 839922192
        %v2733 = vunpack.c.0.s8 %v2732
        %v2734 = vlaneseq
        %v2735 = vshrl.u32 %v2734, 7
        %v2736 = vsub.s32 %v2733, %v2735
        %v2737 = vrot.slane %v2729, %v2736
        %v2738 = vmul.bf16 %v2660, %v247
        %v2739 = vmul.bf16 %v2671, %v248
        %v2740 = vmul.bf16 %v2682, %v249
        %v2741 = vmul.bf16 %v2693, %v250
        %v2742 = vmul.bf16 %v2704, %v251
        %v2743 = vmul.bf16 %v2715, %v252
        %v2744 = vmul.bf16 %v2726, %v253
        %v2745 = vmul.bf16 %v2737, %v254
        %2746 = vset.pattern.permute.xlu0 23
        %2747 = vperm.xlu0 %2746, %v255
        %v2748 = vpop.permute.xlu0 %2747
        %v2751 = vunpack.c.l.s4 839922192
        %v2752 = vunpack.c.0.s8 %v2751
        %v2753 = vlaneseq
        %v2754 = vshrl.u32 %v2753, 7
        %v2755 = vsub.s32 %v2752, %v2754
        %v2756 = vrot.slane %v2748, %v2755
        %2757 = vset.pattern.permute.xlu0 23
        %2758 = vperm.xlu0 %2757, %v256
        %v2759 = vpop.permute.xlu0 %2758
        %v2762 = vunpack.c.l.s4 839922192
        %v2763 = vunpack.c.0.s8 %v2762
        %v2764 = vlaneseq
        %v2765 = vshrl.u32 %v2764, 7
        %v2766 = vsub.s32 %v2763, %v2765
        %v2767 = vrot.slane %v2759, %v2766
        %2768 = vset.pattern.permute.xlu0 23
        %2769 = vperm.xlu0 %2768, %v257
        %v2770 = vpop.permute.xlu0 %2769
        %v2773 = vunpack.c.l.s4 839922192
        %v2774 = vunpack.c.0.s8 %v2773
        %v2775 = vlaneseq
        %v2776 = vshrl.u32 %v2775, 7
        %v2777 = vsub.s32 %v2774, %v2776
        %v2778 = vrot.slane %v2770, %v2777
        %2779 = vset.pattern.permute.xlu0 23
        %2780 = vperm.xlu0 %2779, %v258
        %v2781 = vpop.permute.xlu0 %2780
        %v2784 = vunpack.c.l.s4 839922192
        %v2785 = vunpack.c.0.s8 %v2784
        %v2786 = vlaneseq
        %v2787 = vshrl.u32 %v2786, 7
        %v2788 = vsub.s32 %v2785, %v2787
        %v2789 = vrot.slane %v2781, %v2788
        %2790 = vset.pattern.permute.xlu0 23
        %2791 = vperm.xlu0 %2790, %v259
        %v2792 = vpop.permute.xlu0 %2791
        %v2795 = vunpack.c.l.s4 839922192
        %v2796 = vunpack.c.0.s8 %v2795
        %v2797 = vlaneseq
        %v2798 = vshrl.u32 %v2797, 7
        %v2799 = vsub.s32 %v2796, %v2798
        %v2800 = vrot.slane %v2792, %v2799
        %2801 = vset.pattern.permute.xlu0 23
        %2802 = vperm.xlu0 %2801, %v260
        %v2803 = vpop.permute.xlu0 %2802
        %v2806 = vunpack.c.l.s4 839922192
        %v2807 = vunpack.c.0.s8 %v2806
        %v2808 = vlaneseq
        %v2809 = vshrl.u32 %v2808, 7
        %v2810 = vsub.s32 %v2807, %v2809
        %v2811 = vrot.slane %v2803, %v2810
        %2812 = vset.pattern.permute.xlu0 23
        %2813 = vperm.xlu0 %2812, %v261
        %v2814 = vpop.permute.xlu0 %2813
        %v2817 = vunpack.c.l.s4 839922192
        %v2818 = vunpack.c.0.s8 %v2817
        %v2819 = vlaneseq
        %v2820 = vshrl.u32 %v2819, 7
        %v2821 = vsub.s32 %v2818, %v2820
        %v2822 = vrot.slane %v2814, %v2821
        %2823 = vset.pattern.permute.xlu0 23
        %2824 = vperm.xlu0 %2823, %v262
        %v2825 = vpop.permute.xlu0 %2824
        %v2828 = vunpack.c.l.s4 839922192
        %v2829 = vunpack.c.0.s8 %v2828
        %v2830 = vlaneseq
        %v2831 = vshrl.u32 %v2830, 7
        %v2832 = vsub.s32 %v2829, %v2831
        %v2833 = vrot.slane %v2825, %v2832
        %v2834 = vmul.bf16 %v2756, %v247
        %v2835 = vmul.bf16 %v2767, %v248
        %v2836 = vmul.bf16 %v2778, %v249
        %v2837 = vmul.bf16 %v2789, %v250
        %v2838 = vmul.bf16 %v2800, %v251
        %v2839 = vmul.bf16 %v2811, %v252
        %v2840 = vmul.bf16 %v2822, %v253
        %v2841 = vmul.bf16 %v2833, %v254
        %2842 = vset.pattern.permute.xlu0 24
        %2843 = vperm.xlu0 %2842, %v255
        %v2844 = vpop.permute.xlu0 %2843
        %v2847 = vunpack.c.l.s4 839922192
        %v2848 = vunpack.c.0.s8 %v2847
        %v2849 = vlaneseq
        %v2850 = vshrl.u32 %v2849, 7
        %v2851 = vsub.s32 %v2848, %v2850
        %v2852 = vrot.slane %v2844, %v2851
        %2853 = vset.pattern.permute.xlu0 24
        %2854 = vperm.xlu0 %2853, %v256
        %v2855 = vpop.permute.xlu0 %2854
        %v2858 = vunpack.c.l.s4 839922192
        %v2859 = vunpack.c.0.s8 %v2858
        %v2860 = vlaneseq
        %v2861 = vshrl.u32 %v2860, 7
        %v2862 = vsub.s32 %v2859, %v2861
        %v2863 = vrot.slane %v2855, %v2862
        %2864 = vset.pattern.permute.xlu0 24
        %2865 = vperm.xlu0 %2864, %v257
        %v2866 = vpop.permute.xlu0 %2865
        %v2869 = vunpack.c.l.s4 839922192
        %v2870 = vunpack.c.0.s8 %v2869
        %v2871 = vlaneseq
        %v2872 = vshrl.u32 %v2871, 7
        %v2873 = vsub.s32 %v2870, %v2872
        %v2874 = vrot.slane %v2866, %v2873
        %2875 = vset.pattern.permute.xlu0 24
        %2876 = vperm.xlu0 %2875, %v258
        %v2877 = vpop.permute.xlu0 %2876
        %v2880 = vunpack.c.l.s4 839922192
        %v2881 = vunpack.c.0.s8 %v2880
        %v2882 = vlaneseq
        %v2883 = vshrl.u32 %v2882, 7
        %v2884 = vsub.s32 %v2881, %v2883
        %v2885 = vrot.slane %v2877, %v2884
        %2886 = vset.pattern.permute.xlu0 24
        %2887 = vperm.xlu0 %2886, %v259
        %v2888 = vpop.permute.xlu0 %2887
        %v2891 = vunpack.c.l.s4 839922192
        %v2892 = vunpack.c.0.s8 %v2891
        %v2893 = vlaneseq
        %v2894 = vshrl.u32 %v2893, 7
        %v2895 = vsub.s32 %v2892, %v2894
        %v2896 = vrot.slane %v2888, %v2895
        %2897 = vset.pattern.permute.xlu0 24
        %2898 = vperm.xlu0 %2897, %v260
        %v2899 = vpop.permute.xlu0 %2898
        %v2902 = vunpack.c.l.s4 839922192
        %v2903 = vunpack.c.0.s8 %v2902
        %v2904 = vlaneseq
        %v2905 = vshrl.u32 %v2904, 7
        %v2906 = vsub.s32 %v2903, %v2905
        %v2907 = vrot.slane %v2899, %v2906
        %2908 = vset.pattern.permute.xlu0 24
        %2909 = vperm.xlu0 %2908, %v261
        %v2910 = vpop.permute.xlu0 %2909
        %v2913 = vunpack.c.l.s4 839922192
        %v2914 = vunpack.c.0.s8 %v2913
        %v2915 = vlaneseq
        %v2916 = vshrl.u32 %v2915, 7
        %v2917 = vsub.s32 %v2914, %v2916
        %v2918 = vrot.slane %v2910, %v2917
        %2919 = vset.pattern.permute.xlu0 24
        %2920 = vperm.xlu0 %2919, %v262
        %v2921 = vpop.permute.xlu0 %2920
        %v2924 = vunpack.c.l.s4 839922192
        %v2925 = vunpack.c.0.s8 %v2924
        %v2926 = vlaneseq
        %v2927 = vshrl.u32 %v2926, 7
        %v2928 = vsub.s32 %v2925, %v2927
        %v2929 = vrot.slane %v2921, %v2928
        %v2930 = vmul.bf16 %v2852, %v247
        %v2931 = vmul.bf16 %v2863, %v248
        %v2932 = vmul.bf16 %v2874, %v249
        %v2933 = vmul.bf16 %v2885, %v250
        %v2934 = vmul.bf16 %v2896, %v251
        %v2935 = vmul.bf16 %v2907, %v252
        %v2936 = vmul.bf16 %v2918, %v253
        %v2937 = vmul.bf16 %v2929, %v254
        %2938 = vset.pattern.permute.xlu0 25
        %2939 = vperm.xlu0 %2938, %v255
        %v2940 = vpop.permute.xlu0 %2939
        %v2943 = vunpack.c.l.s4 839922192
        %v2944 = vunpack.c.0.s8 %v2943
        %v2945 = vlaneseq
        %v2946 = vshrl.u32 %v2945, 7
        %v2947 = vsub.s32 %v2944, %v2946
        %v2948 = vrot.slane %v2940, %v2947
        %2949 = vset.pattern.permute.xlu0 25
        %2950 = vperm.xlu0 %2949, %v256
        %v2951 = vpop.permute.xlu0 %2950
        %v2954 = vunpack.c.l.s4 839922192
        %v2955 = vunpack.c.0.s8 %v2954
        %v2956 = vlaneseq
        %v2957 = vshrl.u32 %v2956, 7
        %v2958 = vsub.s32 %v2955, %v2957
        %v2959 = vrot.slane %v2951, %v2958
        %2960 = vset.pattern.permute.xlu0 25
        %2961 = vperm.xlu0 %2960, %v257
        %v2962 = vpop.permute.xlu0 %2961
        %v2965 = vunpack.c.l.s4 839922192
        %v2966 = vunpack.c.0.s8 %v2965
        %v2967 = vlaneseq
        %v2968 = vshrl.u32 %v2967, 7
        %v2969 = vsub.s32 %v2966, %v2968
        %v2970 = vrot.slane %v2962, %v2969
        %2971 = vset.pattern.permute.xlu0 25
        %2972 = vperm.xlu0 %2971, %v258
        %v2973 = vpop.permute.xlu0 %2972
        %v2976 = vunpack.c.l.s4 839922192
        %v2977 = vunpack.c.0.s8 %v2976
        %v2978 = vlaneseq
        %v2979 = vshrl.u32 %v2978, 7
        %v2980 = vsub.s32 %v2977, %v2979
        %v2981 = vrot.slane %v2973, %v2980
        %2982 = vset.pattern.permute.xlu0 25
        %2983 = vperm.xlu0 %2982, %v259
        %v2984 = vpop.permute.xlu0 %2983
        %v2987 = vunpack.c.l.s4 839922192
        %v2988 = vunpack.c.0.s8 %v2987
        %v2989 = vlaneseq
        %v2990 = vshrl.u32 %v2989, 7
        %v2991 = vsub.s32 %v2988, %v2990
        %v2992 = vrot.slane %v2984, %v2991
        %2993 = vset.pattern.permute.xlu0 25
        %2994 = vperm.xlu0 %2993, %v260
        %v2995 = vpop.permute.xlu0 %2994
        %v2998 = vunpack.c.l.s4 839922192
        %v2999 = vunpack.c.0.s8 %v2998
        %v3000 = vlaneseq
        %v3001 = vshrl.u32 %v3000, 7
        %v3002 = vsub.s32 %v2999, %v3001
        %v3003 = vrot.slane %v2995, %v3002
        %3004 = vset.pattern.permute.xlu0 25
        %3005 = vperm.xlu0 %3004, %v261
        %v3006 = vpop.permute.xlu0 %3005
        %v3009 = vunpack.c.l.s4 839922192
        %v3010 = vunpack.c.0.s8 %v3009
        %v3011 = vlaneseq
        %v3012 = vshrl.u32 %v3011, 7
        %v3013 = vsub.s32 %v3010, %v3012
        %v3014 = vrot.slane %v3006, %v3013
        %3015 = vset.pattern.permute.xlu0 25
        %3016 = vperm.xlu0 %3015, %v262
        %v3017 = vpop.permute.xlu0 %3016
        %v3020 = vunpack.c.l.s4 839922192
        %v3021 = vunpack.c.0.s8 %v3020
        %v3022 = vlaneseq
        %v3023 = vshrl.u32 %v3022, 7
        %v3024 = vsub.s32 %v3021, %v3023
        %v3025 = vrot.slane %v3017, %v3024
        %v3026 = vmul.bf16 %v2948, %v247
        %v3027 = vmul.bf16 %v2959, %v248
        %v3028 = vmul.bf16 %v2970, %v249
        %v3029 = vmul.bf16 %v2981, %v250
        %v3030 = vmul.bf16 %v2992, %v251
        %v3031 = vmul.bf16 %v3003, %v252
        %v3032 = vmul.bf16 %v3014, %v253
        %v3033 = vmul.bf16 %v3025, %v254
        %3034 = vset.pattern.permute.xlu0 26
        %3035 = vperm.xlu0 %3034, %v255
        %v3036 = vpop.permute.xlu0 %3035
        %v3039 = vunpack.c.l.s4 839922192
        %v3040 = vunpack.c.0.s8 %v3039
        %v3041 = vlaneseq
        %v3042 = vshrl.u32 %v3041, 7
        %v3043 = vsub.s32 %v3040, %v3042
        %v3044 = vrot.slane %v3036, %v3043
        %3045 = vset.pattern.permute.xlu0 26
        %3046 = vperm.xlu0 %3045, %v256
        %v3047 = vpop.permute.xlu0 %3046
        %v3050 = vunpack.c.l.s4 839922192
        %v3051 = vunpack.c.0.s8 %v3050
        %v3052 = vlaneseq
        %v3053 = vshrl.u32 %v3052, 7
        %v3054 = vsub.s32 %v3051, %v3053
        %v3055 = vrot.slane %v3047, %v3054
        %3056 = vset.pattern.permute.xlu0 26
        %3057 = vperm.xlu0 %3056, %v257
        %v3058 = vpop.permute.xlu0 %3057
        %v3061 = vunpack.c.l.s4 839922192
        %v3062 = vunpack.c.0.s8 %v3061
        %v3063 = vlaneseq
        %v3064 = vshrl.u32 %v3063, 7
        %v3065 = vsub.s32 %v3062, %v3064
        %v3066 = vrot.slane %v3058, %v3065
        %3067 = vset.pattern.permute.xlu0 26
        %3068 = vperm.xlu0 %3067, %v258
        %v3069 = vpop.permute.xlu0 %3068
        %v3072 = vunpack.c.l.s4 839922192
        %v3073 = vunpack.c.0.s8 %v3072
        %v3074 = vlaneseq
        %v3075 = vshrl.u32 %v3074, 7
        %v3076 = vsub.s32 %v3073, %v3075
        %v3077 = vrot.slane %v3069, %v3076
        %3078 = vset.pattern.permute.xlu0 26
        %3079 = vperm.xlu0 %3078, %v259
        %v3080 = vpop.permute.xlu0 %3079
        %v3083 = vunpack.c.l.s4 839922192
        %v3084 = vunpack.c.0.s8 %v3083
        %v3085 = vlaneseq
        %v3086 = vshrl.u32 %v3085, 7
        %v3087 = vsub.s32 %v3084, %v3086
        %v3088 = vrot.slane %v3080, %v3087
        %3089 = vset.pattern.permute.xlu0 26
        %3090 = vperm.xlu0 %3089, %v260
        %v3091 = vpop.permute.xlu0 %3090
        %v3094 = vunpack.c.l.s4 839922192
        %v3095 = vunpack.c.0.s8 %v3094
        %v3096 = vlaneseq
        %v3097 = vshrl.u32 %v3096, 7
        %v3098 = vsub.s32 %v3095, %v3097
        %v3099 = vrot.slane %v3091, %v3098
        %3100 = vset.pattern.permute.xlu0 26
        %3101 = vperm.xlu0 %3100, %v261
        %v3102 = vpop.permute.xlu0 %3101
        %v3105 = vunpack.c.l.s4 839922192
        %v3106 = vunpack.c.0.s8 %v3105
        %v3107 = vlaneseq
        %v3108 = vshrl.u32 %v3107, 7
        %v3109 = vsub.s32 %v3106, %v3108
        %v3110 = vrot.slane %v3102, %v3109
        %3111 = vset.pattern.permute.xlu0 26
        %3112 = vperm.xlu0 %3111, %v262
        %v3113 = vpop.permute.xlu0 %3112
        %v3116 = vunpack.c.l.s4 839922192
        %v3117 = vunpack.c.0.s8 %v3116
        %v3118 = vlaneseq
        %v3119 = vshrl.u32 %v3118, 7
        %v3120 = vsub.s32 %v3117, %v3119
        %v3121 = vrot.slane %v3113, %v3120
        %v3122 = vmul.bf16 %v3044, %v247
        %v3123 = vmul.bf16 %v3055, %v248
        %v3124 = vmul.bf16 %v3066, %v249
        %v3125 = vmul.bf16 %v3077, %v250
        %v3126 = vmul.bf16 %v3088, %v251
        %v3127 = vmul.bf16 %v3099, %v252
        %v3128 = vmul.bf16 %v3110, %v253
        %v3129 = vmul.bf16 %v3121, %v254
        %3130 = vset.pattern.permute.xlu0 27
        %3131 = vperm.xlu0 %3130, %v255
        %v3132 = vpop.permute.xlu0 %3131
        %v3135 = vunpack.c.l.s4 839922192
        %v3136 = vunpack.c.0.s8 %v3135
        %v3137 = vlaneseq
        %v3138 = vshrl.u32 %v3137, 7
        %v3139 = vsub.s32 %v3136, %v3138
        %v3140 = vrot.slane %v3132, %v3139
        %3141 = vset.pattern.permute.xlu0 27
        %3142 = vperm.xlu0 %3141, %v256
        %v3143 = vpop.permute.xlu0 %3142
        %v3146 = vunpack.c.l.s4 839922192
        %v3147 = vunpack.c.0.s8 %v3146
        %v3148 = vlaneseq
        %v3149 = vshrl.u32 %v3148, 7
        %v3150 = vsub.s32 %v3147, %v3149
        %v3151 = vrot.slane %v3143, %v3150
        %3152 = vset.pattern.permute.xlu0 27
        %3153 = vperm.xlu0 %3152, %v257
        %v3154 = vpop.permute.xlu0 %3153
        %v3157 = vunpack.c.l.s4 839922192
        %v3158 = vunpack.c.0.s8 %v3157
        %v3159 = vlaneseq
        %v3160 = vshrl.u32 %v3159, 7
        %v3161 = vsub.s32 %v3158, %v3160
        %v3162 = vrot.slane %v3154, %v3161
        %3163 = vset.pattern.permute.xlu0 27
        %3164 = vperm.xlu0 %3163, %v258
        %v3165 = vpop.permute.xlu0 %3164
        %v3168 = vunpack.c.l.s4 839922192
        %v3169 = vunpack.c.0.s8 %v3168
        %v3170 = vlaneseq
        %v3171 = vshrl.u32 %v3170, 7
        %v3172 = vsub.s32 %v3169, %v3171
        %v3173 = vrot.slane %v3165, %v3172
        %3174 = vset.pattern.permute.xlu0 27
        %3175 = vperm.xlu0 %3174, %v259
        %v3176 = vpop.permute.xlu0 %3175
        %v3179 = vunpack.c.l.s4 839922192
        %v3180 = vunpack.c.0.s8 %v3179
        %v3181 = vlaneseq
        %v3182 = vshrl.u32 %v3181, 7
        %v3183 = vsub.s32 %v3180, %v3182
        %v3184 = vrot.slane %v3176, %v3183
        %3185 = vset.pattern.permute.xlu0 27
        %3186 = vperm.xlu0 %3185, %v260
        %v3187 = vpop.permute.xlu0 %3186
        %v3190 = vunpack.c.l.s4 839922192
        %v3191 = vunpack.c.0.s8 %v3190
        %v3192 = vlaneseq
        %v3193 = vshrl.u32 %v3192, 7
        %v3194 = vsub.s32 %v3191, %v3193
        %v3195 = vrot.slane %v3187, %v3194
        %3196 = vset.pattern.permute.xlu0 27
        %3197 = vperm.xlu0 %3196, %v261
        %v3198 = vpop.permute.xlu0 %3197
        %v3201 = vunpack.c.l.s4 839922192
        %v3202 = vunpack.c.0.s8 %v3201
        %v3203 = vlaneseq
        %v3204 = vshrl.u32 %v3203, 7
        %v3205 = vsub.s32 %v3202, %v3204
        %v3206 = vrot.slane %v3198, %v3205
        %3207 = vset.pattern.permute.xlu0 27
        %3208 = vperm.xlu0 %3207, %v262
        %v3209 = vpop.permute.xlu0 %3208
        %v3212 = vunpack.c.l.s4 839922192
        %v3213 = vunpack.c.0.s8 %v3212
        %v3214 = vlaneseq
        %v3215 = vshrl.u32 %v3214, 7
        %v3216 = vsub.s32 %v3213, %v3215
        %v3217 = vrot.slane %v3209, %v3216
        %v3218 = vmul.bf16 %v3140, %v247
        %v3219 = vmul.bf16 %v3151, %v248
        %v3220 = vmul.bf16 %v3162, %v249
        %v3221 = vmul.bf16 %v3173, %v250
        %v3222 = vmul.bf16 %v3184, %v251
        %v3223 = vmul.bf16 %v3195, %v252
        %v3224 = vmul.bf16 %v3206, %v253
        %v3225 = vmul.bf16 %v3217, %v254
        %3226 = vset.pattern.permute.xlu0 28
        %3227 = vperm.xlu0 %3226, %v255
        %v3228 = vpop.permute.xlu0 %3227
        %v3231 = vunpack.c.l.s4 839922192
        %v3232 = vunpack.c.0.s8 %v3231
        %v3233 = vlaneseq
        %v3234 = vshrl.u32 %v3233, 7
        %v3235 = vsub.s32 %v3232, %v3234
        %v3236 = vrot.slane %v3228, %v3235
        %3237 = vset.pattern.permute.xlu0 28
        %3238 = vperm.xlu0 %3237, %v256
        %v3239 = vpop.permute.xlu0 %3238
        %v3242 = vunpack.c.l.s4 839922192
        %v3243 = vunpack.c.0.s8 %v3242
        %v3244 = vlaneseq
        %v3245 = vshrl.u32 %v3244, 7
        %v3246 = vsub.s32 %v3243, %v3245
        %v3247 = vrot.slane %v3239, %v3246
        %3248 = vset.pattern.permute.xlu0 28
        %3249 = vperm.xlu0 %3248, %v257
        %v3250 = vpop.permute.xlu0 %3249
        %v3253 = vunpack.c.l.s4 839922192
        %v3254 = vunpack.c.0.s8 %v3253
        %v3255 = vlaneseq
        %v3256 = vshrl.u32 %v3255, 7
        %v3257 = vsub.s32 %v3254, %v3256
        %v3258 = vrot.slane %v3250, %v3257
        %3259 = vset.pattern.permute.xlu0 28
        %3260 = vperm.xlu0 %3259, %v258
        %v3261 = vpop.permute.xlu0 %3260
        %v3264 = vunpack.c.l.s4 839922192
        %v3265 = vunpack.c.0.s8 %v3264
        %v3266 = vlaneseq
        %v3267 = vshrl.u32 %v3266, 7
        %v3268 = vsub.s32 %v3265, %v3267
        %v3269 = vrot.slane %v3261, %v3268
        %3270 = vset.pattern.permute.xlu0 28
        %3271 = vperm.xlu0 %3270, %v259
        %v3272 = vpop.permute.xlu0 %3271
        %v3275 = vunpack.c.l.s4 839922192
        %v3276 = vunpack.c.0.s8 %v3275
        %v3277 = vlaneseq
        %v3278 = vshrl.u32 %v3277, 7
        %v3279 = vsub.s32 %v3276, %v3278
        %v3280 = vrot.slane %v3272, %v3279
        %3281 = vset.pattern.permute.xlu0 28
        %3282 = vperm.xlu0 %3281, %v260
        %v3283 = vpop.permute.xlu0 %3282
        %v3286 = vunpack.c.l.s4 839922192
        %v3287 = vunpack.c.0.s8 %v3286
        %v3288 = vlaneseq
        %v3289 = vshrl.u32 %v3288, 7
        %v3290 = vsub.s32 %v3287, %v3289
        %v3291 = vrot.slane %v3283, %v3290
        %3292 = vset.pattern.permute.xlu0 28
        %3293 = vperm.xlu0 %3292, %v261
        %v3294 = vpop.permute.xlu0 %3293
        %v3297 = vunpack.c.l.s4 839922192
        %v3298 = vunpack.c.0.s8 %v3297
        %v3299 = vlaneseq
        %v3300 = vshrl.u32 %v3299, 7
        %v3301 = vsub.s32 %v3298, %v3300
        %v3302 = vrot.slane %v3294, %v3301
        %3303 = vset.pattern.permute.xlu0 28
        %3304 = vperm.xlu0 %3303, %v262
        %v3305 = vpop.permute.xlu0 %3304
        %v3308 = vunpack.c.l.s4 839922192
        %v3309 = vunpack.c.0.s8 %v3308
        %v3310 = vlaneseq
        %v3311 = vshrl.u32 %v3310, 7
        %v3312 = vsub.s32 %v3309, %v3311
        %v3313 = vrot.slane %v3305, %v3312
        %v3314 = vmul.bf16 %v3236, %v247
        %v3315 = vmul.bf16 %v3247, %v248
        %v3316 = vmul.bf16 %v3258, %v249
        %v3317 = vmul.bf16 %v3269, %v250
        %v3318 = vmul.bf16 %v3280, %v251
        %v3319 = vmul.bf16 %v3291, %v252
        %v3320 = vmul.bf16 %v3302, %v253
        %v3321 = vmul.bf16 %v3313, %v254
        %3322 = vset.pattern.permute.xlu0 29
        %3323 = vperm.xlu0 %3322, %v255
        %v3324 = vpop.permute.xlu0 %3323
        %v3327 = vunpack.c.l.s4 839922192
        %v3328 = vunpack.c.0.s8 %v3327
        %v3329 = vlaneseq
        %v3330 = vshrl.u32 %v3329, 7
        %v3331 = vsub.s32 %v3328, %v3330
        %v3332 = vrot.slane %v3324, %v3331
        %3333 = vset.pattern.permute.xlu0 29
        %3334 = vperm.xlu0 %3333, %v256
        %v3335 = vpop.permute.xlu0 %3334
        %v3338 = vunpack.c.l.s4 839922192
        %v3339 = vunpack.c.0.s8 %v3338
        %v3340 = vlaneseq
        %v3341 = vshrl.u32 %v3340, 7
        %v3342 = vsub.s32 %v3339, %v3341
        %v3343 = vrot.slane %v3335, %v3342
        %3344 = vset.pattern.permute.xlu0 29
        %3345 = vperm.xlu0 %3344, %v257
        %v3346 = vpop.permute.xlu0 %3345
        %v3349 = vunpack.c.l.s4 839922192
        %v3350 = vunpack.c.0.s8 %v3349
        %v3351 = vlaneseq
        %v3352 = vshrl.u32 %v3351, 7
        %v3353 = vsub.s32 %v3350, %v3352
        %v3354 = vrot.slane %v3346, %v3353
        %3355 = vset.pattern.permute.xlu0 29
        %3356 = vperm.xlu0 %3355, %v258
        %v3357 = vpop.permute.xlu0 %3356
        %v3360 = vunpack.c.l.s4 839922192
        %v3361 = vunpack.c.0.s8 %v3360
        %v3362 = vlaneseq
        %v3363 = vshrl.u32 %v3362, 7
        %v3364 = vsub.s32 %v3361, %v3363
        %v3365 = vrot.slane %v3357, %v3364
        %3366 = vset.pattern.permute.xlu0 29
        %3367 = vperm.xlu0 %3366, %v259
        %v3368 = vpop.permute.xlu0 %3367
        %v3371 = vunpack.c.l.s4 839922192
        %v3372 = vunpack.c.0.s8 %v3371
        %v3373 = vlaneseq
        %v3374 = vshrl.u32 %v3373, 7
        %v3375 = vsub.s32 %v3372, %v3374
        %v3376 = vrot.slane %v3368, %v3375
        %3377 = vset.pattern.permute.xlu0 29
        %3378 = vperm.xlu0 %3377, %v260
        %v3379 = vpop.permute.xlu0 %3378
        %v3382 = vunpack.c.l.s4 839922192
        %v3383 = vunpack.c.0.s8 %v3382
        %v3384 = vlaneseq
        %v3385 = vshrl.u32 %v3384, 7
        %v3386 = vsub.s32 %v3383, %v3385
        %v3387 = vrot.slane %v3379, %v3386
        %3388 = vset.pattern.permute.xlu0 29
        %3389 = vperm.xlu0 %3388, %v261
        %v3390 = vpop.permute.xlu0 %3389
        %v3393 = vunpack.c.l.s4 839922192
        %v3394 = vunpack.c.0.s8 %v3393
        %v3395 = vlaneseq
        %v3396 = vshrl.u32 %v3395, 7
        %v3397 = vsub.s32 %v3394, %v3396
        %v3398 = vrot.slane %v3390, %v3397
        %3399 = vset.pattern.permute.xlu0 29
        %3400 = vperm.xlu0 %3399, %v262
        %v3401 = vpop.permute.xlu0 %3400
        %v3404 = vunpack.c.l.s4 839922192
        %v3405 = vunpack.c.0.s8 %v3404
        %v3406 = vlaneseq
        %v3407 = vshrl.u32 %v3406, 7
        %v3408 = vsub.s32 %v3405, %v3407
        %v3409 = vrot.slane %v3401, %v3408
        %v3410 = vmul.bf16 %v3332, %v247
        %v3411 = vmul.bf16 %v3343, %v248
        %v3412 = vmul.bf16 %v3354, %v249
        %v3413 = vmul.bf16 %v3365, %v250
        %v3414 = vmul.bf16 %v3376, %v251
        %v3415 = vmul.bf16 %v3387, %v252
        %v3416 = vmul.bf16 %v3398, %v253
        %v3417 = vmul.bf16 %v3409, %v254
        %3418 = vset.pattern.permute.xlu0 30
        %3419 = vperm.xlu0 %3418, %v255
        %v3420 = vpop.permute.xlu0 %3419
        %v3423 = vunpack.c.l.s4 839922192
        %v3424 = vunpack.c.0.s8 %v3423
        %v3425 = vlaneseq
        %v3426 = vshrl.u32 %v3425, 7
        %v3427 = vsub.s32 %v3424, %v3426
        %v3428 = vrot.slane %v3420, %v3427
        %3429 = vset.pattern.permute.xlu0 30
        %3430 = vperm.xlu0 %3429, %v256
        %v3431 = vpop.permute.xlu0 %3430
        %v3434 = vunpack.c.l.s4 839922192
        %v3435 = vunpack.c.0.s8 %v3434
        %v3436 = vlaneseq
        %v3437 = vshrl.u32 %v3436, 7
        %v3438 = vsub.s32 %v3435, %v3437
        %v3439 = vrot.slane %v3431, %v3438
        %3440 = vset.pattern.permute.xlu0 30
        %3441 = vperm.xlu0 %3440, %v257
        %v3442 = vpop.permute.xlu0 %3441
        %v3445 = vunpack.c.l.s4 839922192
        %v3446 = vunpack.c.0.s8 %v3445
        %v3447 = vlaneseq
        %v3448 = vshrl.u32 %v3447, 7
        %v3449 = vsub.s32 %v3446, %v3448
        %v3450 = vrot.slane %v3442, %v3449
        %3451 = vset.pattern.permute.xlu0 30
        %3452 = vperm.xlu0 %3451, %v258
        %v3453 = vpop.permute.xlu0 %3452
        %v3456 = vunpack.c.l.s4 839922192
        %v3457 = vunpack.c.0.s8 %v3456
        %v3458 = vlaneseq
        %v3459 = vshrl.u32 %v3458, 7
        %v3460 = vsub.s32 %v3457, %v3459
        %v3461 = vrot.slane %v3453, %v3460
        %3462 = vset.pattern.permute.xlu0 30
        %3463 = vperm.xlu0 %3462, %v259
        %v3464 = vpop.permute.xlu0 %3463
        %v3467 = vunpack.c.l.s4 839922192
        %v3468 = vunpack.c.0.s8 %v3467
        %v3469 = vlaneseq
        %v3470 = vshrl.u32 %v3469, 7
        %v3471 = vsub.s32 %v3468, %v3470
        %v3472 = vrot.slane %v3464, %v3471
        %3473 = vset.pattern.permute.xlu0 30
        %3474 = vperm.xlu0 %3473, %v260
        %v3475 = vpop.permute.xlu0 %3474
        %v3478 = vunpack.c.l.s4 839922192
        %v3479 = vunpack.c.0.s8 %v3478
        %v3480 = vlaneseq
        %v3481 = vshrl.u32 %v3480, 7
        %v3482 = vsub.s32 %v3479, %v3481
        %v3483 = vrot.slane %v3475, %v3482
        %3484 = vset.pattern.permute.xlu0 30
        %3485 = vperm.xlu0 %3484, %v261
        %v3486 = vpop.permute.xlu0 %3485
        %v3489 = vunpack.c.l.s4 839922192
        %v3490 = vunpack.c.0.s8 %v3489
        %v3491 = vlaneseq
        %v3492 = vshrl.u32 %v3491, 7
        %v3493 = vsub.s32 %v3490, %v3492
        %v3494 = vrot.slane %v3486, %v3493
        %3495 = vset.pattern.permute.xlu0 30
        %3496 = vperm.xlu0 %3495, %v262
        %v3497 = vpop.permute.xlu0 %3496
        %v3500 = vunpack.c.l.s4 839922192
        %v3501 = vunpack.c.0.s8 %v3500
        %v3502 = vlaneseq
        %v3503 = vshrl.u32 %v3502, 7
        %v3504 = vsub.s32 %v3501, %v3503
        %v3505 = vrot.slane %v3497, %v3504
        %v3506 = vmul.bf16 %v3428, %v247
        %v3507 = vmul.bf16 %v3439, %v248
        %v3508 = vmul.bf16 %v3450, %v249
        %v3509 = vmul.bf16 %v3461, %v250
        %v3510 = vmul.bf16 %v3472, %v251
        %v3511 = vmul.bf16 %v3483, %v252
        %v3512 = vmul.bf16 %v3494, %v253
        %v3513 = vmul.bf16 %v3505, %v254
        %3514 = vset.pattern.permute.xlu0 31
        %3515 = vperm.xlu0 %3514, %v255
        %v3516 = vpop.permute.xlu0 %3515
        %v3519 = vunpack.c.l.s4 839922192
        %v3520 = vunpack.c.0.s8 %v3519
        %v3521 = vlaneseq
        %v3522 = vshrl.u32 %v3521, 7
        %v3523 = vsub.s32 %v3520, %v3522
        %v3524 = vrot.slane %v3516, %v3523
        %3525 = vset.pattern.permute.xlu0 31
        %3526 = vperm.xlu0 %3525, %v256
        %v3527 = vpop.permute.xlu0 %3526
        %v3530 = vunpack.c.l.s4 839922192
        %v3531 = vunpack.c.0.s8 %v3530
        %v3532 = vlaneseq
        %v3533 = vshrl.u32 %v3532, 7
        %v3534 = vsub.s32 %v3531, %v3533
        %v3535 = vrot.slane %v3527, %v3534
        %3536 = vset.pattern.permute.xlu0 31
        %3537 = vperm.xlu0 %3536, %v257
        %v3538 = vpop.permute.xlu0 %3537
        %v3541 = vunpack.c.l.s4 839922192
        %v3542 = vunpack.c.0.s8 %v3541
        %v3543 = vlaneseq
        %v3544 = vshrl.u32 %v3543, 7
        %v3545 = vsub.s32 %v3542, %v3544
        %v3546 = vrot.slane %v3538, %v3545
        %3547 = vset.pattern.permute.xlu0 31
        %3548 = vperm.xlu0 %3547, %v258
        %v3549 = vpop.permute.xlu0 %3548
        %v3552 = vunpack.c.l.s4 839922192
        %v3553 = vunpack.c.0.s8 %v3552
        %v3554 = vlaneseq
        %v3555 = vshrl.u32 %v3554, 7
        %v3556 = vsub.s32 %v3553, %v3555
        %v3557 = vrot.slane %v3549, %v3556
        %3558 = vset.pattern.permute.xlu0 31
        %3559 = vperm.xlu0 %3558, %v259
        %v3560 = vpop.permute.xlu0 %3559
        %v3563 = vunpack.c.l.s4 839922192
        %v3564 = vunpack.c.0.s8 %v3563
        %v3565 = vlaneseq
        %v3566 = vshrl.u32 %v3565, 7
        %v3567 = vsub.s32 %v3564, %v3566
        %v3568 = vrot.slane %v3560, %v3567
        %3569 = vset.pattern.permute.xlu0 31
        %3570 = vperm.xlu0 %3569, %v260
        %v3571 = vpop.permute.xlu0 %3570
        %v3574 = vunpack.c.l.s4 839922192
        %v3575 = vunpack.c.0.s8 %v3574
        %v3576 = vlaneseq
        %v3577 = vshrl.u32 %v3576, 7
        %v3578 = vsub.s32 %v3575, %v3577
        %v3579 = vrot.slane %v3571, %v3578
        %3580 = vset.pattern.permute.xlu0 31
        %3581 = vperm.xlu0 %3580, %v261
        %v3582 = vpop.permute.xlu0 %3581
        %v3585 = vunpack.c.l.s4 839922192
        %v3586 = vunpack.c.0.s8 %v3585
        %v3587 = vlaneseq
        %v3588 = vshrl.u32 %v3587, 7
        %v3589 = vsub.s32 %v3586, %v3588
        %v3590 = vrot.slane %v3582, %v3589
        %3591 = vset.pattern.permute.xlu0 31
        %3592 = vperm.xlu0 %3591, %v262
        %v3593 = vpop.permute.xlu0 %3592
        %v3596 = vunpack.c.l.s4 839922192
        %v3597 = vunpack.c.0.s8 %v3596
        %v3598 = vlaneseq
        %v3599 = vshrl.u32 %v3598, 7
        %v3600 = vsub.s32 %v3597, %v3599
        %v3601 = vrot.slane %v3593, %v3600
        %v3602 = vmul.bf16 %v3524, %v247
        %v3603 = vmul.bf16 %v3535, %v248
        %v3604 = vmul.bf16 %v3546, %v249
        %v3605 = vmul.bf16 %v3557, %v250
        %v3606 = vmul.bf16 %v3568, %v251
        %v3607 = vmul.bf16 %v3579, %v252
        %v3608 = vmul.bf16 %v3590, %v253
        %v3609 = vmul.bf16 %v3601, %v254
        %v3618 = vunpack.c.l.b16 %v247
        %v3619 = vunpack.c.l.b16 %v248
        %v3620 = vunpack.c.l.b16 %v249
        %v3621 = vunpack.c.l.b16 %v250
        %v3622 = vunpack.c.l.b16 %v251
        %v3623 = vunpack.c.l.b16 %v252
        %v3624 = vunpack.c.l.b16 %v253
        %v3625 = vunpack.c.l.b16 %v254
        %v3626 = vpack.c.b16 %v3619, %v3618
        %v3627 = vpack.c.b16 %v3621, %v3620
        %v3628 = vpack.c.b16 %v3623, %v3622
        %v3629 = vpack.c.b16 %v3625, %v3624
        %v3642 = vunpack.c.l.b16 %v626
        %v3643 = vunpack.c.l.b16 %v627
        %v3644 = vunpack.c.l.b16 %v628
        %v3645 = vunpack.c.l.b16 %v629
        %v3646 = vunpack.c.l.b16 %v630
        %v3647 = vunpack.c.l.b16 %v631
        %v3648 = vunpack.c.l.b16 %v632
        %v3649 = vunpack.c.l.b16 %v633
        %v3650 = vpack.c.b16 %v3643, %v3642
        %v3651 = vpack.c.b16 %v3645, %v3644
        %v3652 = vpack.c.b16 %v3647, %v3646
        %v3653 = vpack.c.b16 %v3649, %v3648
        %v3666 = vunpack.c.l.b16 %v722
        %v3667 = vunpack.c.l.b16 %v723
        %v3668 = vunpack.c.l.b16 %v724
        %v3669 = vunpack.c.l.b16 %v725
        %v3670 = vunpack.c.l.b16 %v726
        %v3671 = vunpack.c.l.b16 %v727
        %v3672 = vunpack.c.l.b16 %v728
        %v3673 = vunpack.c.l.b16 %v729
        %v3674 = vpack.c.b16 %v3667, %v3666
        %v3675 = vpack.c.b16 %v3669, %v3668
        %v3676 = vpack.c.b16 %v3671, %v3670
        %v3677 = vpack.c.b16 %v3673, %v3672
        %v3690 = vunpack.c.l.b16 %v818
        %v3691 = vunpack.c.l.b16 %v819
        %v3692 = vunpack.c.l.b16 %v820
        %v3693 = vunpack.c.l.b16 %v821
        %v3694 = vunpack.c.l.b16 %v822
        %v3695 = vunpack.c.l.b16 %v823
        %v3696 = vunpack.c.l.b16 %v824
        %v3697 = vunpack.c.l.b16 %v825
        %v3698 = vpack.c.b16 %v3691, %v3690
        %v3699 = vpack.c.b16 %v3693, %v3692
        %v3700 = vpack.c.b16 %v3695, %v3694
        %v3701 = vpack.c.b16 %v3697, %v3696
        %v3714 = vunpack.c.l.b16 %v914
        %v3715 = vunpack.c.l.b16 %v915
        %v3716 = vunpack.c.l.b16 %v916
        %v3717 = vunpack.c.l.b16 %v917
        %v3718 = vunpack.c.l.b16 %v918
        %v3719 = vunpack.c.l.b16 %v919
        %v3720 = vunpack.c.l.b16 %v920
        %v3721 = vunpack.c.l.b16 %v921
        %v3722 = vpack.c.b16 %v3715, %v3714
        %v3723 = vpack.c.b16 %v3717, %v3716
        %v3724 = vpack.c.b16 %v3719, %v3718
        %v3725 = vpack.c.b16 %v3721, %v3720
        %v3738 = vunpack.c.l.b16 %v1010
        %v3739 = vunpack.c.l.b16 %v1011
        %v3740 = vunpack.c.l.b16 %v1012
        %v3741 = vunpack.c.l.b16 %v1013
        %v3742 = vunpack.c.l.b16 %v1014
        %v3743 = vunpack.c.l.b16 %v1015
        %v3744 = vunpack.c.l.b16 %v1016
        %v3745 = vunpack.c.l.b16 %v1017
        %v3746 = vpack.c.b16 %v3739, %v3738
        %v3747 = vpack.c.b16 %v3741, %v3740
        %v3748 = vpack.c.b16 %v3743, %v3742
        %v3749 = vpack.c.b16 %v3745, %v3744
        %v3762 = vunpack.c.l.b16 %v1106
        %v3763 = vunpack.c.l.b16 %v1107
        %v3764 = vunpack.c.l.b16 %v1108
        %v3765 = vunpack.c.l.b16 %v1109
        %v3766 = vunpack.c.l.b16 %v1110
        %v3767 = vunpack.c.l.b16 %v1111
        %v3768 = vunpack.c.l.b16 %v1112
        %v3769 = vunpack.c.l.b16 %v1113
        %v3770 = vpack.c.b16 %v3763, %v3762
        %v3771 = vpack.c.b16 %v3765, %v3764
        %v3772 = vpack.c.b16 %v3767, %v3766
        %v3773 = vpack.c.b16 %v3769, %v3768
        %v3786 = vunpack.c.l.b16 %v1202
        %v3787 = vunpack.c.l.b16 %v1203
        %v3788 = vunpack.c.l.b16 %v1204
        %v3789 = vunpack.c.l.b16 %v1205
        %v3790 = vunpack.c.l.b16 %v1206
        %v3791 = vunpack.c.l.b16 %v1207
        %v3792 = vunpack.c.l.b16 %v1208
        %v3793 = vunpack.c.l.b16 %v1209
        %v3794 = vpack.c.b16 %v3787, %v3786
        %v3795 = vpack.c.b16 %v3789, %v3788
        %v3796 = vpack.c.b16 %v3791, %v3790
        %v3797 = vpack.c.b16 %v3793, %v3792
        %v3810 = vunpack.c.l.b16 %v1298
        %v3811 = vunpack.c.l.b16 %v1299
        %v3812 = vunpack.c.l.b16 %v1300
        %v3813 = vunpack.c.l.b16 %v1301
        %v3814 = vunpack.c.l.b16 %v1302
        %v3815 = vunpack.c.l.b16 %v1303
        %v3816 = vunpack.c.l.b16 %v1304
        %v3817 = vunpack.c.l.b16 %v1305
        %v3818 = vpack.c.b16 %v3811, %v3810
        %v3819 = vpack.c.b16 %v3813, %v3812
        %v3820 = vpack.c.b16 %v3815, %v3814
        %v3821 = vpack.c.b16 %v3817, %v3816
        %v3834 = vunpack.c.l.b16 %v1394
        %v3835 = vunpack.c.l.b16 %v1395
        %v3836 = vunpack.c.l.b16 %v1396
        %v3837 = vunpack.c.l.b16 %v1397
        %v3838 = vunpack.c.l.b16 %v1398
        %v3839 = vunpack.c.l.b16 %v1399
        %v3840 = vunpack.c.l.b16 %v1400
        %v3841 = vunpack.c.l.b16 %v1401
        %v3842 = vpack.c.b16 %v3835, %v3834
        %v3843 = vpack.c.b16 %v3837, %v3836
        %v3844 = vpack.c.b16 %v3839, %v3838
        %v3845 = vpack.c.b16 %v3841, %v3840
        %v3858 = vunpack.c.l.b16 %v1490
        %v3859 = vunpack.c.l.b16 %v1491
        %v3860 = vunpack.c.l.b16 %v1492
        %v3861 = vunpack.c.l.b16 %v1493
        %v3862 = vunpack.c.l.b16 %v1494
        %v3863 = vunpack.c.l.b16 %v1495
        %v3864 = vunpack.c.l.b16 %v1496
        %v3865 = vunpack.c.l.b16 %v1497
        %v3866 = vpack.c.b16 %v3859, %v3858
        %v3867 = vpack.c.b16 %v3861, %v3860
        %v3868 = vpack.c.b16 %v3863, %v3862
        %v3869 = vpack.c.b16 %v3865, %v3864
        %v3882 = vunpack.c.l.b16 %v1586
        %v3883 = vunpack.c.l.b16 %v1587
        %v3884 = vunpack.c.l.b16 %v1588
        %v3885 = vunpack.c.l.b16 %v1589
        %v3886 = vunpack.c.l.b16 %v1590
        %v3887 = vunpack.c.l.b16 %v1591
        %v3888 = vunpack.c.l.b16 %v1592
        %v3889 = vunpack.c.l.b16 %v1593
        %v3890 = vpack.c.b16 %v3883, %v3882
        %v3891 = vpack.c.b16 %v3885, %v3884
        %v3892 = vpack.c.b16 %v3887, %v3886
        %v3893 = vpack.c.b16 %v3889, %v3888
        %v3906 = vunpack.c.l.b16 %v1682
        %v3907 = vunpack.c.l.b16 %v1683
        %v3908 = vunpack.c.l.b16 %v1684
        %v3909 = vunpack.c.l.b16 %v1685
        %v3910 = vunpack.c.l.b16 %v1686
        %v3911 = vunpack.c.l.b16 %v1687
        %v3912 = vunpack.c.l.b16 %v1688
        %v3913 = vunpack.c.l.b16 %v1689
        %v3914 = vpack.c.b16 %v3907, %v3906
        %v3915 = vpack.c.b16 %v3909, %v3908
        %v3916 = vpack.c.b16 %v3911, %v3910
        %v3917 = vpack.c.b16 %v3913, %v3912
        %v3930 = vunpack.c.l.b16 %v1778
        %v3931 = vunpack.c.l.b16 %v1779
        %v3932 = vunpack.c.l.b16 %v1780
        %v3933 = vunpack.c.l.b16 %v1781
        %v3934 = vunpack.c.l.b16 %v1782
        %v3935 = vunpack.c.l.b16 %v1783
        %v3936 = vunpack.c.l.b16 %v1784
        %v3937 = vunpack.c.l.b16 %v1785
        %v3938 = vpack.c.b16 %v3931, %v3930
        %v3939 = vpack.c.b16 %v3933, %v3932
        %v3940 = vpack.c.b16 %v3935, %v3934
        %v3941 = vpack.c.b16 %v3937, %v3936
        %v3954 = vunpack.c.l.b16 %v1874
        %v3955 = vunpack.c.l.b16 %v1875
        %v3956 = vunpack.c.l.b16 %v1876
        %v3957 = vunpack.c.l.b16 %v1877
        %v3958 = vunpack.c.l.b16 %v1878
        %v3959 = vunpack.c.l.b16 %v1879
        %v3960 = vunpack.c.l.b16 %v1880
        %v3961 = vunpack.c.l.b16 %v1881
        %v3962 = vpack.c.b16 %v3955, %v3954
        %v3963 = vpack.c.b16 %v3957, %v3956
        %v3964 = vpack.c.b16 %v3959, %v3958
        %v3965 = vpack.c.b16 %v3961, %v3960
        %v3978 = vunpack.c.l.b16 %v1970
        %v3979 = vunpack.c.l.b16 %v1971
        %v3980 = vunpack.c.l.b16 %v1972
        %v3981 = vunpack.c.l.b16 %v1973
        %v3982 = vunpack.c.l.b16 %v1974
        %v3983 = vunpack.c.l.b16 %v1975
        %v3984 = vunpack.c.l.b16 %v1976
        %v3985 = vunpack.c.l.b16 %v1977
        %v3986 = vpack.c.b16 %v3979, %v3978
        %v3987 = vpack.c.b16 %v3981, %v3980
        %v3988 = vpack.c.b16 %v3983, %v3982
        %v3989 = vpack.c.b16 %v3985, %v3984
        %v4002 = vunpack.c.l.b16 %v2066
        %v4003 = vunpack.c.l.b16 %v2067
        %v4004 = vunpack.c.l.b16 %v2068
        %v4005 = vunpack.c.l.b16 %v2069
        %v4006 = vunpack.c.l.b16 %v2070
        %v4007 = vunpack.c.l.b16 %v2071
        %v4008 = vunpack.c.l.b16 %v2072
        %v4009 = vunpack.c.l.b16 %v2073
        %v4010 = vpack.c.b16 %v4003, %v4002
        %v4011 = vpack.c.b16 %v4005, %v4004
        %v4012 = vpack.c.b16 %v4007, %v4006
        %v4013 = vpack.c.b16 %v4009, %v4008
        %v4026 = vunpack.c.l.b16 %v2162
        %v4027 = vunpack.c.l.b16 %v2163
        %v4028 = vunpack.c.l.b16 %v2164
        %v4029 = vunpack.c.l.b16 %v2165
        %v4030 = vunpack.c.l.b16 %v2166
        %v4031 = vunpack.c.l.b16 %v2167
        %v4032 = vunpack.c.l.b16 %v2168
        %v4033 = vunpack.c.l.b16 %v2169
        %v4034 = vpack.c.b16 %v4027, %v4026
        %v4035 = vpack.c.b16 %v4029, %v4028
        %v4036 = vpack.c.b16 %v4031, %v4030
        %v4037 = vpack.c.b16 %v4033, %v4032
        %v4050 = vunpack.c.l.b16 %v2258
        %v4051 = vunpack.c.l.b16 %v2259
        %v4052 = vunpack.c.l.b16 %v2260
        %v4053 = vunpack.c.l.b16 %v2261
        %v4054 = vunpack.c.l.b16 %v2262
        %v4055 = vunpack.c.l.b16 %v2263
        %v4056 = vunpack.c.l.b16 %v2264
        %v4057 = vunpack.c.l.b16 %v2265
        %v4058 = vpack.c.b16 %v4051, %v4050
        %v4059 = vpack.c.b16 %v4053, %v4052
        %v4060 = vpack.c.b16 %v4055, %v4054
        %v4061 = vpack.c.b16 %v4057, %v4056
        %v4074 = vunpack.c.l.b16 %v2354
        %v4075 = vunpack.c.l.b16 %v2355
        %v4076 = vunpack.c.l.b16 %v2356
        %v4077 = vunpack.c.l.b16 %v2357
        %v4078 = vunpack.c.l.b16 %v2358
        %v4079 = vunpack.c.l.b16 %v2359
        %v4080 = vunpack.c.l.b16 %v2360
        %v4081 = vunpack.c.l.b16 %v2361
        %v4082 = vpack.c.b16 %v4075, %v4074
        %v4083 = vpack.c.b16 %v4077, %v4076
        %v4084 = vpack.c.b16 %v4079, %v4078
        %v4085 = vpack.c.b16 %v4081, %v4080
        %v4098 = vunpack.c.l.b16 %v2450
        %v4099 = vunpack.c.l.b16 %v2451
        %v4100 = vunpack.c.l.b16 %v2452
        %v4101 = vunpack.c.l.b16 %v2453
        %v4102 = vunpack.c.l.b16 %v2454
        %v4103 = vunpack.c.l.b16 %v2455
        %v4104 = vunpack.c.l.b16 %v2456
        %v4105 = vunpack.c.l.b16 %v2457
        %v4106 = vpack.c.b16 %v4099, %v4098
        %v4107 = vpack.c.b16 %v4101, %v4100
        %v4108 = vpack.c.b16 %v4103, %v4102
        %v4109 = vpack.c.b16 %v4105, %v4104
        %v4122 = vunpack.c.l.b16 %v2546
        %v4123 = vunpack.c.l.b16 %v2547
        %v4124 = vunpack.c.l.b16 %v2548
        %v4125 = vunpack.c.l.b16 %v2549
        %v4126 = vunpack.c.l.b16 %v2550
        %v4127 = vunpack.c.l.b16 %v2551
        %v4128 = vunpack.c.l.b16 %v2552
        %v4129 = vunpack.c.l.b16 %v2553
        %v4130 = vpack.c.b16 %v4123, %v4122
        %v4131 = vpack.c.b16 %v4125, %v4124
        %v4132 = vpack.c.b16 %v4127, %v4126
        %v4133 = vpack.c.b16 %v4129, %v4128
        %v4146 = vunpack.c.l.b16 %v2642
        %v4147 = vunpack.c.l.b16 %v2643
        %v4148 = vunpack.c.l.b16 %v2644
        %v4149 = vunpack.c.l.b16 %v2645
        %v4150 = vunpack.c.l.b16 %v2646
        %v4151 = vunpack.c.l.b16 %v2647
        %v4152 = vunpack.c.l.b16 %v2648
        %v4153 = vunpack.c.l.b16 %v2649
        %v4154 = vpack.c.b16 %v4147, %v4146
        %v4155 = vpack.c.b16 %v4149, %v4148
        %v4156 = vpack.c.b16 %v4151, %v4150
        %v4157 = vpack.c.b16 %v4153, %v4152
        %v4170 = vunpack.c.l.b16 %v2738
        %v4171 = vunpack.c.l.b16 %v2739
        %v4172 = vunpack.c.l.b16 %v2740
        %v4173 = vunpack.c.l.b16 %v2741
        %v4174 = vunpack.c.l.b16 %v2742
        %v4175 = vunpack.c.l.b16 %v2743
        %v4176 = vunpack.c.l.b16 %v2744
        %v4177 = vunpack.c.l.b16 %v2745
        %v4178 = vpack.c.b16 %v4171, %v4170
        %v4179 = vpack.c.b16 %v4173, %v4172
        %v4180 = vpack.c.b16 %v4175, %v4174
        %v4181 = vpack.c.b16 %v4177, %v4176
        %v4194 = vunpack.c.l.b16 %v2834
        %v4195 = vunpack.c.l.b16 %v2835
        %v4196 = vunpack.c.l.b16 %v2836
        %v4197 = vunpack.c.l.b16 %v2837
        %v4198 = vunpack.c.l.b16 %v2838
        %v4199 = vunpack.c.l.b16 %v2839
        %v4200 = vunpack.c.l.b16 %v2840
        %v4201 = vunpack.c.l.b16 %v2841
        %v4202 = vpack.c.b16 %v4195, %v4194
        %v4203 = vpack.c.b16 %v4197, %v4196
        %v4204 = vpack.c.b16 %v4199, %v4198
        %v4205 = vpack.c.b16 %v4201, %v4200
        %v4218 = vunpack.c.l.b16 %v2930
        %v4219 = vunpack.c.l.b16 %v2931
        %v4220 = vunpack.c.l.b16 %v2932
        %v4221 = vunpack.c.l.b16 %v2933
        %v4222 = vunpack.c.l.b16 %v2934
        %v4223 = vunpack.c.l.b16 %v2935
        %v4224 = vunpack.c.l.b16 %v2936
        %v4225 = vunpack.c.l.b16 %v2937
        %v4226 = vpack.c.b16 %v4219, %v4218
        %v4227 = vpack.c.b16 %v4221, %v4220
        %v4228 = vpack.c.b16 %v4223, %v4222
        %v4229 = vpack.c.b16 %v4225, %v4224
        %v4242 = vunpack.c.l.b16 %v3026
        %v4243 = vunpack.c.l.b16 %v3027
        %v4244 = vunpack.c.l.b16 %v3028
        %v4245 = vunpack.c.l.b16 %v3029
        %v4246 = vunpack.c.l.b16 %v3030
        %v4247 = vunpack.c.l.b16 %v3031
        %v4248 = vunpack.c.l.b16 %v3032
        %v4249 = vunpack.c.l.b16 %v3033
        %v4250 = vpack.c.b16 %v4243, %v4242
        %v4251 = vpack.c.b16 %v4245, %v4244
        %v4252 = vpack.c.b16 %v4247, %v4246
        %v4253 = vpack.c.b16 %v4249, %v4248
        %v4266 = vunpack.c.l.b16 %v3122
        %v4267 = vunpack.c.l.b16 %v3123
        %v4268 = vunpack.c.l.b16 %v3124
        %v4269 = vunpack.c.l.b16 %v3125
        %v4270 = vunpack.c.l.b16 %v3126
        %v4271 = vunpack.c.l.b16 %v3127
        %v4272 = vunpack.c.l.b16 %v3128
        %v4273 = vunpack.c.l.b16 %v3129
        %v4274 = vpack.c.b16 %v4267, %v4266
        %v4275 = vpack.c.b16 %v4269, %v4268
        %v4276 = vpack.c.b16 %v4271, %v4270
        %v4277 = vpack.c.b16 %v4273, %v4272
        %v4290 = vunpack.c.l.b16 %v3218
        %v4291 = vunpack.c.l.b16 %v3219
        %v4292 = vunpack.c.l.b16 %v3220
        %v4293 = vunpack.c.l.b16 %v3221
        %v4294 = vunpack.c.l.b16 %v3222
        %v4295 = vunpack.c.l.b16 %v3223
        %v4296 = vunpack.c.l.b16 %v3224
        %v4297 = vunpack.c.l.b16 %v3225
        %v4298 = vpack.c.b16 %v4291, %v4290
        %v4299 = vpack.c.b16 %v4293, %v4292
        %v4300 = vpack.c.b16 %v4295, %v4294
        %v4301 = vpack.c.b16 %v4297, %v4296
        %v4314 = vunpack.c.l.b16 %v3314
        %v4315 = vunpack.c.l.b16 %v3315
        %v4316 = vunpack.c.l.b16 %v3316
        %v4317 = vunpack.c.l.b16 %v3317
        %v4318 = vunpack.c.l.b16 %v3318
        %v4319 = vunpack.c.l.b16 %v3319
        %v4320 = vunpack.c.l.b16 %v3320
        %v4321 = vunpack.c.l.b16 %v3321
        %v4322 = vpack.c.b16 %v4315, %v4314
        %v4323 = vpack.c.b16 %v4317, %v4316
        %v4324 = vpack.c.b16 %v4319, %v4318
        %v4325 = vpack.c.b16 %v4321, %v4320
        %v4338 = vunpack.c.l.b16 %v3410
        %v4339 = vunpack.c.l.b16 %v3411
        %v4340 = vunpack.c.l.b16 %v3412
        %v4341 = vunpack.c.l.b16 %v3413
        %v4342 = vunpack.c.l.b16 %v3414
        %v4343 = vunpack.c.l.b16 %v3415
        %v4344 = vunpack.c.l.b16 %v3416
        %v4345 = vunpack.c.l.b16 %v3417
        %v4346 = vpack.c.b16 %v4339, %v4338
        %v4347 = vpack.c.b16 %v4341, %v4340
        %v4348 = vpack.c.b16 %v4343, %v4342
        %v4349 = vpack.c.b16 %v4345, %v4344
        %v4362 = vunpack.c.l.b16 %v3506
        %v4363 = vunpack.c.l.b16 %v3507
        %v4364 = vunpack.c.l.b16 %v3508
        %v4365 = vunpack.c.l.b16 %v3509
        %v4366 = vunpack.c.l.b16 %v3510
        %v4367 = vunpack.c.l.b16 %v3511
        %v4368 = vunpack.c.l.b16 %v3512
        %v4369 = vunpack.c.l.b16 %v3513
        %v4370 = vpack.c.b16 %v4363, %v4362
        %v4371 = vpack.c.b16 %v4365, %v4364
        %v4372 = vpack.c.b16 %v4367, %v4366
        %v4373 = vpack.c.b16 %v4369, %v4368
        %v4386 = vunpack.c.l.b16 %v3602
        %v4387 = vunpack.c.l.b16 %v3603
        %v4388 = vunpack.c.l.b16 %v3604
        %v4389 = vunpack.c.l.b16 %v3605
        %v4390 = vunpack.c.l.b16 %v3606
        %v4391 = vunpack.c.l.b16 %v3607
        %v4392 = vunpack.c.l.b16 %v3608
        %v4393 = vunpack.c.l.b16 %v3609
        %v4394 = vpack.c.b16 %v4387, %v4386
        %v4395 = vpack.c.b16 %v4389, %v4388
        %v4396 = vpack.c.b16 %v4391, %v4390
        %v4397 = vpack.c.b16 %v4393, %v4392
        %v4410 = vunpack.c.l.b16 %v255
        %v4411 = vunpack.c.l.b16 %v256
        %v4412 = vunpack.c.l.b16 %v257
        %v4413 = vunpack.c.l.b16 %v258
        %v4414 = vunpack.c.l.b16 %v259
        %v4415 = vunpack.c.l.b16 %v260
        %v4416 = vunpack.c.l.b16 %v261
        %v4417 = vunpack.c.l.b16 %v262
        %v4418 = vpack.c.b16 %v4411, %v4410
        %v4419 = vpack.c.b16 %v4413, %v4412
        %v4420 = vpack.c.b16 %v4415, %v4414
        %v4421 = vpack.c.b16 %v4417, %v4416
        %v4423 = vlaneseq
        %v4424 = vshrl.u32 %v4423, 7
        %v4425 = vsub.s32 0, %v4424
        %v4426 = vrot.slane %v529, %v4425
        %vm4428 = vcmask 261120
        %v4430 = vsel %vm4428, %v4418, 0
        %v4433 = vsel %vm4428, %v4419, 0
        %v4436 = vsel %vm4428, %v4420, 0
        %v4439 = vsel %vm4428, %v4421, 0
        %4441 = vmatprep.subr.bf16.mxu0 0
        %4442 = vmatpush1.bf16.msra.mxu0 %v263
        %4443 = vmatprep.subr.bf16.mxu0 0
        %4444 = vmatpush1.bf16.msra.mxu0 %v264
        %4445 = vmatprep.subr.bf16.mxu0 0
        %4446 = vmatpush1.bf16.msra.mxu0 %v265
        %4447 = vmatprep.subr.bf16.mxu0 0
        %4448 = vmatpush1.bf16.msra.mxu0 %v266
        %4449 = vmatprep.subr.bf16.mxu0 0
        %4450 = vmatpush1.bf16.msra.mxu0 %v267
        %4451 = vmatprep.subr.bf16.mxu0 0
        %4452 = vmatpush1.bf16.msra.mxu0 %v268
        %4453 = vmatprep.subr.bf16.mxu0 0
        %4454 = vmatpush1.bf16.msra.mxu0 %v269
        %4455 = vmatprep.subr.bf16.mxu0 0
        %4456 = vmatpush1.bf16.msra.mxu0 %v270
        %4457 = vmatprep.subr.bf16.mxu0 0
        %4458 = vmatpush1.bf16.msra.mxu0 %v271
        %4459 = vmatprep.subr.bf16.mxu0 0
        %4460 = vmatpush1.bf16.msra.mxu0 %v272
        %4461 = vmatprep.subr.bf16.mxu0 0
        %4462 = vmatpush1.bf16.msra.mxu0 %v273
        %4463 = vmatprep.subr.bf16.mxu0 0
        %4464 = vmatpush1.bf16.msra.mxu0 %v274
        %4465 = vmatprep.subr.bf16.mxu0 0
        %4466 = vmatpush1.bf16.msra.mxu0 %v275
        %4467 = vmatprep.subr.bf16.mxu0 0
        %4468 = vmatpush1.bf16.msra.mxu0 %v276
        %4469 = vmatprep.subr.bf16.mxu0 0
        %4470 = vmatpush1.bf16.msra.mxu0 %v277
        %4471 = vmatprep.subr.bf16.mxu0 0
        %4472 = vmatpush1.bf16.msra.mxu0 %v278
        %4473 = vmatprep.mubr.bf16.mxu0 %v3650
        %4474 = vmatmul.mubr.bf16.gmra.mrb[0].mxu0 %v3626
        %v4475 = vpop.f32.mrb[0].mxu0
        %v4476 = vadd.f32 %v4426, %v4475
        %v4477 = vpop.f32.mrb[0].mxu0
        %v4478 = vpop.f32.mrb[0].mxu0
        %v4479 = vadd.f32 %v4426, %v4478
        %v4480 = vpop.f32.mrb[0].mxu0
        %4481 = vmatprep.mubr.bf16.mxu0 %v3651
        %4482 = vmatmul.mubr.bf16.gmra.mrb[0].mxu0 %v3627
        %v4483 = vpop.f32.mrb[0].mxu0
        %v4484 = vadd.f32 %v4426, %v4483
        %v4485 = vpop.f32.mrb[0].mxu0
        %v4486 = vpop.f32.mrb[0].mxu0
        %v4487 = vadd.f32 %v4426, %v4486
        %v4488 = vpop.f32.mrb[0].mxu0
        %4489 = vmatprep.mubr.bf16.mxu0 %v3652
        %4490 = vmatmul.mubr.bf16.gmra.mrb[0].mxu0 %v3628
        %v4491 = vpop.f32.mrb[0].mxu0
        %v4492 = vadd.f32 %v4426, %v4491
        %v4493 = vpop.f32.mrb[0].mxu0
        %v4494 = vpop.f32.mrb[0].mxu0
        %v4495 = vadd.f32 %v4426, %v4494
        %v4496 = vpop.f32.mrb[0].mxu0
        %4497 = vmatprep.mubr.bf16.mxu0 %v3653
        %4498 = vmatmul.mubr.bf16.gmra.mrb[0].mxu0 %v3629
        %v4499 = vpop.f32.mrb[0].mxu0
        %v4500 = vadd.f32 %v4426, %v4499
        %v4501 = vpop.f32.mrb[0].mxu0
        %v4502 = vpop.f32.mrb[0].mxu0
        %v4503 = vadd.f32 %v4426, %v4502
        %v4504 = vpop.f32.mrb[0].mxu0
        %4505 = vdwg.mxu0
        %4506 = vmatprep.subr.bf16.mxu0 0
        %4507 = vmatpush1.bf16.msra.mxu0 %v279
        %4508 = vmatprep.subr.bf16.mxu0 0
        %4509 = vmatpush1.bf16.msra.mxu0 %v280
        %4510 = vmatprep.subr.bf16.mxu0 0
        %4511 = vmatpush1.bf16.msra.mxu0 %v281
        %4512 = vmatprep.subr.bf16.mxu0 0
        %4513 = vmatpush1.bf16.msra.mxu0 %v282
        %4514 = vmatprep.subr.bf16.mxu0 0
        %4515 = vmatpush1.bf16.msra.mxu0 %v283
        %4516 = vmatprep.subr.bf16.mxu0 0
        %4517 = vmatpush1.bf16.msra.mxu0 %v284
        %4518 = vmatprep.subr.bf16.mxu0 0
        %4519 = vmatpush1.bf16.msra.mxu0 %v285
        %4520 = vmatprep.subr.bf16.mxu0 0
        %4521 = vmatpush1.bf16.msra.mxu0 %v286
        %4522 = vmatprep.subr.bf16.mxu0 0
        %4523 = vmatpush1.bf16.msra.mxu0 %v287
        %4524 = vmatprep.subr.bf16.mxu0 0
        %4525 = vmatpush1.bf16.msra.mxu0 %v288
        %4526 = vmatprep.subr.bf16.mxu0 0
        %4527 = vmatpush1.bf16.msra.mxu0 %v289
        %4528 = vmatprep.subr.bf16.mxu0 0
        %4529 = vmatpush1.bf16.msra.mxu0 %v290
        %4530 = vmatprep.subr.bf16.mxu0 0
        %4531 = vmatpush1.bf16.msra.mxu0 %v291
        %4532 = vmatprep.subr.bf16.mxu0 0
        %4533 = vmatpush1.bf16.msra.mxu0 %v292
        %4534 = vmatprep.subr.bf16.mxu0 0
        %4535 = vmatpush1.bf16.msra.mxu0 %v293
        %4536 = vmatprep.subr.bf16.mxu0 0
        %4537 = vmatpush1.bf16.msra.mxu0 %v294
        %4538 = vmatprep.mubr.bf16.mxu0 %v3698
        %4539 = vmatmul.mubr.bf16.gmra.mrb[0].mxu0 %v3674
        %v4540 = vpop.f32.mrb[0].mxu0
        %v4541 = vadd.f32 %v4476, %v4540
        %v4542 = vpop.f32.mrb[0].mxu0
        %v4543 = vpop.f32.mrb[0].mxu0
        %v4544 = vadd.f32 %v4479, %v4543
        %v4545 = vpop.f32.mrb[0].mxu0
        %4546 = vmatprep.mubr.bf16.mxu0 %v3699
        %4547 = vmatmul.mubr.bf16.gmra.mrb[0].mxu0 %v3675
        %v4548 = vpop.f32.mrb[0].mxu0
        %v4549 = vadd.f32 %v4484, %v4548
        %v4550 = vpop.f32.mrb[0].mxu0
        %v4551 = vpop.f32.mrb[0].mxu0
        %v4552 = vadd.f32 %v4487, %v4551
        %v4553 = vpop.f32.mrb[0].mxu0
        %4554 = vmatprep.mubr.bf16.mxu0 %v3700
        %4555 = vmatmul.mubr.bf16.gmra.mrb[0].mxu0 %v3676
        %v4556 = vpop.f32.mrb[0].mxu0
        %v4557 = vadd.f32 %v4492, %v4556
        %v4558 = vpop.f32.mrb[0].mxu0
        %v4559 = vpop.f32.mrb[0].mxu0
        %v4560 = vadd.f32 %v4495, %v4559
        %v4561 = vpop.f32.mrb[0].mxu0
        %4562 = vmatprep.mubr.bf16.mxu0 %v3701
        %4563 = vmatmul.mubr.bf16.gmra.mrb[0].mxu0 %v3677
        %v4564 = vpop.f32.mrb[0].mxu0
        %v4565 = vadd.f32 %v4500, %v4564
        %v4566 = vpop.f32.mrb[0].mxu0
        %v4567 = vpop.f32.mrb[0].mxu0
        %v4568 = vadd.f32 %v4503, %v4567
        %v4569 = vpop.f32.mrb[0].mxu0
        %4570 = vdwg.mxu0
        %4571 = vmatprep.subr.bf16.mxu0 0
        %4572 = vmatpush1.bf16.msra.mxu0 %v295
        %4573 = vmatprep.subr.bf16.mxu0 0
        %4574 = vmatpush1.bf16.msra.mxu0 %v296
        %4575 = vmatprep.subr.bf16.mxu0 0
        %4576 = vmatpush1.bf16.msra.mxu0 %v297
        %4577 = vmatprep.subr.bf16.mxu0 0
        %4578 = vmatpush1.bf16.msra.mxu0 %v298
        %4579 = vmatprep.subr.bf16.mxu0 0
        %4580 = vmatpush1.bf16.msra.mxu0 %v299
        %4581 = vmatprep.subr.bf16.mxu0 0
        %4582 = vmatpush1.bf16.msra.mxu0 %v300
        %4583 = vmatprep.subr.bf16.mxu0 0
        %4584 = vmatpush1.bf16.msra.mxu0 %v301
        %4585 = vmatprep.subr.bf16.mxu0 0
        %4586 = vmatpush1.bf16.msra.mxu0 %v302
        %4587 = vmatprep.subr.bf16.mxu0 0
        %4588 = vmatpush1.bf16.msra.mxu0 %v303
        %4589 = vmatprep.subr.bf16.mxu0 0
        %4590 = vmatpush1.bf16.msra.mxu0 %v304
        %4591 = vmatprep.subr.bf16.mxu0 0
        %4592 = vmatpush1.bf16.msra.mxu0 %v305
        %4593 = vmatprep.subr.bf16.mxu0 0
        %4594 = vmatpush1.bf16.msra.mxu0 %v306
        %4595 = vmatprep.subr.bf16.mxu0 0
        %4596 = vmatpush1.bf16.msra.mxu0 %v307
        %4597 = vmatprep.subr.bf16.mxu0 0
        %4598 = vmatpush1.bf16.msra.mxu0 %v308
        %4599 = vmatprep.subr.bf16.mxu0 0
        %4600 = vmatpush1.bf16.msra.mxu0 %v309
        %4601 = vmatprep.subr.bf16.mxu0 0
        %4602 = vmatpush1.bf16.msra.mxu0 %v310
        %4603 = vmatprep.mubr.bf16.mxu0 %v3746
        %4604 = vmatmul.mubr.bf16.gmra.mrb[0].mxu0 %v3722
        %v4605 = vpop.f32.mrb[0].mxu0
        %v4606 = vadd.f32 %v4541, %v4605
        %v4607 = vpop.f32.mrb[0].mxu0
        %v4608 = vpop.f32.mrb[0].mxu0
        %v4609 = vadd.f32 %v4544, %v4608
        %v4610 = vpop.f32.mrb[0].mxu0
        %4611 = vmatprep.mubr.bf16.mxu0 %v3747
        %4612 = vmatmul.mubr.bf16.gmra.mrb[0].mxu0 %v3723
        %v4613 = vpop.f32.mrb[0].mxu0
        %v4614 = vadd.f32 %v4549, %v4613
        %v4615 = vpop.f32.mrb[0].mxu0
        %v4616 = vpop.f32.mrb[0].mxu0
        %v4617 = vadd.f32 %v4552, %v4616
        %v4618 = vpop.f32.mrb[0].mxu0
        %4619 = vmatprep.mubr.bf16.mxu0 %v3748
        %4620 = vmatmul.mubr.bf16.gmra.mrb[0].mxu0 %v3724
        %v4621 = vpop.f32.mrb[0].mxu0
        %v4622 = vadd.f32 %v4557, %v4621
        %v4623 = vpop.f32.mrb[0].mxu0
        %v4624 = vpop.f32.mrb[0].mxu0
        %v4625 = vadd.f32 %v4560, %v4624
        %v4626 = vpop.f32.mrb[0].mxu0
        %4627 = vmatprep.mubr.bf16.mxu0 %v3749
        %4628 = vmatmul.mubr.bf16.gmra.mrb[0].mxu0 %v3725
        %v4629 = vpop.f32.mrb[0].mxu0
        %v4630 = vadd.f32 %v4565, %v4629
        %v4631 = vpop.f32.mrb[0].mxu0
        %v4632 = vpop.f32.mrb[0].mxu0
        %v4633 = vadd.f32 %v4568, %v4632
        %v4634 = vpop.f32.mrb[0].mxu0
        %4635 = vdwg.mxu0
        %4636 = vmatprep.subr.bf16.mxu0 0
        %4637 = vmatpush1.bf16.msra.mxu0 %v311
        %4638 = vmatprep.subr.bf16.mxu0 0
        %4639 = vmatpush1.bf16.msra.mxu0 %v312
        %4640 = vmatprep.subr.bf16.mxu0 0
        %4641 = vmatpush1.bf16.msra.mxu0 %v313
        %4642 = vmatprep.subr.bf16.mxu0 0
        %4643 = vmatpush1.bf16.msra.mxu0 %v314
        %4644 = vmatprep.subr.bf16.mxu0 0
        %4645 = vmatpush1.bf16.msra.mxu0 %v315
        %4646 = vmatprep.subr.bf16.mxu0 0
        %4647 = vmatpush1.bf16.msra.mxu0 %v316
        %4648 = vmatprep.subr.bf16.mxu0 0
        %4649 = vmatpush1.bf16.msra.mxu0 %v317
        %4650 = vmatprep.subr.bf16.mxu0 0
        %4651 = vmatpush1.bf16.msra.mxu0 %v318
        %4652 = vmatprep.subr.bf16.mxu0 0
        %4653 = vmatpush1.bf16.msra.mxu0 %v319
        %4654 = vmatprep.subr.bf16.mxu0 0
        %4655 = vmatpush1.bf16.msra.mxu0 %v320
        %4656 = vmatprep.subr.bf16.mxu0 0
        %4657 = vmatpush1.bf16.msra.mxu0 %v321
        %4658 = vmatprep.subr.bf16.mxu0 0
        %4659 = vmatpush1.bf16.msra.mxu0 %v322
        %4660 = vmatprep.subr.bf16.mxu0 0
        %4661 = vmatpush1.bf16.msra.mxu0 %v323
        %4662 = vmatprep.subr.bf16.mxu0 0
        %4663 = vmatpush1.bf16.msra.mxu0 %v324
        %4664 = vmatprep.subr.bf16.mxu0 0
        %4665 = vmatpush1.bf16.msra.mxu0 %v325
        %4666 = vmatprep.subr.bf16.mxu0 0
        %4667 = vmatpush1.bf16.msra.mxu0 %v326
        %4668 = vmatprep.mubr.bf16.mxu0 %v3794
        %4669 = vmatmul.mubr.bf16.gmra.mrb[0].mxu0 %v3770
        %v4670 = vpop.f32.mrb[0].mxu0
        %v4671 = vadd.f32 %v4606, %v4670
        %v4672 = vpop.f32.mrb[0].mxu0
        %v4673 = vpop.f32.mrb[0].mxu0
        %v4674 = vadd.f32 %v4609, %v4673
        %v4675 = vpop.f32.mrb[0].mxu0
        %4676 = vmatprep.mubr.bf16.mxu0 %v3795
        %4677 = vmatmul.mubr.bf16.gmra.mrb[0].mxu0 %v3771
        %v4678 = vpop.f32.mrb[0].mxu0
        %v4679 = vadd.f32 %v4614, %v4678
        %v4680 = vpop.f32.mrb[0].mxu0
        %v4681 = vpop.f32.mrb[0].mxu0
        %v4682 = vadd.f32 %v4617, %v4681
        %v4683 = vpop.f32.mrb[0].mxu0
        %4684 = vmatprep.mubr.bf16.mxu0 %v3796
        %4685 = vmatmul.mubr.bf16.gmra.mrb[0].mxu0 %v3772
        %v4686 = vpop.f32.mrb[0].mxu0
        %v4687 = vadd.f32 %v4622, %v4686
        %v4688 = vpop.f32.mrb[0].mxu0
        %v4689 = vpop.f32.mrb[0].mxu0
        %v4690 = vadd.f32 %v4625, %v4689
        %v4691 = vpop.f32.mrb[0].mxu0
        %4692 = vmatprep.mubr.bf16.mxu0 %v3797
        %4693 = vmatmul.mubr.bf16.gmra.mrb[0].mxu0 %v3773
        %v4694 = vpop.f32.mrb[0].mxu0
        %v4695 = vadd.f32 %v4630, %v4694
        %v4696 = vpop.f32.mrb[0].mxu0
        %v4697 = vpop.f32.mrb[0].mxu0
        %v4698 = vadd.f32 %v4633, %v4697
        %v4699 = vpop.f32.mrb[0].mxu0
        %4700 = vdwg.mxu0
        %4701 = vmatprep.subr.bf16.mxu0 0
        %4702 = vmatpush1.bf16.msra.mxu0 %v327
        %4703 = vmatprep.subr.bf16.mxu0 0
        %4704 = vmatpush1.bf16.msra.mxu0 %v328
        %4705 = vmatprep.subr.bf16.mxu0 0
        %4706 = vmatpush1.bf16.msra.mxu0 %v329
        %4707 = vmatprep.subr.bf16.mxu0 0
        %4708 = vmatpush1.bf16.msra.mxu0 %v330
        %4709 = vmatprep.subr.bf16.mxu0 0
        %4710 = vmatpush1.bf16.msra.mxu0 %v331
        %4711 = vmatprep.subr.bf16.mxu0 0
        %4712 = vmatpush1.bf16.msra.mxu0 %v332
        %4713 = vmatprep.subr.bf16.mxu0 0
        %4714 = vmatpush1.bf16.msra.mxu0 %v333
        %4715 = vmatprep.subr.bf16.mxu0 0
        %4716 = vmatpush1.bf16.msra.mxu0 %v334
        %4717 = vmatprep.subr.bf16.mxu0 0
        %4718 = vmatpush1.bf16.msra.mxu0 %v335
        %4719 = vmatprep.subr.bf16.mxu0 0
        %4720 = vmatpush1.bf16.msra.mxu0 %v336
        %4721 = vmatprep.subr.bf16.mxu0 0
        %4722 = vmatpush1.bf16.msra.mxu0 %v337
        %4723 = vmatprep.subr.bf16.mxu0 0
        %4724 = vmatpush1.bf16.msra.mxu0 %v338
        %4725 = vmatprep.subr.bf16.mxu0 0
        %4726 = vmatpush1.bf16.msra.mxu0 %v339
        %4727 = vmatprep.subr.bf16.mxu0 0
        %4728 = vmatpush1.bf16.msra.mxu0 %v340
        %4729 = vmatprep.subr.bf16.mxu0 0
        %4730 = vmatpush1.bf16.msra.mxu0 %v341
        %4731 = vmatprep.subr.bf16.mxu0 0
        %4732 = vmatpush1.bf16.msra.mxu0 %v342
        %4733 = vmatprep.mubr.bf16.mxu0 %v3842
        %4734 = vmatmul.mubr.bf16.gmra.mrb[0].mxu0 %v3818
        %v4735 = vpop.f32.mrb[0].mxu0
        %v4736 = vadd.f32 %v4671, %v4735
        %v4737 = vpop.f32.mrb[0].mxu0
        %v4738 = vpop.f32.mrb[0].mxu0
        %v4739 = vadd.f32 %v4674, %v4738
        %v4740 = vpop.f32.mrb[0].mxu0
        %4741 = vmatprep.mubr.bf16.mxu0 %v3843
        %4742 = vmatmul.mubr.bf16.gmra.mrb[0].mxu0 %v3819
        %v4743 = vpop.f32.mrb[0].mxu0
        %v4744 = vadd.f32 %v4679, %v4743
        %v4745 = vpop.f32.mrb[0].mxu0
        %v4746 = vpop.f32.mrb[0].mxu0
        %v4747 = vadd.f32 %v4682, %v4746
        %v4748 = vpop.f32.mrb[0].mxu0
        %4749 = vmatprep.mubr.bf16.mxu0 %v3844
        %4750 = vmatmul.mubr.bf16.gmra.mrb[0].mxu0 %v3820
        %v4751 = vpop.f32.mrb[0].mxu0
        %v4752 = vadd.f32 %v4687, %v4751
        %v4753 = vpop.f32.mrb[0].mxu0
        %v4754 = vpop.f32.mrb[0].mxu0
        %v4755 = vadd.f32 %v4690, %v4754
        %v4756 = vpop.f32.mrb[0].mxu0
        %4757 = vmatprep.mubr.bf16.mxu0 %v3845
        %4758 = vmatmul.mubr.bf16.gmra.mrb[0].mxu0 %v3821
        %v4759 = vpop.f32.mrb[0].mxu0
        %v4760 = vadd.f32 %v4695, %v4759
        %v4761 = vpop.f32.mrb[0].mxu0
        %v4762 = vpop.f32.mrb[0].mxu0
        %v4763 = vadd.f32 %v4698, %v4762
        %v4764 = vpop.f32.mrb[0].mxu0
        %4765 = vdwg.mxu0
        %4766 = vmatprep.subr.bf16.mxu0 0
        %4767 = vmatpush1.bf16.msra.mxu0 %v343
        %4768 = vmatprep.subr.bf16.mxu0 0
        %4769 = vmatpush1.bf16.msra.mxu0 %v344
        %4770 = vmatprep.subr.bf16.mxu0 0
        %4771 = vmatpush1.bf16.msra.mxu0 %v345
        %4772 = vmatprep.subr.bf16.mxu0 0
        %4773 = vmatpush1.bf16.msra.mxu0 %v346
        %4774 = vmatprep.subr.bf16.mxu0 0
        %4775 = vmatpush1.bf16.msra.mxu0 %v347
        %4776 = vmatprep.subr.bf16.mxu0 0
        %4777 = vmatpush1.bf16.msra.mxu0 %v348
        %4778 = vmatprep.subr.bf16.mxu0 0
        %4779 = vmatpush1.bf16.msra.mxu0 %v349
        %4780 = vmatprep.subr.bf16.mxu0 0
        %4781 = vmatpush1.bf16.msra.mxu0 %v350
        %4782 = vmatprep.subr.bf16.mxu0 0
        %4783 = vmatpush1.bf16.msra.mxu0 %v351
        %4784 = vmatprep.subr.bf16.mxu0 0
        %4785 = vmatpush1.bf16.msra.mxu0 %v352
        %4786 = vmatprep.subr.bf16.mxu0 0
        %4787 = vmatpush1.bf16.msra.mxu0 %v353
        %4788 = vmatprep.subr.bf16.mxu0 0
        %4789 = vmatpush1.bf16.msra.mxu0 %v354
        %4790 = vmatprep.subr.bf16.mxu0 0
        %4791 = vmatpush1.bf16.msra.mxu0 %v355
        %4792 = vmatprep.subr.bf16.mxu0 0
        %4793 = vmatpush1.bf16.msra.mxu0 %v356
        %4794 = vmatprep.subr.bf16.mxu0 0
        %4795 = vmatpush1.bf16.msra.mxu0 %v357
        %4796 = vmatprep.subr.bf16.mxu0 0
        %4797 = vmatpush1.bf16.msra.mxu0 %v358
        %4798 = vmatprep.mubr.bf16.mxu0 %v3890
        %4799 = vmatmul.mubr.bf16.gmra.mrb[0].mxu0 %v3866
        %v4800 = vpop.f32.mrb[0].mxu0
        %v4801 = vadd.f32 %v4736, %v4800
        %v4802 = vpop.f32.mrb[0].mxu0
        %v4803 = vpop.f32.mrb[0].mxu0
        %v4804 = vadd.f32 %v4739, %v4803
        %v4805 = vpop.f32.mrb[0].mxu0
        %4806 = vmatprep.mubr.bf16.mxu0 %v3891
        %4807 = vmatmul.mubr.bf16.gmra.mrb[0].mxu0 %v3867
        %v4808 = vpop.f32.mrb[0].mxu0
        %v4809 = vadd.f32 %v4744, %v4808
        %v4810 = vpop.f32.mrb[0].mxu0
        %v4811 = vpop.f32.mrb[0].mxu0
        %v4812 = vadd.f32 %v4747, %v4811
        %v4813 = vpop.f32.mrb[0].mxu0
        %4814 = vmatprep.mubr.bf16.mxu0 %v3892
        %4815 = vmatmul.mubr.bf16.gmra.mrb[0].mxu0 %v3868
        %v4816 = vpop.f32.mrb[0].mxu0
        %v4817 = vadd.f32 %v4752, %v4816
        %v4818 = vpop.f32.mrb[0].mxu0
        %v4819 = vpop.f32.mrb[0].mxu0
        %v4820 = vadd.f32 %v4755, %v4819
        %v4821 = vpop.f32.mrb[0].mxu0
        %4822 = vmatprep.mubr.bf16.mxu0 %v3893
        %4823 = vmatmul.mubr.bf16.gmra.mrb[0].mxu0 %v3869
        %v4824 = vpop.f32.mrb[0].mxu0
        %v4825 = vadd.f32 %v4760, %v4824
        %v4826 = vpop.f32.mrb[0].mxu0
        %v4827 = vpop.f32.mrb[0].mxu0
        %v4828 = vadd.f32 %v4763, %v4827
        %v4829 = vpop.f32.mrb[0].mxu0
        %4830 = vdwg.mxu0
        %4831 = vmatprep.subr.bf16.mxu0 0
        %4832 = vmatpush1.bf16.msra.mxu0 %v359
        %4833 = vmatprep.subr.bf16.mxu0 0
        %4834 = vmatpush1.bf16.msra.mxu0 %v360
        %4835 = vmatprep.subr.bf16.mxu0 0
        %4836 = vmatpush1.bf16.msra.mxu0 %v361
        %4837 = vmatprep.subr.bf16.mxu0 0
        %4838 = vmatpush1.bf16.msra.mxu0 %v362
        %4839 = vmatprep.subr.bf16.mxu0 0
        %4840 = vmatpush1.bf16.msra.mxu0 %v363
        %4841 = vmatprep.subr.bf16.mxu0 0
        %4842 = vmatpush1.bf16.msra.mxu0 %v364
        %4843 = vmatprep.subr.bf16.mxu0 0
        %4844 = vmatpush1.bf16.msra.mxu0 %v365
        %4845 = vmatprep.subr.bf16.mxu0 0
        %4846 = vmatpush1.bf16.msra.mxu0 %v366
        %4847 = vmatprep.subr.bf16.mxu0 0
        %4848 = vmatpush1.bf16.msra.mxu0 %v367
        %4849 = vmatprep.subr.bf16.mxu0 0
        %4850 = vmatpush1.bf16.msra.mxu0 %v368
        %4851 = vmatprep.subr.bf16.mxu0 0
        %4852 = vmatpush1.bf16.msra.mxu0 %v369
        %4853 = vmatprep.subr.bf16.mxu0 0
        %4854 = vmatpush1.bf16.msra.mxu0 %v370
        %4855 = vmatprep.subr.bf16.mxu0 0
        %4856 = vmatpush1.bf16.msra.mxu0 %v371
        %4857 = vmatprep.subr.bf16.mxu0 0
        %4858 = vmatpush1.bf16.msra.mxu0 %v372
        %4859 = vmatprep.subr.bf16.mxu0 0
        %4860 = vmatpush1.bf16.msra.mxu0 %v373
        %4861 = vmatprep.subr.bf16.mxu0 0
        %4862 = vmatpush1.bf16.msra.mxu0 %v374
        %4863 = vmatprep.mubr.bf16.mxu0 %v3938
        %4864 = vmatmul.mubr.bf16.gmra.mrb[0].mxu0 %v3914
        %v4865 = vpop.f32.mrb[0].mxu0
        %v4866 = vadd.f32 %v4801, %v4865
        %v4867 = vpop.f32.mrb[0].mxu0
        %v4868 = vpop.f32.mrb[0].mxu0
        %v4869 = vadd.f32 %v4804, %v4868
        %v4870 = vpop.f32.mrb[0].mxu0
        %4871 = vmatprep.mubr.bf16.mxu0 %v3939
        %4872 = vmatmul.mubr.bf16.gmra.mrb[0].mxu0 %v3915
        %v4873 = vpop.f32.mrb[0].mxu0
        %v4874 = vadd.f32 %v4809, %v4873
        %v4875 = vpop.f32.mrb[0].mxu0
        %v4876 = vpop.f32.mrb[0].mxu0
        %v4877 = vadd.f32 %v4812, %v4876
        %v4878 = vpop.f32.mrb[0].mxu0
        %4879 = vmatprep.mubr.bf16.mxu0 %v3940
        %4880 = vmatmul.mubr.bf16.gmra.mrb[0].mxu0 %v3916
        %v4881 = vpop.f32.mrb[0].mxu0
        %v4882 = vadd.f32 %v4817, %v4881
        %v4883 = vpop.f32.mrb[0].mxu0
        %v4884 = vpop.f32.mrb[0].mxu0
        %v4885 = vadd.f32 %v4820, %v4884
        %v4886 = vpop.f32.mrb[0].mxu0
        %4887 = vmatprep.mubr.bf16.mxu0 %v3941
        %4888 = vmatmul.mubr.bf16.gmra.mrb[0].mxu0 %v3917
        %v4889 = vpop.f32.mrb[0].mxu0
        %v4890 = vadd.f32 %v4825, %v4889
        %v4891 = vpop.f32.mrb[0].mxu0
        %v4892 = vpop.f32.mrb[0].mxu0
        %v4893 = vadd.f32 %v4828, %v4892
        %v4894 = vpop.f32.mrb[0].mxu0
        %4895 = vdwg.mxu0
        %4896 = vmatprep.subr.bf16.mxu0 0
        %4897 = vmatpush1.bf16.msra.mxu0 %v375
        %4898 = vmatprep.subr.bf16.mxu0 0
        %4899 = vmatpush1.bf16.msra.mxu0 %v376
        %4900 = vmatprep.subr.bf16.mxu0 0
        %4901 = vmatpush1.bf16.msra.mxu0 %v377
        %4902 = vmatprep.subr.bf16.mxu0 0
        %4903 = vmatpush1.bf16.msra.mxu0 %v378
        %4904 = vmatprep.subr.bf16.mxu0 0
        %4905 = vmatpush1.bf16.msra.mxu0 %v379
        %4906 = vmatprep.subr.bf16.mxu0 0
        %4907 = vmatpush1.bf16.msra.mxu0 %v380
        %4908 = vmatprep.subr.bf16.mxu0 0
        %4909 = vmatpush1.bf16.msra.mxu0 %v381
        %4910 = vmatprep.subr.bf16.mxu0 0
        %4911 = vmatpush1.bf16.msra.mxu0 %v382
        %4912 = vmatprep.subr.bf16.mxu0 0
        %4913 = vmatpush1.bf16.msra.mxu0 %v383
        %4914 = vmatprep.subr.bf16.mxu0 0
        %4915 = vmatpush1.bf16.msra.mxu0 %v384
        %4916 = vmatprep.subr.bf16.mxu0 0
        %4917 = vmatpush1.bf16.msra.mxu0 %v385
        %4918 = vmatprep.subr.bf16.mxu0 0
        %4919 = vmatpush1.bf16.msra.mxu0 %v386
        %4920 = vmatprep.subr.bf16.mxu0 0
        %4921 = vmatpush1.bf16.msra.mxu0 %v387
        %4922 = vmatprep.subr.bf16.mxu0 0
        %4923 = vmatpush1.bf16.msra.mxu0 %v388
        %4924 = vmatprep.subr.bf16.mxu0 0
        %4925 = vmatpush1.bf16.msra.mxu0 %v389
        %4926 = vmatprep.subr.bf16.mxu0 0
        %4927 = vmatpush1.bf16.msra.mxu0 %v390
        %4928 = vmatprep.mubr.bf16.mxu0 %v3986
        %4929 = vmatmul.mubr.bf16.gmra.mrb[0].mxu0 %v3962
        %v4930 = vpop.f32.mrb[0].mxu0
        %v4931 = vadd.f32 %v4866, %v4930
        %v4932 = vpop.f32.mrb[0].mxu0
        %v4933 = vpop.f32.mrb[0].mxu0
        %v4934 = vadd.f32 %v4869, %v4933
        %v4935 = vpop.f32.mrb[0].mxu0
        %4936 = vmatprep.mubr.bf16.mxu0 %v3987
        %4937 = vmatmul.mubr.bf16.gmra.mrb[0].mxu0 %v3963
        %v4938 = vpop.f32.mrb[0].mxu0
        %v4939 = vadd.f32 %v4874, %v4938
        %v4940 = vpop.f32.mrb[0].mxu0
        %v4941 = vpop.f32.mrb[0].mxu0
        %v4942 = vadd.f32 %v4877, %v4941
        %v4943 = vpop.f32.mrb[0].mxu0
        %4944 = vmatprep.mubr.bf16.mxu0 %v3988
        %4945 = vmatmul.mubr.bf16.gmra.mrb[0].mxu0 %v3964
        %v4946 = vpop.f32.mrb[0].mxu0
        %v4947 = vadd.f32 %v4882, %v4946
        %v4948 = vpop.f32.mrb[0].mxu0
        %v4949 = vpop.f32.mrb[0].mxu0
        %v4950 = vadd.f32 %v4885, %v4949
        %v4951 = vpop.f32.mrb[0].mxu0
        %4952 = vmatprep.mubr.bf16.mxu0 %v3989
        %4953 = vmatmul.mubr.bf16.gmra.mrb[0].mxu0 %v3965
        %v4954 = vpop.f32.mrb[0].mxu0
        %v4955 = vadd.f32 %v4890, %v4954
        %v4956 = vpop.f32.mrb[0].mxu0
        %v4957 = vpop.f32.mrb[0].mxu0
        %v4958 = vadd.f32 %v4893, %v4957
        %v4959 = vpop.f32.mrb[0].mxu0
        %4960 = vdwg.mxu0
        %4961 = vmatprep.subr.bf16.mxu0 0
        %4962 = vmatpush1.bf16.msra.mxu0 %v391
        %4963 = vmatprep.subr.bf16.mxu0 0
        %4964 = vmatpush1.bf16.msra.mxu0 %v392
        %4965 = vmatprep.subr.bf16.mxu0 0
        %4966 = vmatpush1.bf16.msra.mxu0 %v393
        %4967 = vmatprep.subr.bf16.mxu0 0
        %4968 = vmatpush1.bf16.msra.mxu0 %v394
        %4969 = vmatprep.subr.bf16.mxu0 0
        %4970 = vmatpush1.bf16.msra.mxu0 %v395
        %4971 = vmatprep.subr.bf16.mxu0 0
        %4972 = vmatpush1.bf16.msra.mxu0 %v396
        %4973 = vmatprep.subr.bf16.mxu0 0
        %4974 = vmatpush1.bf16.msra.mxu0 %v397
        %4975 = vmatprep.subr.bf16.mxu0 0
        %4976 = vmatpush1.bf16.msra.mxu0 %v398
        %4977 = vmatprep.subr.bf16.mxu0 0
        %4978 = vmatpush1.bf16.msra.mxu0 %v399
        %4979 = vmatprep.subr.bf16.mxu0 0
        %4980 = vmatpush1.bf16.msra.mxu0 %v400
        %4981 = vmatprep.subr.bf16.mxu0 0
        %4982 = vmatpush1.bf16.msra.mxu0 %v401
        %4983 = vmatprep.subr.bf16.mxu0 0
        %4984 = vmatpush1.bf16.msra.mxu0 %v402
        %4985 = vmatprep.subr.bf16.mxu0 0
        %4986 = vmatpush1.bf16.msra.mxu0 %v403
        %4987 = vmatprep.subr.bf16.mxu0 0
        %4988 = vmatpush1.bf16.msra.mxu0 %v404
        %4989 = vmatprep.subr.bf16.mxu0 0
        %4990 = vmatpush1.bf16.msra.mxu0 %v405
        %4991 = vmatprep.subr.bf16.mxu0 0
        %4992 = vmatpush1.bf16.msra.mxu0 %v406
        %4993 = vmatprep.mubr.bf16.mxu0 %v4034
        %4994 = vmatmul.mubr.bf16.gmra.mrb[0].mxu0 %v4010
        %v4995 = vpop.f32.mrb[0].mxu0
        %v4996 = vadd.f32 %v4931, %v4995
        %v4997 = vpop.f32.mrb[0].mxu0
        %v4998 = vpop.f32.mrb[0].mxu0
        %v4999 = vadd.f32 %v4934, %v4998
        %v5000 = vpop.f32.mrb[0].mxu0
        %5001 = vmatprep.mubr.bf16.mxu0 %v4035
        %5002 = vmatmul.mubr.bf16.gmra.mrb[0].mxu0 %v4011
        %v5003 = vpop.f32.mrb[0].mxu0
        %v5004 = vadd.f32 %v4939, %v5003
        %v5005 = vpop.f32.mrb[0].mxu0
        %v5006 = vpop.f32.mrb[0].mxu0
        %v5007 = vadd.f32 %v4942, %v5006
        %v5008 = vpop.f32.mrb[0].mxu0
        %5009 = vmatprep.mubr.bf16.mxu0 %v4036
        %5010 = vmatmul.mubr.bf16.gmra.mrb[0].mxu0 %v4012
        %v5011 = vpop.f32.mrb[0].mxu0
        %v5012 = vadd.f32 %v4947, %v5011
        %v5013 = vpop.f32.mrb[0].mxu0
        %v5014 = vpop.f32.mrb[0].mxu0
        %v5015 = vadd.f32 %v4950, %v5014
        %v5016 = vpop.f32.mrb[0].mxu0
        %5017 = vmatprep.mubr.bf16.mxu0 %v4037
        %5018 = vmatmul.mubr.bf16.gmra.mrb[0].mxu0 %v4013
        %v5019 = vpop.f32.mrb[0].mxu0
        %v5020 = vadd.f32 %v4955, %v5019
        %v5021 = vpop.f32.mrb[0].mxu0
        %v5022 = vpop.f32.mrb[0].mxu0
        %v5023 = vadd.f32 %v4958, %v5022
        %v5024 = vpop.f32.mrb[0].mxu0
        %5025 = vdwg.mxu0
        %5026 = vmatprep.subr.bf16.mxu0 0
        %5027 = vmatpush1.bf16.msra.mxu0 %v407
        %5028 = vmatprep.subr.bf16.mxu0 0
        %5029 = vmatpush1.bf16.msra.mxu0 %v408
        %5030 = vmatprep.subr.bf16.mxu0 0
        %5031 = vmatpush1.bf16.msra.mxu0 %v409
        %5032 = vmatprep.subr.bf16.mxu0 0
        %5033 = vmatpush1.bf16.msra.mxu0 %v410
        %5034 = vmatprep.subr.bf16.mxu0 0
        %5035 = vmatpush1.bf16.msra.mxu0 %v411
        %5036 = vmatprep.subr.bf16.mxu0 0
        %5037 = vmatpush1.bf16.msra.mxu0 %v412
        %5038 = vmatprep.subr.bf16.mxu0 0
        %5039 = vmatpush1.bf16.msra.mxu0 %v413
        %5040 = vmatprep.subr.bf16.mxu0 0
        %5041 = vmatpush1.bf16.msra.mxu0 %v414
        %5042 = vmatprep.subr.bf16.mxu0 0
        %5043 = vmatpush1.bf16.msra.mxu0 %v415
        %5044 = vmatprep.subr.bf16.mxu0 0
        %5045 = vmatpush1.bf16.msra.mxu0 %v416
        %5046 = vmatprep.subr.bf16.mxu0 0
        %5047 = vmatpush1.bf16.msra.mxu0 %v417
        %5048 = vmatprep.subr.bf16.mxu0 0
        %5049 = vmatpush1.bf16.msra.mxu0 %v418
        %5050 = vmatprep.subr.bf16.mxu0 0
        %5051 = vmatpush1.bf16.msra.mxu0 %v419
        %5052 = vmatprep.subr.bf16.mxu0 0
        %5053 = vmatpush1.bf16.msra.mxu0 %v420
        %5054 = vmatprep.subr.bf16.mxu0 0
        %5055 = vmatpush1.bf16.msra.mxu0 %v421
        %5056 = vmatprep.subr.bf16.mxu0 0
        %5057 = vmatpush1.bf16.msra.mxu0 %v422
        %5058 = vmatprep.mubr.bf16.mxu0 %v4082
        %5059 = vmatmul.mubr.bf16.gmra.mrb[0].mxu0 %v4058
        %v5060 = vpop.f32.mrb[0].mxu0
        %v5061 = vadd.f32 %v4996, %v5060
        %v5062 = vpop.f32.mrb[0].mxu0
        %v5063 = vpop.f32.mrb[0].mxu0
        %v5064 = vadd.f32 %v4999, %v5063
        %v5065 = vpop.f32.mrb[0].mxu0
        %5066 = vmatprep.mubr.bf16.mxu0 %v4083
        %5067 = vmatmul.mubr.bf16.gmra.mrb[0].mxu0 %v4059
        %v5068 = vpop.f32.mrb[0].mxu0
        %v5069 = vadd.f32 %v5004, %v5068
        %v5070 = vpop.f32.mrb[0].mxu0
        %v5071 = vpop.f32.mrb[0].mxu0
        %v5072 = vadd.f32 %v5007, %v5071
        %v5073 = vpop.f32.mrb[0].mxu0
        %5074 = vmatprep.mubr.bf16.mxu0 %v4084
        %5075 = vmatmul.mubr.bf16.gmra.mrb[0].mxu0 %v4060
        %v5076 = vpop.f32.mrb[0].mxu0
        %v5077 = vadd.f32 %v5012, %v5076
        %v5078 = vpop.f32.mrb[0].mxu0
        %v5079 = vpop.f32.mrb[0].mxu0
        %v5080 = vadd.f32 %v5015, %v5079
        %v5081 = vpop.f32.mrb[0].mxu0
        %5082 = vmatprep.mubr.bf16.mxu0 %v4085
        %5083 = vmatmul.mubr.bf16.gmra.mrb[0].mxu0 %v4061
        %v5084 = vpop.f32.mrb[0].mxu0
        %v5085 = vadd.f32 %v5020, %v5084
        %v5086 = vpop.f32.mrb[0].mxu0
        %v5087 = vpop.f32.mrb[0].mxu0
        %v5088 = vadd.f32 %v5023, %v5087
        %v5089 = vpop.f32.mrb[0].mxu0
        %5090 = vdwg.mxu0
        %5091 = vmatprep.subr.bf16.mxu0 0
        %5092 = vmatpush1.bf16.msra.mxu0 %v423
        %5093 = vmatprep.subr.bf16.mxu0 0
        %5094 = vmatpush1.bf16.msra.mxu0 %v424
        %5095 = vmatprep.subr.bf16.mxu0 0
        %5096 = vmatpush1.bf16.msra.mxu0 %v425
        %5097 = vmatprep.subr.bf16.mxu0 0
        %5098 = vmatpush1.bf16.msra.mxu0 %v426
        %5099 = vmatprep.subr.bf16.mxu0 0
        %5100 = vmatpush1.bf16.msra.mxu0 %v427
        %5101 = vmatprep.subr.bf16.mxu0 0
        %5102 = vmatpush1.bf16.msra.mxu0 %v428
        %5103 = vmatprep.subr.bf16.mxu0 0
        %5104 = vmatpush1.bf16.msra.mxu0 %v429
        %5105 = vmatprep.subr.bf16.mxu0 0
        %5106 = vmatpush1.bf16.msra.mxu0 %v430
        %5107 = vmatprep.subr.bf16.mxu0 0
        %5108 = vmatpush1.bf16.msra.mxu0 %v431
        %5109 = vmatprep.subr.bf16.mxu0 0
        %5110 = vmatpush1.bf16.msra.mxu0 %v432
        %5111 = vmatprep.subr.bf16.mxu0 0
        %5112 = vmatpush1.bf16.msra.mxu0 %v433
        %5113 = vmatprep.subr.bf16.mxu0 0
        %5114 = vmatpush1.bf16.msra.mxu0 %v434
        %5115 = vmatprep.subr.bf16.mxu0 0
        %5116 = vmatpush1.bf16.msra.mxu0 %v435
        %5117 = vmatprep.subr.bf16.mxu0 0
        %5118 = vmatpush1.bf16.msra.mxu0 %v436
        %5119 = vmatprep.subr.bf16.mxu0 0
        %5120 = vmatpush1.bf16.msra.mxu0 %v437
        %5121 = vmatprep.subr.bf16.mxu0 0
        %5122 = vmatpush1.bf16.msra.mxu0 %v438
        %5123 = vmatprep.mubr.bf16.mxu0 %v4130
        %5124 = vmatmul.mubr.bf16.gmra.mrb[0].mxu0 %v4106
        %v5125 = vpop.f32.mrb[0].mxu0
        %v5126 = vadd.f32 %v5061, %v5125
        %v5127 = vpop.f32.mrb[0].mxu0
        %v5128 = vpop.f32.mrb[0].mxu0
        %v5129 = vadd.f32 %v5064, %v5128
        %v5130 = vpop.f32.mrb[0].mxu0
        %5131 = vmatprep.mubr.bf16.mxu0 %v4131
        %5132 = vmatmul.mubr.bf16.gmra.mrb[0].mxu0 %v4107
        %v5133 = vpop.f32.mrb[0].mxu0
        %v5134 = vadd.f32 %v5069, %v5133
        %v5135 = vpop.f32.mrb[0].mxu0
        %v5136 = vpop.f32.mrb[0].mxu0
        %v5137 = vadd.f32 %v5072, %v5136
        %v5138 = vpop.f32.mrb[0].mxu0
        %5139 = vmatprep.mubr.bf16.mxu0 %v4132
        %5140 = vmatmul.mubr.bf16.gmra.mrb[0].mxu0 %v4108
        %v5141 = vpop.f32.mrb[0].mxu0
        %v5142 = vadd.f32 %v5077, %v5141
        %v5143 = vpop.f32.mrb[0].mxu0
        %v5144 = vpop.f32.mrb[0].mxu0
        %v5145 = vadd.f32 %v5080, %v5144
        %v5146 = vpop.f32.mrb[0].mxu0
        %5147 = vmatprep.mubr.bf16.mxu0 %v4133
        %5148 = vmatmul.mubr.bf16.gmra.mrb[0].mxu0 %v4109
        %v5149 = vpop.f32.mrb[0].mxu0
        %v5150 = vadd.f32 %v5085, %v5149
        %v5151 = vpop.f32.mrb[0].mxu0
        %v5152 = vpop.f32.mrb[0].mxu0
        %v5153 = vadd.f32 %v5088, %v5152
        %v5154 = vpop.f32.mrb[0].mxu0
        %5155 = vdwg.mxu0
        %5156 = vmatprep.subr.bf16.mxu0 0
        %5157 = vmatpush1.bf16.msra.mxu0 %v439
        %5158 = vmatprep.subr.bf16.mxu0 0
        %5159 = vmatpush1.bf16.msra.mxu0 %v440
        %5160 = vmatprep.subr.bf16.mxu0 0
        %5161 = vmatpush1.bf16.msra.mxu0 %v441
        %5162 = vmatprep.subr.bf16.mxu0 0
        %5163 = vmatpush1.bf16.msra.mxu0 %v442
        %5164 = vmatprep.subr.bf16.mxu0 0
        %5165 = vmatpush1.bf16.msra.mxu0 %v443
        %5166 = vmatprep.subr.bf16.mxu0 0
        %5167 = vmatpush1.bf16.msra.mxu0 %v444
        %5168 = vmatprep.subr.bf16.mxu0 0
        %5169 = vmatpush1.bf16.msra.mxu0 %v445
        %5170 = vmatprep.subr.bf16.mxu0 0
        %5171 = vmatpush1.bf16.msra.mxu0 %v446
        %5172 = vmatprep.subr.bf16.mxu0 0
        %5173 = vmatpush1.bf16.msra.mxu0 %v447
        %5174 = vmatprep.subr.bf16.mxu0 0
        %5175 = vmatpush1.bf16.msra.mxu0 %v448
        %5176 = vmatprep.subr.bf16.mxu0 0
        %5177 = vmatpush1.bf16.msra.mxu0 %v449
        %5178 = vmatprep.subr.bf16.mxu0 0
        %5179 = vmatpush1.bf16.msra.mxu0 %v450
        %5180 = vmatprep.subr.bf16.mxu0 0
        %5181 = vmatpush1.bf16.msra.mxu0 %v451
        %5182 = vmatprep.subr.bf16.mxu0 0
        %5183 = vmatpush1.bf16.msra.mxu0 %v452
        %5184 = vmatprep.subr.bf16.mxu0 0
        %5185 = vmatpush1.bf16.msra.mxu0 %v453
        %5186 = vmatprep.subr.bf16.mxu0 0
        %5187 = vmatpush1.bf16.msra.mxu0 %v454
        %5188 = vmatprep.mubr.bf16.mxu0 %v4178
        %5189 = vmatmul.mubr.bf16.gmra.mrb[0].mxu0 %v4154
        %v5190 = vpop.f32.mrb[0].mxu0
        %v5191 = vadd.f32 %v5126, %v5190
        %v5192 = vpop.f32.mrb[0].mxu0
        %v5193 = vpop.f32.mrb[0].mxu0
        %v5194 = vadd.f32 %v5129, %v5193
        %v5195 = vpop.f32.mrb[0].mxu0
        %5196 = vmatprep.mubr.bf16.mxu0 %v4179
        %5197 = vmatmul.mubr.bf16.gmra.mrb[0].mxu0 %v4155
        %v5198 = vpop.f32.mrb[0].mxu0
        %v5199 = vadd.f32 %v5134, %v5198
        %v5200 = vpop.f32.mrb[0].mxu0
        %v5201 = vpop.f32.mrb[0].mxu0
        %v5202 = vadd.f32 %v5137, %v5201
        %v5203 = vpop.f32.mrb[0].mxu0
        %5204 = vmatprep.mubr.bf16.mxu0 %v4180
        %5205 = vmatmul.mubr.bf16.gmra.mrb[0].mxu0 %v4156
        %v5206 = vpop.f32.mrb[0].mxu0
        %v5207 = vadd.f32 %v5142, %v5206
        %v5208 = vpop.f32.mrb[0].mxu0
        %v5209 = vpop.f32.mrb[0].mxu0
        %v5210 = vadd.f32 %v5145, %v5209
        %v5211 = vpop.f32.mrb[0].mxu0
        %5212 = vmatprep.mubr.bf16.mxu0 %v4181
        %5213 = vmatmul.mubr.bf16.gmra.mrb[0].mxu0 %v4157
        %v5214 = vpop.f32.mrb[0].mxu0
        %v5215 = vadd.f32 %v5150, %v5214
        %v5216 = vpop.f32.mrb[0].mxu0
        %v5217 = vpop.f32.mrb[0].mxu0
        %v5218 = vadd.f32 %v5153, %v5217
        %v5219 = vpop.f32.mrb[0].mxu0
        %5220 = vdwg.mxu0
        %5221 = vmatprep.subr.bf16.mxu0 0
        %5222 = vmatpush1.bf16.msra.mxu0 %v455
        %5223 = vmatprep.subr.bf16.mxu0 0
        %5224 = vmatpush1.bf16.msra.mxu0 %v456
        %5225 = vmatprep.subr.bf16.mxu0 0
        %5226 = vmatpush1.bf16.msra.mxu0 %v457
        %5227 = vmatprep.subr.bf16.mxu0 0
        %5228 = vmatpush1.bf16.msra.mxu0 %v458
        %5229 = vmatprep.subr.bf16.mxu0 0
        %5230 = vmatpush1.bf16.msra.mxu0 %v459
        %5231 = vmatprep.subr.bf16.mxu0 0
        %5232 = vmatpush1.bf16.msra.mxu0 %v460
        %5233 = vmatprep.subr.bf16.mxu0 0
        %5234 = vmatpush1.bf16.msra.mxu0 %v461
        %5235 = vmatprep.subr.bf16.mxu0 0
        %5236 = vmatpush1.bf16.msra.mxu0 %v462
        %5237 = vmatprep.subr.bf16.mxu0 0
        %5238 = vmatpush1.bf16.msra.mxu0 %v463
        %5239 = vmatprep.subr.bf16.mxu0 0
        %5240 = vmatpush1.bf16.msra.mxu0 %v464
        %5241 = vmatprep.subr.bf16.mxu0 0
        %5242 = vmatpush1.bf16.msra.mxu0 %v465
        %5243 = vmatprep.subr.bf16.mxu0 0
        %5244 = vmatpush1.bf16.msra.mxu0 %v466
        %5245 = vmatprep.subr.bf16.mxu0 0
        %5246 = vmatpush1.bf16.msra.mxu0 %v467
        %5247 = vmatprep.subr.bf16.mxu0 0
        %5248 = vmatpush1.bf16.msra.mxu0 %v468
        %5249 = vmatprep.subr.bf16.mxu0 0
        %5250 = vmatpush1.bf16.msra.mxu0 %v469
        %5251 = vmatprep.subr.bf16.mxu0 0
        %5252 = vmatpush1.bf16.msra.mxu0 %v470
        %5253 = vmatprep.mubr.bf16.mxu0 %v4226
        %5254 = vmatmul.mubr.bf16.gmra.mrb[0].mxu0 %v4202
        %v5255 = vpop.f32.mrb[0].mxu0
        %v5256 = vadd.f32 %v5191, %v5255
        %v5257 = vpop.f32.mrb[0].mxu0
        %v5258 = vpop.f32.mrb[0].mxu0
        %v5259 = vadd.f32 %v5194, %v5258
        %v5260 = vpop.f32.mrb[0].mxu0
        %5261 = vmatprep.mubr.bf16.mxu0 %v4227
        %5262 = vmatmul.mubr.bf16.gmra.mrb[0].mxu0 %v4203
        %v5263 = vpop.f32.mrb[0].mxu0
        %v5264 = vadd.f32 %v5199, %v5263
        %v5265 = vpop.f32.mrb[0].mxu0
        %v5266 = vpop.f32.mrb[0].mxu0
        %v5267 = vadd.f32 %v5202, %v5266
        %v5268 = vpop.f32.mrb[0].mxu0
        %5269 = vmatprep.mubr.bf16.mxu0 %v4228
        %5270 = vmatmul.mubr.bf16.gmra.mrb[0].mxu0 %v4204
        %v5271 = vpop.f32.mrb[0].mxu0
        %v5272 = vadd.f32 %v5207, %v5271
        %v5273 = vpop.f32.mrb[0].mxu0
        %v5274 = vpop.f32.mrb[0].mxu0
        %v5275 = vadd.f32 %v5210, %v5274
        %v5276 = vpop.f32.mrb[0].mxu0
        %5277 = vmatprep.mubr.bf16.mxu0 %v4229
        %5278 = vmatmul.mubr.bf16.gmra.mrb[0].mxu0 %v4205
        %v5279 = vpop.f32.mrb[0].mxu0
        %v5280 = vadd.f32 %v5215, %v5279
        %v5281 = vpop.f32.mrb[0].mxu0
        %v5282 = vpop.f32.mrb[0].mxu0
        %v5283 = vadd.f32 %v5218, %v5282
        %v5284 = vpop.f32.mrb[0].mxu0
        %5285 = vdwg.mxu0
        %5286 = vmatprep.subr.bf16.mxu0 0
        %5287 = vmatpush1.bf16.msra.mxu0 %v471
        %5288 = vmatprep.subr.bf16.mxu0 0
        %5289 = vmatpush1.bf16.msra.mxu0 %v472
        %5290 = vmatprep.subr.bf16.mxu0 0
        %5291 = vmatpush1.bf16.msra.mxu0 %v473
        %5292 = vmatprep.subr.bf16.mxu0 0
        %5293 = vmatpush1.bf16.msra.mxu0 %v474
        %5294 = vmatprep.subr.bf16.mxu0 0
        %5295 = vmatpush1.bf16.msra.mxu0 %v475
        %5296 = vmatprep.subr.bf16.mxu0 0
        %5297 = vmatpush1.bf16.msra.mxu0 %v476
        %5298 = vmatprep.subr.bf16.mxu0 0
        %5299 = vmatpush1.bf16.msra.mxu0 %v477
        %5300 = vmatprep.subr.bf16.mxu0 0
        %5301 = vmatpush1.bf16.msra.mxu0 %v478
        %5302 = vmatprep.subr.bf16.mxu0 0
        %5303 = vmatpush1.bf16.msra.mxu0 %v479
        %5304 = vmatprep.subr.bf16.mxu0 0
        %5305 = vmatpush1.bf16.msra.mxu0 %v480
        %5306 = vmatprep.subr.bf16.mxu0 0
        %5307 = vmatpush1.bf16.msra.mxu0 %v481
        %5308 = vmatprep.subr.bf16.mxu0 0
        %5309 = vmatpush1.bf16.msra.mxu0 %v482
        %5310 = vmatprep.subr.bf16.mxu0 0
        %5311 = vmatpush1.bf16.msra.mxu0 %v483
        %5312 = vmatprep.subr.bf16.mxu0 0
        %5313 = vmatpush1.bf16.msra.mxu0 %v484
        %5314 = vmatprep.subr.bf16.mxu0 0
        %5315 = vmatpush1.bf16.msra.mxu0 %v485
        %5316 = vmatprep.subr.bf16.mxu0 0
        %5317 = vmatpush1.bf16.msra.mxu0 %v486
        %5318 = vmatprep.mubr.bf16.mxu0 %v4274
        %5319 = vmatmul.mubr.bf16.gmra.mrb[0].mxu0 %v4250
        %v5320 = vpop.f32.mrb[0].mxu0
        %v5321 = vadd.f32 %v5256, %v5320
        %v5322 = vpop.f32.mrb[0].mxu0
        %v5323 = vpop.f32.mrb[0].mxu0
        %v5324 = vadd.f32 %v5259, %v5323
        %v5325 = vpop.f32.mrb[0].mxu0
        %5326 = vmatprep.mubr.bf16.mxu0 %v4275
        %5327 = vmatmul.mubr.bf16.gmra.mrb[0].mxu0 %v4251
        %v5328 = vpop.f32.mrb[0].mxu0
        %v5329 = vadd.f32 %v5264, %v5328
        %v5330 = vpop.f32.mrb[0].mxu0
        %v5331 = vpop.f32.mrb[0].mxu0
        %v5332 = vadd.f32 %v5267, %v5331
        %v5333 = vpop.f32.mrb[0].mxu0
        %5334 = vmatprep.mubr.bf16.mxu0 %v4276
        %5335 = vmatmul.mubr.bf16.gmra.mrb[0].mxu0 %v4252
        %v5336 = vpop.f32.mrb[0].mxu0
        %v5337 = vadd.f32 %v5272, %v5336
        %v5338 = vpop.f32.mrb[0].mxu0
        %v5339 = vpop.f32.mrb[0].mxu0
        %v5340 = vadd.f32 %v5275, %v5339
        %v5341 = vpop.f32.mrb[0].mxu0
        %5342 = vmatprep.mubr.bf16.mxu0 %v4277
        %5343 = vmatmul.mubr.bf16.gmra.mrb[0].mxu0 %v4253
        %v5344 = vpop.f32.mrb[0].mxu0
        %v5345 = vadd.f32 %v5280, %v5344
        %v5346 = vpop.f32.mrb[0].mxu0
        %v5347 = vpop.f32.mrb[0].mxu0
        %v5348 = vadd.f32 %v5283, %v5347
        %v5349 = vpop.f32.mrb[0].mxu0
        %5350 = vdwg.mxu0
        %5351 = vmatprep.subr.bf16.mxu0 0
        %5352 = vmatpush1.bf16.msra.mxu0 %v487
        %5353 = vmatprep.subr.bf16.mxu0 0
        %5354 = vmatpush1.bf16.msra.mxu0 %v488
        %5355 = vmatprep.subr.bf16.mxu0 0
        %5356 = vmatpush1.bf16.msra.mxu0 %v489
        %5357 = vmatprep.subr.bf16.mxu0 0
        %5358 = vmatpush1.bf16.msra.mxu0 %v490
        %5359 = vmatprep.subr.bf16.mxu0 0
        %5360 = vmatpush1.bf16.msra.mxu0 %v491
        %5361 = vmatprep.subr.bf16.mxu0 0
        %5362 = vmatpush1.bf16.msra.mxu0 %v492
        %5363 = vmatprep.subr.bf16.mxu0 0
        %5364 = vmatpush1.bf16.msra.mxu0 %v493
        %5365 = vmatprep.subr.bf16.mxu0 0
        %5366 = vmatpush1.bf16.msra.mxu0 %v494
        %5367 = vmatprep.subr.bf16.mxu0 0
        %5368 = vmatpush1.bf16.msra.mxu0 %v495
        %5369 = vmatprep.subr.bf16.mxu0 0
        %5370 = vmatpush1.bf16.msra.mxu0 %v496
        %5371 = vmatprep.subr.bf16.mxu0 0
        %5372 = vmatpush1.bf16.msra.mxu0 %v497
        %5373 = vmatprep.subr.bf16.mxu0 0
        %5374 = vmatpush1.bf16.msra.mxu0 %v498
        %5375 = vmatprep.subr.bf16.mxu0 0
        %5376 = vmatpush1.bf16.msra.mxu0 %v499
        %5377 = vmatprep.subr.bf16.mxu0 0
        %5378 = vmatpush1.bf16.msra.mxu0 %v500
        %5379 = vmatprep.subr.bf16.mxu0 0
        %5380 = vmatpush1.bf16.msra.mxu0 %v501
        %5381 = vmatprep.subr.bf16.mxu0 0
        %5382 = vmatpush1.bf16.msra.mxu0 %v502
        %5383 = vmatprep.mubr.bf16.mxu0 %v4322
        %5384 = vmatmul.mubr.bf16.gmra.mrb[0].mxu0 %v4298
        %v5385 = vpop.f32.mrb[0].mxu0
        %v5386 = vadd.f32 %v5321, %v5385
        %v5387 = vpop.f32.mrb[0].mxu0
        %v5388 = vpop.f32.mrb[0].mxu0
        %v5389 = vadd.f32 %v5324, %v5388
        %v5390 = vpop.f32.mrb[0].mxu0
        %5391 = vmatprep.mubr.bf16.mxu0 %v4323
        %5392 = vmatmul.mubr.bf16.gmra.mrb[0].mxu0 %v4299
        %v5393 = vpop.f32.mrb[0].mxu0
        %v5394 = vadd.f32 %v5329, %v5393
        %v5395 = vpop.f32.mrb[0].mxu0
        %v5396 = vpop.f32.mrb[0].mxu0
        %v5397 = vadd.f32 %v5332, %v5396
        %v5398 = vpop.f32.mrb[0].mxu0
        %5399 = vmatprep.mubr.bf16.mxu0 %v4324
        %5400 = vmatmul.mubr.bf16.gmra.mrb[0].mxu0 %v4300
        %v5401 = vpop.f32.mrb[0].mxu0
        %v5402 = vadd.f32 %v5337, %v5401
        %v5403 = vpop.f32.mrb[0].mxu0
        %v5404 = vpop.f32.mrb[0].mxu0
        %v5405 = vadd.f32 %v5340, %v5404
        %v5406 = vpop.f32.mrb[0].mxu0
        %5407 = vmatprep.mubr.bf16.mxu0 %v4325
        %5408 = vmatmul.mubr.bf16.gmra.mrb[0].mxu0 %v4301
        %v5409 = vpop.f32.mrb[0].mxu0
        %v5410 = vadd.f32 %v5345, %v5409
        %v5411 = vpop.f32.mrb[0].mxu0
        %v5412 = vpop.f32.mrb[0].mxu0
        %v5413 = vadd.f32 %v5348, %v5412
        %v5414 = vpop.f32.mrb[0].mxu0
        %5415 = vdwg.mxu0
        %5416 = vmatprep.subr.bf16.mxu0 0
        %5417 = vmatpush1.bf16.msra.mxu0 %v503
        %5418 = vmatprep.subr.bf16.mxu0 0
        %5419 = vmatpush1.bf16.msra.mxu0 %v504
        %5420 = vmatprep.subr.bf16.mxu0 0
        %5421 = vmatpush1.bf16.msra.mxu0 %v505
        %5422 = vmatprep.subr.bf16.mxu0 0
        %5423 = vmatpush1.bf16.msra.mxu0 %v506
        %5424 = vmatprep.subr.bf16.mxu0 0
        %5425 = vmatpush1.bf16.msra.mxu0 %v507
        %5426 = vmatprep.subr.bf16.mxu0 0
        %5427 = vmatpush1.bf16.msra.mxu0 %v508
        %5428 = vmatprep.subr.bf16.mxu0 0
        %5429 = vmatpush1.bf16.msra.mxu0 %v509
        %5430 = vmatprep.subr.bf16.mxu0 0
        %5431 = vmatpush1.bf16.msra.mxu0 %v510
        %5432 = vmatprep.subr.bf16.mxu0 0
        %5433 = vmatpush1.bf16.msra.mxu0 %v511
        %5434 = vmatprep.subr.bf16.mxu0 0
        %5435 = vmatpush1.bf16.msra.mxu0 %v512
        %5436 = vmatprep.subr.bf16.mxu0 0
        %5437 = vmatpush1.bf16.msra.mxu0 %v513
        %5438 = vmatprep.subr.bf16.mxu0 0
        %5439 = vmatpush1.bf16.msra.mxu0 %v514
        %5440 = vmatprep.subr.bf16.mxu0 0
        %5441 = vmatpush1.bf16.msra.mxu0 %v515
        %5442 = vmatprep.subr.bf16.mxu0 0
        %5443 = vmatpush1.bf16.msra.mxu0 %v516
        %5444 = vmatprep.subr.bf16.mxu0 0
        %5445 = vmatpush1.bf16.msra.mxu0 %v517
        %5446 = vmatprep.subr.bf16.mxu0 0
        %5447 = vmatpush1.bf16.msra.mxu0 %v518
        %5448 = vmatprep.mubr.bf16.mxu0 %v4370
        %5449 = vmatmul.mubr.bf16.gmra.mrb[0].mxu0 %v4346
        %v5450 = vpop.f32.mrb[0].mxu0
        %v5451 = vadd.f32 %v5386, %v5450
        %v5452 = vpop.f32.mrb[0].mxu0
        %v5453 = vpop.f32.mrb[0].mxu0
        %v5454 = vadd.f32 %v5389, %v5453
        %v5455 = vpop.f32.mrb[0].mxu0
        %5456 = vmatprep.mubr.bf16.mxu0 %v4371
        %5457 = vmatmul.mubr.bf16.gmra.mrb[0].mxu0 %v4347
        %v5458 = vpop.f32.mrb[0].mxu0
        %v5459 = vadd.f32 %v5394, %v5458
        %v5460 = vpop.f32.mrb[0].mxu0
        %v5461 = vpop.f32.mrb[0].mxu0
        %v5462 = vadd.f32 %v5397, %v5461
        %v5463 = vpop.f32.mrb[0].mxu0
        %5464 = vmatprep.mubr.bf16.mxu0 %v4372
        %5465 = vmatmul.mubr.bf16.gmra.mrb[0].mxu0 %v4348
        %v5466 = vpop.f32.mrb[0].mxu0
        %v5467 = vadd.f32 %v5402, %v5466
        %v5468 = vpop.f32.mrb[0].mxu0
        %v5469 = vpop.f32.mrb[0].mxu0
        %v5470 = vadd.f32 %v5405, %v5469
        %v5471 = vpop.f32.mrb[0].mxu0
        %5472 = vmatprep.mubr.bf16.mxu0 %v4373
        %5473 = vmatmul.mubr.bf16.gmra.mrb[0].mxu0 %v4349
        %v5474 = vpop.f32.mrb[0].mxu0
        %v5475 = vadd.f32 %v5410, %v5474
        %v5476 = vpop.f32.mrb[0].mxu0
        %v5477 = vpop.f32.mrb[0].mxu0
        %v5478 = vadd.f32 %v5413, %v5477
        %v5479 = vpop.f32.mrb[0].mxu0
        %5480 = vdwg.mxu0
        %5481 = vmatprep.subr.bf16.mxu0 0
        %5482 = vmatpush1.bf16.msra.mxu0 %v519
        %5483 = vmatprep.subr.bf16.mxu0 0
        %5484 = vmatpush1.bf16.msra.mxu0 %v520
        %5485 = vmatprep.subr.bf16.mxu0 0
        %5486 = vmatpush1.bf16.msra.mxu0 %v521
        %5487 = vmatprep.subr.bf16.mxu0 0
        %5488 = vmatpush1.bf16.msra.mxu0 %v522
        %5489 = vmatprep.subr.bf16.mxu0 0
        %5490 = vmatpush1.bf16.msra.mxu0 %v523
        %5491 = vmatprep.subr.bf16.mxu0 0
        %5492 = vmatpush1.bf16.msra.mxu0 %v524
        %5493 = vmatprep.subr.bf16.mxu0 0
        %5494 = vmatpush1.bf16.msra.mxu0 %v525
        %5495 = vmatprep.subr.bf16.mxu0 0
        %5496 = vmatpush1.bf16.msra.mxu0 %v526
        %5497 = vmatprep.subr.bf16.mxu0 0
        %5498 = vmatpush1.bf16.msra.mxu0 %v527
        %5499 = vmatprep.subr.bf16.mxu0 0
        %5500 = vmatpush1.bf16.msra.mxu0 %v528
        %5501 = vmatprep.subr.bf16.mxu0 0
        %5502 = vmatpush1.bf16.msra.mxu0 0
        %5503 = vmatprep.subr.bf16.mxu0 0
        %5504 = vmatpush1.bf16.msra.mxu0 0
        %5505 = vmatprep.subr.bf16.mxu0 0
        %5506 = vmatpush1.bf16.msra.mxu0 0
        %5507 = vmatprep.subr.bf16.mxu0 0
        %5508 = vmatpush1.bf16.msra.mxu0 0
        %5509 = vmatprep.subr.bf16.mxu0 0
        %5510 = vmatpush1.bf16.msra.mxu0 0
        %5511 = vmatprep.subr.bf16.mxu0 0
        %5512 = vmatpush1.bf16.msra.mxu0 0
        %5513 = vmatprep.mubr.bf16.mxu0 %v4430
        %5514 = vmatmul.mubr.bf16.gmra.mrb[0].mxu0 %v4394
        %v5515 = vpop.f32.mrb[0].mxu0
        %v5516 = vadd.f32 %v5451, %v5515
        %v5517 = vpop.f32.mrb[0].mxu0
        %v5518 = vpop.f32.mrb[0].mxu0
        %v5519 = vadd.f32 %v5454, %v5518
        %v5520 = vpop.f32.mrb[0].mxu0
        %5521 = vmatprep.mubr.bf16.mxu0 %v4433
        %5522 = vmatmul.mubr.bf16.gmra.mrb[0].mxu0 %v4395
        %v5523 = vpop.f32.mrb[0].mxu0
        %v5524 = vadd.f32 %v5459, %v5523
        %v5525 = vpop.f32.mrb[0].mxu0
        %v5526 = vpop.f32.mrb[0].mxu0
        %v5527 = vadd.f32 %v5462, %v5526
        %v5528 = vpop.f32.mrb[0].mxu0
        %5529 = vmatprep.mubr.bf16.mxu0 %v4436
        %5530 = vmatmul.mubr.bf16.gmra.mrb[0].mxu0 %v4396
        %v5531 = vpop.f32.mrb[0].mxu0
        %v5532 = vadd.f32 %v5467, %v5531
        %v5533 = vpop.f32.mrb[0].mxu0
        %v5534 = vpop.f32.mrb[0].mxu0
        %v5535 = vadd.f32 %v5470, %v5534
        %v5536 = vpop.f32.mrb[0].mxu0
        %5537 = vmatprep.mubr.bf16.mxu0 %v4439
        %5538 = vmatmul.mubr.bf16.gmra.mrb[0].mxu0 %v4397
        %v5539 = vpop.f32.mrb[0].mxu0
        %v5540 = vadd.f32 %v5475, %v5539
        %v5541 = vpop.f32.mrb[0].mxu0
        %v5542 = vpop.f32.mrb[0].mxu0
        %v5543 = vadd.f32 %v5478, %v5542
        %v5544 = vpop.f32.mrb[0].mxu0
        %5545 = vdwg.mxu0
        %5546 = vst [vmem:[%s218] sm:$0xff] %v5516
        %5547 = vst [vmem:[%s218 + $0x8] sm:$0xff] %v5519
        %5548 = vst [vmem:[%s218 + $0x10] sm:$0xff] %v5524
        %5549 = vst [vmem:[%s218 + $0x18] sm:$0xff] %v5527
        %5550 = vst [vmem:[%s218 + $0x20] sm:$0xff] %v5532
        %5551 = vst [vmem:[%s218 + $0x28] sm:$0xff] %v5535
        %5552 = vst [vmem:[%s218 + $0x30] sm:$0xff] %v5540
        %5553 = vst [vmem:[%s218 + $0x38] sm:$0xff] %v5543
        %s5554 = sand.u32 %s103, 1
        %s5555 = scalar_lea.sflag [#allocation6], %s5554
        %s5556 = sand.u32 %s103, 1
        %s5557 = smul.addr %s5556, 64
        %s5558 = scalar_lea.vmem [#allocation9], %s5557
        // Predicated region
        $region49: #{tpu_custom_call.1} parent=31 // pred_check
          %p5559 = pneg %p113
        $region50: #{tpu_custom_call.1} parent=31 // pred_check_branch
          %5561 = sbr.rel (%p5559) target = $region52
        $region51: #{tpu_custom_call.1} parent=31 // pred_region
          %s5562 = smul.u32 8, %s22
          %s5564 = ssub.s32 1024, 1024
          %5565 = vsyncadd %s5555, %s5564
          %s5566 = smul.addr %s5562, 128
          %s5567 = scalar_lea.hbm %s4, %s5566
          %s5568 = sshll.u32 %s5558, 4
          %s5569 = int_to_ptr.vmem [resolvable:$true] %s5568
          %5574 = dma.vmem_to_hbm [thread:$0]  %s5569, 1024, %s5567, %s5555, 128, 128, 8
        $region52: #{tpu_custom_call.1} parent=31 // pred_fallthru
          _
      $region32: #{tpu_custom_call.1} parent=5 // pred_fallthru
        _
      %p5575 = scmp.le.s32.totalorder 2, %s17
      // Predicated region
      $region53: #{tpu_custom_call.1} parent=5 // pred_check
        %p5576 = pneg %p5575
      $region54: #{tpu_custom_call.1} parent=5 // pred_check_branch
        %5578 = sbr.rel (%p5576) target = $region56
      $region55: #{tpu_custom_call.1} parent=5 // pred_region
        %s5579 = ssub.s32 %s17, 2
        // Predicated region
        $region57: #{tpu_custom_call.1} parent=55 // pred_check
          %p5580 = pneg %p119
        $region58: #{tpu_custom_call.1} parent=55 // pred_check_branch
          %5582 = sbr.rel (%p5580) target = $region60
        $region59: #{tpu_custom_call.1} parent=55 // pred_region
          %s5583 = sand.u32 %s104, 1
          %s5584 = scalar_lea.sflag [#allocation6], %s5583
          %s5585 = sand.u32 %s104, 1
          %s5586 = smul.addr %s5585, 64
          %s5587 = scalar_lea.vmem [#allocation9], %s5586
          %5588 = dma.done %s5584, 1024
        $region60: #{tpu_custom_call.1} parent=55 // pred_fallthru
          _
      $region56: #{tpu_custom_call.1} parent=5 // pred_fallthru
        _
    $region6: #{tpu_custom_call.1} parent=1 // loop_footer
      %s21 = sadd.s32 1, %s17
    $region7: #{tpu_custom_call.1} parent=1 // loop_footer_branch
      %16 = sbr.rel target = $region3
    $region8: #{tpu_custom_call.1} parent=1 // loop_exit
      _
    %5589 = vsyncpa [#allocation5], 1
    %s5590 = scalar_lea.sflag [#allocation5], 1
    %5591 = vsyncpa %s5590, 1
    %5592 = vsyncpa [#allocation8], 1
    %5593 = vsyncpa [#allocation6], 1
    %s5594 = scalar_lea.sflag [#allocation6], 1
    %5595 = vsyncpa %s5594, 1
  %5596 = vsyncmov [#allocation3]
  %s5597 = vpop.sfrf %5596
  %p5598 = scmp.eq.s32.totalorder %s5597, 0
  %p5599 = pneg %p5598
  %5601 = shalt.err (%p5599)

</llo_original>
